<compile_context>
chip_gen: v5e
topology: v5e:2x2
jax: 0.10.0
libtpu: 0.0.40
codegen_flags: <defaults>
</compile_context>

<pallas_src>
import functools

import jax
import jax.numpy as jnp
import numpy as np
from jax import lax
from jax.experimental import pallas as pl
from jax.experimental.pallas import tpu as pltpu


def _round_up(n, m):
    return ((n + m - 1) // m) * m


def _pad_gates_axis0(w, H, H_pad):
    """Pad each of the 4 stacked (i,f,g,o) gate blocks (size H along axis 0) to H_pad."""
    if H_pad == H:
        return w
    parts = []
    for g in range(4):
        blk = w[g * H:(g + 1) * H]
        pad = [(0, H_pad - H)] + [(0, 0)] * (w.ndim - 1)
        parts.append(jnp.pad(blk, pad))
    return jnp.concatenate(parts, axis=0)


# ----------------------------------------------------------------------------
# Pallas kernel: one grid step = one (batch tile, time block) of ONE layer.
# ----------------------------------------------------------------------------
def _make_lstm_layer_kernel(H, in_l, TB, B_TILE, apply_relu_mask):
    def kernel(lens_ref, x_ref, wih_ref, whh_ref, b_ref, out_ref,
               h_scr, c_scr, xp_scr):
        tb = pl.program_id(1)  # time-block index (sequential axis)

        @pl.when(tb == 0)
        def _():
            h_scr[...] = jnp.zeros_like(h_scr)
            c_scr[...] = jnp.zeros_like(c_scr)

        # ---- fused input projection for the whole time block -------------------
        # (TB*B_TILE, in_l) bf16 @ (in_l, 4H) bf16 -> f32 VMEM scratch (+ fused bias).
        xb = x_ref[...].reshape(TB * B_TILE, in_l)
        xp_scr[...] = jnp.dot(
            xb, wih_ref[...], preferred_element_type=jnp.float32) + b_ref[...]

        whhT = whh_ref[...]  # (H, 4H) bf16, VMEM resident

        # ---- recurrence ---------------------------------------------------------
        def step(i, carry):
            h, c = carry
            off = pl.multiple_of(i * B_TILE, B_TILE)
            gates = xp_scr[pl.ds(off, B_TILE), :] + jnp.dot(
                h.astype(whhT.dtype), whhT, preferred_element_type=jnp.float32)
            i_g = jax.nn.sigmoid(gates[:, 0 * H:1 * H])
            f_g = jax.nn.sigmoid(gates[:, 1 * H:2 * H])
            g_g = jnp.tanh(gates[:, 2 * H:3 * H])
            o_g = jax.nn.sigmoid(gates[:, 3 * H:4 * H])
            c = f_g * c + i_g * g_g
            h = o_g * jnp.tanh(c)
            out_ref[i] = h.astype(out_ref.dtype)
            return h, c

        h, c = lax.fori_loop(0, TB, step, (h_scr[...], c_scr[...]),
                             unroll=min(TB, 8))
        h_scr[...] = h
        c_scr[...] = c

        if apply_relu_mask:
            # pad_packed -> ReLU -> pack_padded: one hoisted block-level mask op.
            t_idx = tb * TB + lax.broadcasted_iota(jnp.int32, (TB, B_TILE, 1), 0)
            valid = (t_idx < lens_ref[...][None, :, :]).astype(out_ref.dtype)
            out_ref[...] = jnp.maximum(out_ref[...], 0.0) * valid

    return kernel


# ----------------------------------------------------------------------------
# Wrapper: batch-first in/out (like nn.LSTM(batch_first=True)).
# ----------------------------------------------------------------------------
def encoder_rnn_forward(x_bti, lens, kparams, *, hidden_size, num_layers,
                        max_time_block=32, max_batch_tile=64):
    """x_bti: (B, T, input_size) float32; lens: (B,) int32.

    Returns (ReLU(LSTM(x)) padded output, masked past lens, and the lengths) —
    i.e. the contents of the PackedSequence the PyTorch module would return.
    """
    B, T, I = x_bti.shape
    H = hidden_size
    H_pad = _round_up(H, 128)

    # Tiling: time block (sequential axis) and batch tile (parallel axis, v7x megacore).
    TB = min(max_time_block, T)
    T_pad = _round_up(T, TB)
    B_pad8 = _round_up(B, 8)
    B_TILE = B_pad8 if B_pad8 <= max_batch_tile else max_batch_tile
    B_pad = _round_up(B_pad8, B_TILE)

    # Time-major, padded, bf16 layer input.
    x_tbi = jnp.transpose(x_bti, (1, 0, 2))
    x_tbi = jnp.pad(x_tbi, ((0, T_pad - T), (0, B_pad - B), (0, 0)))
    x_tbi = x_tbi.astype(jnp.bfloat16)
    lens_i32 = lens.astype(jnp.int32)
    lens_v = jnp.pad(lens_i32, (0, B_pad - B)).reshape(B_pad, 1)

    cur = x_tbi  # (T_pad, B_pad, in_l) bf16
    for layer in range(num_layers):
        wihT, whhT, bias = kparams[layer]  # (in_l,4H_pad) bf16, (H_pad,4H_pad) bf16, (1,4H_pad) f32
        in_l = cur.shape[-1]
        is_last = layer == num_layers - 1
        # bf16 intermediate outputs halve the inter-layer HBM traffic.
        out_dtype = jnp.float32 if is_last else jnp.bfloat16
        kernel = _make_lstm_layer_kernel(H_pad, in_l, TB, B_TILE, is_last)

        cur = pl.pallas_call(
            kernel,
            out_shape=jax.ShapeDtypeStruct((T_pad, B_pad, H_pad), out_dtype),
            grid_spec=pltpu.PrefetchScalarGridSpec(
                num_scalar_prefetch=0,
                grid=(B_pad // B_TILE, T_pad // TB),
                in_specs=[
                    pl.BlockSpec((B_TILE, 1), lambda b, tb: (b, 0)),              # lens
                    pl.BlockSpec((TB, B_TILE, in_l), lambda b, tb: (tb, b, 0)),   # layer input
                    pl.BlockSpec((in_l, 4 * H_pad), lambda b, tb: (0, 0)),        # w_ih^T
                    pl.BlockSpec((H_pad, 4 * H_pad), lambda b, tb: (0, 0)),       # w_hh^T
                    pl.BlockSpec((1, 4 * H_pad), lambda b, tb: (0, 0)),           # fused bias
                ],
                out_specs=pl.BlockSpec((TB, B_TILE, H_pad), lambda b, tb: (tb, b, 0)),
                scratch_shapes=[
                    pltpu.VMEM((B_TILE, H_pad), jnp.float32),              # h state
                    pltpu.VMEM((B_TILE, H_pad), jnp.float32),              # c state
                    pltpu.VMEM((TB * B_TILE, 4 * H_pad), jnp.float32),     # fused xproj
                ],
            ),
            compiler_params=pltpu.CompilerParams(
                # Batch tiles are independent ("parallel" -> v7x megacore sharding);
                # the time-block axis carries the h/c recurrence ("arbitrary").
                dimension_semantics=("parallel", "arbitrary"),
                # 48 MiB fits all generations (v7x physical VMEM is 64 MiB); raise
                # toward ~96 MiB on v5e/v6e for larger TB / hidden sizes.
                vmem_limit_bytes=48 * 1024 * 1024,
            ),
        )(lens_v, cur, wihT, whhT, bias)

    # Drop padding (batch, time and hidden); one transpose back to batch-first.
    out_bth = jnp.transpose(cur[:T, :B, :H], (1, 0, 2))
    return out_bth, lens_i32


# ----------------------------------------------------------------------------
# Parameter init (mirrors nn.LSTM defaults + the module's xavier init on layer 0).
# ----------------------------------------------------------------------------
def init_raw_params(key, input_size, hidden_size, num_layers):
    H = hidden_size
    params = []
    for layer in range(num_layers):
        in_l = input_size if layer == 0 else H
        key, k1, k2, k3, k4 = jax.random.split(key, 5)
        if layer == 0:
            gain = np.sqrt(2.0)
            bound_ih = gain * np.sqrt(6.0 / (in_l + 4 * H))
            bound_hh = gain * np.sqrt(6.0 / (H + 4 * H))
        else:
            bound_ih = bound_hh = 1.0 / np.sqrt(H)
        w_ih = jax.random.uniform(k1, (4 * H, in_l), jnp.float32, -bound_ih, bound_ih)
        w_hh = jax.random.uniform(k2, (4 * H, H), jnp.float32, -bound_hh, bound_hh)
        bb = 1.0 / np.sqrt(H)
        b_ih = jax.random.uniform(k3, (4 * H,), jnp.float32, -bb, bb)
        b_hh = jax.random.uniform(k4, (4 * H,), jnp.float32, -bb, bb)
        params.append((w_ih, w_hh, b_ih, b_hh))
    return params


def prepare_kernel_params(raw_params, hidden_size):
    """Kernel layout: transposed weights, gate-padded to H_pad=multiple of 128,
    fused bias, bf16 weights / f32 bias."""
    H = hidden_size
    H_pad = _round_up(H, 128)
    kparams = []
    for layer, (w_ih, w_hh, b_ih, b_hh) in enumerate(raw_params):
        in_l = w_ih.shape[1]
        in_pad = in_l if layer == 0 else H_pad
        w_ih_p = _pad_gates_axis0(w_ih, H, H_pad)                   # (4H_pad, in_l)
        w_ih_p = jnp.pad(w_ih_p, ((0, 0), (0, in_pad - in_l)))       # (4H_pad, in_pad)
        w_hh_p = _pad_gates_axis0(w_hh, H, H_pad)                   # (4H_pad, H)
        w_hh_p = jnp.pad(w_hh_p, ((0, 0), (0, H_pad - H)))           # (4H_pad, H_pad)
        bias_p = _pad_gates_axis0((b_ih + b_hh).reshape(4 * H, 1), H, H_pad)
        kparams.append((
            jnp.transpose(w_ih_p).astype(jnp.bfloat16),              # (in_pad, 4H_pad)
            jnp.transpose(w_hh_p).astype(jnp.bfloat16),              # (H_pad, 4H_pad)
            bias_p.reshape(1, 4 * H_pad).astype(jnp.float32),
        ))
    return kparams


# ----------------------------------------------------------------------------
# Pure-JAX f32 reference (same effective bf16-rounded weight values).
# ----------------------------------------------------------------------------
def reference_forward(x_bti, lens, raw_params, *, hidden_size, num_layers):
    B, T, _ = x_bti.shape
    H = hidden_size
    h = [jnp.zeros((B, H), jnp.float32) for _ in range(num_layers)]
    c = [jnp.zeros((B, H), jnp.float32) for _ in range(num_layers)]
    outs = []
    for t in range(T):
        inp = x_bti[:, t, :]
        for l in range(num_layers):
            w_ih, w_hh, b_ih, b_hh = raw_params[l]
            w_ih = w_ih.astype(jnp.bfloat16).astype(jnp.float32)
            w_hh = w_hh.astype(jnp.bfloat16).astype(jnp.float32)
            gates = inp @ w_ih.T + h[l] @ w_hh.T + (b_ih + b_hh)
            i_g = jax.nn.sigmoid(gates[:, 0 * H:1 * H])
            f_g = jax.nn.sigmoid(gates[:, 1 * H:2 * H])
            g_g = jnp.tanh(gates[:, 2 * H:3 * H])
            o_g = jax.nn.sigmoid(gates[:, 3 * H:4 * H])
            c[l] = f_g * c[l] + i_g * g_g
            h[l] = o_g * jnp.tanh(c[l])
            inp = h[l]
        outs.append(jnp.maximum(inp, 0.0))
    out = jnp.stack(outs, axis=1)
    mask = (jnp.arange(T)[None, :, None] < lens[:, None, None]).astype(out.dtype)
    return out * mask


if __name__ == "__main__":
    batch = 2
    seq_len = 8
    input_size = 16
    hidden_size = 32
    num_layers = 2

    key = jax.random.PRNGKey(0)
    key, kx = jax.random.split(key)
    x = jax.random.normal(kx, (batch, seq_len, input_size), jnp.float32)
    lens = jnp.array([seq_len, seq_len - 3], dtype=jnp.int32)  # descending, like packing

    raw_params = init_raw_params(key, input_size, hidden_size, num_layers)
    kparams = prepare_kernel_params(raw_params, hidden_size)

    fwd = jax.jit(functools.partial(
        encoder_rnn_forward, hidden_size=hidden_size, num_layers=num_layers))
    out, out_lens = fwd(x, lens, kparams)
    out = jax.block_until_ready(out)

    ref = reference_forward(
        x, lens, raw_params, hidden_size=hidden_size, num_layers=num_layers)
    max_err = float(jnp.max(jnp.abs(out - ref)))
    assert out.shape == (batch, seq_len, hidden_size)
    assert max_err < 5e-2, f"mismatch vs reference: {max_err}"
    print("KERNEL_OK")
</pallas_src>

<mosaic_0001>
module attributes {stable_mosaic.version = 11 : i64} {
  func.func @kernel(%arg0: i32, %arg1: i32, %arg2: memref<8x1xi32, #tpu.memory_space<vmem>>, %arg3: memref<8x8x128xbf16, #tpu.memory_space<vmem>>, %arg4: memref<128x512xbf16, #tpu.memory_space<vmem>>, %arg5: memref<128x512xbf16, #tpu.memory_space<vmem>>, %arg6: memref<1x512xf32, #tpu.memory_space<vmem>>, %arg7: memref<8x8x128xf32, #tpu.memory_space<vmem>>, %arg8: memref<8x128xf32, #tpu.memory_space<vmem>>, %arg9: memref<8x128xf32, #tpu.memory_space<vmem>>, %arg10: memref<64x512xf32, #tpu.memory_space<vmem>>) attributes {dimension_semantics = [#tpu.dimension_semantics<parallel>, #tpu.dimension_semantics<arbitrary>], iteration_bounds = array<i64: 1, 1>, scalar_prefetch = 0 : i64, scratch_operands = 3 : i64, tpu.core_type = #tpu.core_type<tc>, window_params = [{transform_indices = @transform_0, window_bounds = array<i64: 8, 1>}, {transform_indices = @transform_1, window_bounds = array<i64: 8, 8, 128>}, {pipeline_mode = #tpu.pipeline_mode<synchronous>, transform_indices = @transform_2, window_bounds = array<i64: 128, 512>}, {pipeline_mode = #tpu.pipeline_mode<synchronous>, transform_indices = @transform_3, window_bounds = array<i64: 128, 512>}, {pipeline_mode = #tpu.pipeline_mode<synchronous>, transform_indices = @transform_4, window_bounds = array<i64: 1, 512>}, {transform_indices = @transform_5, window_bounds = array<i64: 8, 8, 128>}]} {
    %c0_i32 = arith.constant 0 : i32
    %0 = arith.cmpi eq, %arg1, %c0_i32 : i32
    %1 = arith.extui %0 : i1 to i32
    %c0_i32_0 = arith.constant 0 : i32
    %2 = arith.cmpi ne, %1, %c0_i32_0 : i32
    scf.if %2 {
      %cst_94 = arith.constant 0.000000e+00 : f32
      %320 = vector.broadcast %cst_94 : f32 to vector<8x128xf32>
      %c0_95 = arith.constant 0 : index
      %c0_96 = arith.constant 0 : index
      %321 = vector.load %arg8[%c0_95, %c0_96] : memref<8x128xf32, #tpu.memory_space<vmem>>, vector<8x128xf32>
      tpu.vector_store %arg8[%c0_95, %c0_96], %320 {strides = array<i32>} : memref<8x128xf32, #tpu.memory_space<vmem>>, vector<8x128xf32>,
      %cst_97 = arith.constant 0.000000e+00 : f32
      %322 = vector.broadcast %cst_97 : f32 to vector<8x128xf32>
      %c0_98 = arith.constant 0 : index
      %c0_99 = arith.constant 0 : index
      %323 = vector.load %arg9[%c0_98, %c0_99] : memref<8x128xf32, #tpu.memory_space<vmem>>, vector<8x128xf32>
      tpu.vector_store %arg9[%c0_98, %c0_99], %322 {strides = array<i32>} : memref<8x128xf32, #tpu.memory_space<vmem>>, vector<8x128xf32>,
    } else {
    }
    %c0 = arith.constant 0 : index
    %c0_1 = arith.constant 0 : index
    %c0_2 = arith.constant 0 : index
    %3 = vector.load %arg3[%c0, %c0_1, %c0_2] : memref<8x8x128xbf16, #tpu.memory_space<vmem>>, vector<8x8x128xbf16>
    %4 = vector.shape_cast %3 : vector<8x8x128xbf16> to vector<64x128xbf16>
    %c0_3 = arith.constant 0 : index
    %c0_4 = arith.constant 0 : index
    %5 = vector.load %arg4[%c0_3, %c0_4] : memref<128x512xbf16, #tpu.memory_space<vmem>>, vector<128x512xbf16>
    %cst = arith.constant dense<0.000000e+00> : vector<64x512xf32>
    %6 = tpu.matmul %4, %5, %cst {dimension_numbers = #tpu.dot_dimension_numbers<[1], [0], [0], [1], [0, 0, 1, 1], [], []>} : vector<64x128xbf16>, vector<128x512xbf16>, vector<64x512xf32> -> vector<64x512xf32>
    %c0_5 = arith.constant 0 : index
    %c0_6 = arith.constant 0 : index
    %7 = vector.load %arg6[%c0_5, %c0_6] : memref<1x512xf32, #tpu.memory_space<vmem>>, vector<1x512xf32>
    %8 = vector.broadcast %7 : vector<1x512xf32> to vector<64x512xf32>
    %9 = arith.addf %6, %8 : vector<64x512xf32>
    %c0_7 = arith.constant 0 : index
    %c0_8 = arith.constant 0 : index
    %10 = vector.load %arg10[%c0_7, %c0_8] : memref<64x512xf32, #tpu.memory_space<vmem>>, vector<64x512xf32>
    tpu.vector_store %arg10[%c0_7, %c0_8], %9 {strides = array<i32>} : memref<64x512xf32, #tpu.memory_space<vmem>>, vector<64x512xf32>,
    %c0_9 = arith.constant 0 : index
    %c0_10 = arith.constant 0 : index
    %11 = vector.load %arg5[%c0_9, %c0_10] : memref<128x512xbf16, #tpu.memory_space<vmem>>, vector<128x512xbf16>
    %c0_11 = arith.constant 0 : index
    %c0_12 = arith.constant 0 : index
    %12 = vector.load %arg8[%c0_11, %c0_12] : memref<8x128xf32, #tpu.memory_space<vmem>>, vector<8x128xf32>
    %c0_13 = arith.constant 0 : index
    %c0_14 = arith.constant 0 : index
    %13 = vector.load %arg9[%c0_13, %c0_14] : memref<8x128xf32, #tpu.memory_space<vmem>>, vector<8x128xf32>
    %c0_i32_15 = arith.constant 0 : i32
    %c8_i32 = arith.constant 8 : i32
    %14 = arith.muli %c0_i32_15, %c8_i32 : i32
    %15 = tpu.assume_multiple %14, 8 : i32
    %16 = arith.index_cast %15 : i32 to index
    %c0_16 = arith.constant 0 : index
    %17 = vector.load %arg10[%16, %c0_16] : memref<64x512xf32, #tpu.memory_space<vmem>>, vector<8x512xf32>
    %18 = arith.truncf %12 : vector<8x128xf32> to vector<8x128xbf16>
    %cst_17 = arith.constant dense<0.000000e+00> : vector<8x512xf32>
    %19 = tpu.matmul %18, %11, %cst_17 {dimension_numbers = #tpu.dot_dimension_numbers<[1], [0], [0], [1], [0, 0, 1, 1], [], []>} : vector<8x128xbf16>, vector<128x512xbf16>, vector<8x512xf32> -> vector<8x512xf32>
    %20 = arith.addf %17, %19 : vector<8x512xf32>
    %21 = vector.extract_strided_slice %20 {offsets = [0, 0], sizes = [8, 128], strides = [1, 1]} : vector<8x512xf32> to vector<8x128xf32>
    %22 = arith.negf %21 : vector<8x128xf32>
    %23 = math.exp %22 : vector<8x128xf32>
    %cst_18 = arith.constant 1.000000e+00 : f32
    %24 = vector.broadcast %cst_18 : f32 to vector<8x128xf32>
    %25 = arith.addf %24, %23 : vector<8x128xf32>
    %26 = arith.divf %24, %25 : vector<8x128xf32>
    %27 = vector.extract_strided_slice %20 {offsets = [0, 128], sizes = [8, 128], strides = [1, 1]} : vector<8x512xf32> to vector<8x128xf32>
    %28 = arith.negf %27 : vector<8x128xf32>
    %29 = math.exp %28 : vector<8x128xf32>
    %cst_19 = arith.constant 1.000000e+00 : f32
    %30 = vector.broadcast %cst_19 : f32 to vector<8x128xf32>
    %31 = arith.addf %30, %29 : vector<8x128xf32>
    %32 = arith.divf %30, %31 : vector<8x128xf32>
    %33 = vector.extract_strided_slice %20 {offsets = [0, 256], sizes = [8, 128], strides = [1, 1]} : vector<8x512xf32> to vector<8x128xf32>
    %34 = math.tanh %33 : vector<8x128xf32>
    %35 = vector.extract_strided_slice %20 {offsets = [0, 384], sizes = [8, 128], strides = [1, 1]} : vector<8x512xf32> to vector<8x128xf32>
    %36 = arith.negf %35 : vector<8x128xf32>
    %37 = math.exp %36 : vector<8x128xf32>
    %cst_20 = arith.constant 1.000000e+00 : f32
    %38 = vector.broadcast %cst_20 : f32 to vector<8x128xf32>
    %39 = arith.addf %38, %37 : vector<8x128xf32>
    %40 = arith.divf %38, %39 : vector<8x128xf32>
    %41 = arith.mulf %32, %13 : vector<8x128xf32>
    %42 = arith.mulf %26, %34 : vector<8x128xf32>
    %43 = arith.addf %41, %42 : vector<8x128xf32>
    %44 = math.tanh %43 : vector<8x128xf32>
    %45 = arith.mulf %40, %44 : vector<8x128xf32>
    %46 = arith.index_cast %c0_i32_15 : i32 to index
    %c0_21 = arith.constant 0 : index
    %c0_22 = arith.constant 0 : index
    %47 = vector.load %arg7[%46, %c0_21, %c0_22] : memref<8x8x128xf32, #tpu.memory_space<vmem>>, vector<1x8x128xf32>
    %48 = vector.shape_cast %47 : vector<1x8x128xf32> to vector<8x128xf32>
    %49 = vector.shape_cast %45 : vector<8x128xf32> to vector<1x8x128xf32>
    tpu.vector_store %arg7[%46, %c0_21, %c0_22], %49 {strides = array<i32>} : memref<8x8x128xf32, #tpu.memory_space<vmem>>, vector<1x8x128xf32>,
    %c1_i32 = arith.constant 1 : i32
    %c8_i32_23 = arith.constant 8 : i32
    %50 = arith.muli %c1_i32, %c8_i32_23 : i32
    %51 = tpu.assume_multiple %50, 8 : i32
    %52 = arith.index_cast %51 : i32 to index
    %c0_24 = arith.constant 0 : index
    %53 = vector.load %arg10[%52, %c0_24] : memref<64x512xf32, #tpu.memory_space<vmem>>, vector<8x512xf32>
    %54 = arith.truncf %45 : vector<8x128xf32> to vector<8x128xbf16>
    %cst_25 = arith.constant dense<0.000000e+00> : vector<8x512xf32>
    %55 = tpu.matmul %54, %11, %cst_25 {dimension_numbers = #tpu.dot_dimension_numbers<[1], [0], [0], [1], [0, 0, 1, 1], [], []>} : vector<8x128xbf16>, vector<128x512xbf16>, vector<8x512xf32> -> vector<8x512xf32>
    %56 = arith.addf %53, %55 : vector<8x512xf32>
    %57 = vector.extract_strided_slice %56 {offsets = [0, 0], sizes = [8, 128], strides = [1, 1]} : vector<8x512xf32> to vector<8x128xf32>
    %58 = arith.negf %57 : vector<8x128xf32>
    %59 = math.exp %58 : vector<8x128xf32>
    %cst_26 = arith.constant 1.000000e+00 : f32
    %60 = vector.broadcast %cst_26 : f32 to vector<8x128xf32>
    %61 = arith.addf %60, %59 : vector<8x128xf32>
    %62 = arith.divf %60, %61 : vector<8x128xf32>
    %63 = vector.extract_strided_slice %56 {offsets = [0, 128], sizes = [8, 128], strides = [1, 1]} : vector<8x512xf32> to vector<8x128xf32>
    %64 = arith.negf %63 : vector<8x128xf32>
    %65 = math.exp %64 : vector<8x128xf32>
    %cst_27 = arith.constant 1.000000e+00 : f32
    %66 = vector.broadcast %cst_27 : f32 to vector<8x128xf32>
    %67 = arith.addf %66, %65 : vector<8x128xf32>
    %68 = arith.divf %66, %67 : vector<8x128xf32>
    %69 = vector.extract_strided_slice %56 {offsets = [0, 256], sizes = [8, 128], strides = [1, 1]} : vector<8x512xf32> to vector<8x128xf32>
    %70 = math.tanh %69 : vector<8x128xf32>
    %71 = vector.extract_strided_slice %56 {offsets = [0, 384], sizes = [8, 128], strides = [1, 1]} : vector<8x512xf32> to vector<8x128xf32>
    %72 = arith.negf %71 : vector<8x128xf32>
    %73 = math.exp %72 : vector<8x128xf32>
    %cst_28 = arith.constant 1.000000e+00 : f32
    %74 = vector.broadcast %cst_28 : f32 to vector<8x128xf32>
    %75 = arith.addf %74, %73 : vector<8x128xf32>
    %76 = arith.divf %74, %75 : vector<8x128xf32>
    %77 = arith.mulf %68, %43 : vector<8x128xf32>
    %78 = arith.mulf %62, %70 : vector<8x128xf32>
    %79 = arith.addf %77, %78 : vector<8x128xf32>
    %80 = math.tanh %79 : vector<8x128xf32>
    %81 = arith.mulf %76, %80 : vector<8x128xf32>
    %82 = arith.index_cast %c1_i32 : i32 to index
    %c0_29 = arith.constant 0 : index
    %c0_30 = arith.constant 0 : index
    %83 = vector.load %arg7[%82, %c0_29, %c0_30] : memref<8x8x128xf32, #tpu.memory_space<vmem>>, vector<1x8x128xf32>
    %84 = vector.shape_cast %83 : vector<1x8x128xf32> to vector<8x128xf32>
    %85 = vector.shape_cast %81 : vector<8x128xf32> to vector<1x8x128xf32>
    tpu.vector_store %arg7[%82, %c0_29, %c0_30], %85 {strides = array<i32>} : memref<8x8x128xf32, #tpu.memory_space<vmem>>, vector<1x8x128xf32>,
    %c2_i32 = arith.constant 2 : i32
    %c8_i32_31 = arith.constant 8 : i32
    %86 = arith.muli %c2_i32, %c8_i32_31 : i32
    %87 = tpu.assume_multiple %86, 8 : i32
    %88 = arith.index_cast %87 : i32 to index
    %c0_32 = arith.constant 0 : index
    %89 = vector.load %arg10[%88, %c0_32] : memref<64x512xf32, #tpu.memory_space<vmem>>, vector<8x512xf32>
    %90 = arith.truncf %81 : vector<8x128xf32> to vector<8x128xbf16>
    %cst_33 = arith.constant dense<0.000000e+00> : vector<8x512xf32>
    %91 = tpu.matmul %90, %11, %cst_33 {dimension_numbers = #tpu.dot_dimension_numbers<[1], [0], [0], [1], [0, 0, 1, 1], [], []>} : vector<8x128xbf16>, vector<128x512xbf16>, vector<8x512xf32> -> vector<8x512xf32>
    %92 = arith.addf %89, %91 : vector<8x512xf32>
    %93 = vector.extract_strided_slice %92 {offsets = [0, 0], sizes = [8, 128], strides = [1, 1]} : vector<8x512xf32> to vector<8x128xf32>
    %94 = arith.negf %93 : vector<8x128xf32>
    %95 = math.exp %94 : vector<8x128xf32>
    %cst_34 = arith.constant 1.000000e+00 : f32
    %96 = vector.broadcast %cst_34 : f32 to vector<8x128xf32>
    %97 = arith.addf %96, %95 : vector<8x128xf32>
    %98 = arith.divf %96, %97 : vector<8x128xf32>
    %99 = vector.extract_strided_slice %92 {offsets = [0, 128], sizes = [8, 128], strides = [1, 1]} : vector<8x512xf32> to vector<8x128xf32>
    %100 = arith.negf %99 : vector<8x128xf32>
    %101 = math.exp %100 : vector<8x128xf32>
    %cst_35 = arith.constant 1.000000e+00 : f32
    %102 = vector.broadcast %cst_35 : f32 to vector<8x128xf32>
    %103 = arith.addf %102, %101 : vector<8x128xf32>
    %104 = arith.divf %102, %103 : vector<8x128xf32>
    %105 = vector.extract_strided_slice %92 {offsets = [0, 256], sizes = [8, 128], strides = [1, 1]} : vector<8x512xf32> to vector<8x128xf32>
    %106 = math.tanh %105 : vector<8x128xf32>
    %107 = vector.extract_strided_slice %92 {offsets = [0, 384], sizes = [8, 128], strides = [1, 1]} : vector<8x512xf32> to vector<8x128xf32>
    %108 = arith.negf %107 : vector<8x128xf32>
    %109 = math.exp %108 : vector<8x128xf32>
    %cst_36 = arith.constant 1.000000e+00 : f32
    %110 = vector.broadcast %cst_36 : f32 to vector<8x128xf32>
    %111 = arith.addf %110, %109 : vector<8x128xf32>
    %112 = arith.divf %110, %111 : vector<8x128xf32>
    %113 = arith.mulf %104, %79 : vector<8x128xf32>
    %114 = arith.mulf %98, %106 : vector<8x128xf32>
    %115 = arith.addf %113, %114 : vector<8x128xf32>
    %116 = math.tanh %115 : vector<8x128xf32>
    %117 = arith.mulf %112, %116 : vector<8x128xf32>
    %118 = arith.index_cast %c2_i32 : i32 to index
    %c0_37 = arith.constant 0 : index
    %c0_38 = arith.constant 0 : index
    %119 = vector.load %arg7[%118, %c0_37, %c0_38] : memref<8x8x128xf32, #tpu.memory_space<vmem>>, vector<1x8x128xf32>
    %120 = vector.shape_cast %119 : vector<1x8x128xf32> to vector<8x128xf32>
    %121 = vector.shape_cast %117 : vector<8x128xf32> to vector<1x8x128xf32>
    tpu.vector_store %arg7[%118, %c0_37, %c0_38], %121 {strides = array<i32>} : memref<8x8x128xf32, #tpu.memory_space<vmem>>, vector<1x8x128xf32>,
    %c3_i32 = arith.constant 3 : i32
    %c8_i32_39 = arith.constant 8 : i32
    %122 = arith.muli %c3_i32, %c8_i32_39 : i32
    %123 = tpu.assume_multiple %122, 8 : i32
    %124 = arith.index_cast %123 : i32 to index
    %c0_40 = arith.constant 0 : index
    %125 = vector.load %arg10[%124, %c0_40] : memref<64x512xf32, #tpu.memory_space<vmem>>, vector<8x512xf32>
    %126 = arith.truncf %117 : vector<8x128xf32> to vector<8x128xbf16>
    %cst_41 = arith.constant dense<0.000000e+00> : vector<8x512xf32>
    %127 = tpu.matmul %126, %11, %cst_41 {dimension_numbers = #tpu.dot_dimension_numbers<[1], [0], [0], [1], [0, 0, 1, 1], [], []>} : vector<8x128xbf16>, vector<128x512xbf16>, vector<8x512xf32> -> vector<8x512xf32>
    %128 = arith.addf %125, %127 : vector<8x512xf32>
    %129 = vector.extract_strided_slice %128 {offsets = [0, 0], sizes = [8, 128], strides = [1, 1]} : vector<8x512xf32> to vector<8x128xf32>
    %130 = arith.negf %129 : vector<8x128xf32>
    %131 = math.exp %130 : vector<8x128xf32>
    %cst_42 = arith.constant 1.000000e+00 : f32
    %132 = vector.broadcast %cst_42 : f32 to vector<8x128xf32>
    %133 = arith.addf %132, %131 : vector<8x128xf32>
    %134 = arith.divf %132, %133 : vector<8x128xf32>
    %135 = vector.extract_strided_slice %128 {offsets = [0, 128], sizes = [8, 128], strides = [1, 1]} : vector<8x512xf32> to vector<8x128xf32>
    %136 = arith.negf %135 : vector<8x128xf32>
    %137 = math.exp %136 : vector<8x128xf32>
    %cst_43 = arith.constant 1.000000e+00 : f32
    %138 = vector.broadcast %cst_43 : f32 to vector<8x128xf32>
    %139 = arith.addf %138, %137 : vector<8x128xf32>
    %140 = arith.divf %138, %139 : vector<8x128xf32>
    %141 = vector.extract_strided_slice %128 {offsets = [0, 256], sizes = [8, 128], strides = [1, 1]} : vector<8x512xf32> to vector<8x128xf32>
    %142 = math.tanh %141 : vector<8x128xf32>
    %143 = vector.extract_strided_slice %128 {offsets = [0, 384], sizes = [8, 128], strides = [1, 1]} : vector<8x512xf32> to vector<8x128xf32>
    %144 = arith.negf %143 : vector<8x128xf32>
    %145 = math.exp %144 : vector<8x128xf32>
    %cst_44 = arith.constant 1.000000e+00 : f32
    %146 = vector.broadcast %cst_44 : f32 to vector<8x128xf32>
    %147 = arith.addf %146, %145 : vector<8x128xf32>
    %148 = arith.divf %146, %147 : vector<8x128xf32>
    %149 = arith.mulf %140, %115 : vector<8x128xf32>
    %150 = arith.mulf %134, %142 : vector<8x128xf32>
    %151 = arith.addf %149, %150 : vector<8x128xf32>
    %152 = math.tanh %151 : vector<8x128xf32>
    %153 = arith.mulf %148, %152 : vector<8x128xf32>
    %154 = arith.index_cast %c3_i32 : i32 to index
    %c0_45 = arith.constant 0 : index
    %c0_46 = arith.constant 0 : index
    %155 = vector.load %arg7[%154, %c0_45, %c0_46] : memref<8x8x128xf32, #tpu.memory_space<vmem>>, vector<1x8x128xf32>
    %156 = vector.shape_cast %155 : vector<1x8x128xf32> to vector<8x128xf32>
    %157 = vector.shape_cast %153 : vector<8x128xf32> to vector<1x8x128xf32>
    tpu.vector_store %arg7[%154, %c0_45, %c0_46], %157 {strides = array<i32>} : memref<8x8x128xf32, #tpu.memory_space<vmem>>, vector<1x8x128xf32>,
    %c4_i32 = arith.constant 4 : i32
    %c8_i32_47 = arith.constant 8 : i32
    %158 = arith.muli %c4_i32, %c8_i32_47 : i32
    %159 = tpu.assume_multiple %158, 8 : i32
    %160 = arith.index_cast %159 : i32 to index
    %c0_48 = arith.constant 0 : index
    %161 = vector.load %arg10[%160, %c0_48] : memref<64x512xf32, #tpu.memory_space<vmem>>, vector<8x512xf32>
    %162 = arith.truncf %153 : vector<8x128xf32> to vector<8x128xbf16>
    %cst_49 = arith.constant dense<0.000000e+00> : vector<8x512xf32>
    %163 = tpu.matmul %162, %11, %cst_49 {dimension_numbers = #tpu.dot_dimension_numbers<[1], [0], [0], [1], [0, 0, 1, 1], [], []>} : vector<8x128xbf16>, vector<128x512xbf16>, vector<8x512xf32> -> vector<8x512xf32>
    %164 = arith.addf %161, %163 : vector<8x512xf32>
    %165 = vector.extract_strided_slice %164 {offsets = [0, 0], sizes = [8, 128], strides = [1, 1]} : vector<8x512xf32> to vector<8x128xf32>
    %166 = arith.negf %165 : vector<8x128xf32>
    %167 = math.exp %166 : vector<8x128xf32>
    %cst_50 = arith.constant 1.000000e+00 : f32
    %168 = vector.broadcast %cst_50 : f32 to vector<8x128xf32>
    %169 = arith.addf %168, %167 : vector<8x128xf32>
    %170 = arith.divf %168, %169 : vector<8x128xf32>
    %171 = vector.extract_strided_slice %164 {offsets = [0, 128], sizes = [8, 128], strides = [1, 1]} : vector<8x512xf32> to vector<8x128xf32>
    %172 = arith.negf %171 : vector<8x128xf32>
    %173 = math.exp %172 : vector<8x128xf32>
    %cst_51 = arith.constant 1.000000e+00 : f32
    %174 = vector.broadcast %cst_51 : f32 to vector<8x128xf32>
    %175 = arith.addf %174, %173 : vector<8x128xf32>
    %176 = arith.divf %174, %175 : vector<8x128xf32>
    %177 = vector.extract_strided_slice %164 {offsets = [0, 256], sizes = [8, 128], strides = [1, 1]} : vector<8x512xf32> to vector<8x128xf32>
    %178 = math.tanh %177 : vector<8x128xf32>
    %179 = vector.extract_strided_slice %164 {offsets = [0, 384], sizes = [8, 128], strides = [1, 1]} : vector<8x512xf32> to vector<8x128xf32>
    %180 = arith.negf %179 : vector<8x128xf32>
    %181 = math.exp %180 : vector<8x128xf32>
    %cst_52 = arith.constant 1.000000e+00 : f32
    %182 = vector.broadcast %cst_52 : f32 to vector<8x128xf32>
    %183 = arith.addf %182, %181 : vector<8x128xf32>
    %184 = arith.divf %182, %183 : vector<8x128xf32>
    %185 = arith.mulf %176, %151 : vector<8x128xf32>
    %186 = arith.mulf %170, %178 : vector<8x128xf32>
    %187 = arith.addf %185, %186 : vector<8x128xf32>
    %188 = math.tanh %187 : vector<8x128xf32>
    %189 = arith.mulf %184, %188 : vector<8x128xf32>
    %190 = arith.index_cast %c4_i32 : i32 to index
    %c0_53 = arith.constant 0 : index
    %c0_54 = arith.constant 0 : index
    %191 = vector.load %arg7[%190, %c0_53, %c0_54] : memref<8x8x128xf32, #tpu.memory_space<vmem>>, vector<1x8x128xf32>
    %192 = vector.shape_cast %191 : vector<1x8x128xf32> to vector<8x128xf32>
    %193 = vector.shape_cast %189 : vector<8x128xf32> to vector<1x8x128xf32>
    tpu.vector_store %arg7[%190, %c0_53, %c0_54], %193 {strides = array<i32>} : memref<8x8x128xf32, #tpu.memory_space<vmem>>, vector<1x8x128xf32>,
    %c5_i32 = arith.constant 5 : i32
    %c8_i32_55 = arith.constant 8 : i32
    %194 = arith.muli %c5_i32, %c8_i32_55 : i32
    %195 = tpu.assume_multiple %194, 8 : i32
    %196 = arith.index_cast %195 : i32 to index
    %c0_56 = arith.constant 0 : index
    %197 = vector.load %arg10[%196, %c0_56] : memref<64x512xf32, #tpu.memory_space<vmem>>, vector<8x512xf32>
    %198 = arith.truncf %189 : vector<8x128xf32> to vector<8x128xbf16>
    %cst_57 = arith.constant dense<0.000000e+00> : vector<8x512xf32>
    %199 = tpu.matmul %198, %11, %cst_57 {dimension_numbers = #tpu.dot_dimension_numbers<[1], [0], [0], [1], [0, 0, 1, 1], [], []>} : vector<8x128xbf16>, vector<128x512xbf16>, vector<8x512xf32> -> vector<8x512xf32>
    %200 = arith.addf %197, %199 : vector<8x512xf32>
    %201 = vector.extract_strided_slice %200 {offsets = [0, 0], sizes = [8, 128], strides = [1, 1]} : vector<8x512xf32> to vector<8x128xf32>
    %202 = arith.negf %201 : vector<8x128xf32>
    %203 = math.exp %202 : vector<8x128xf32>
    %cst_58 = arith.constant 1.000000e+00 : f32
    %204 = vector.broadcast %cst_58 : f32 to vector<8x128xf32>
    %205 = arith.addf %204, %203 : vector<8x128xf32>
    %206 = arith.divf %204, %205 : vector<8x128xf32>
    %207 = vector.extract_strided_slice %200 {offsets = [0, 128], sizes = [8, 128], strides = [1, 1]} : vector<8x512xf32> to vector<8x128xf32>
    %208 = arith.negf %207 : vector<8x128xf32>
    %209 = math.exp %208 : vector<8x128xf32>
    %cst_59 = arith.constant 1.000000e+00 : f32
    %210 = vector.broadcast %cst_59 : f32 to vector<8x128xf32>
    %211 = arith.addf %210, %209 : vector<8x128xf32>
    %212 = arith.divf %210, %211 : vector<8x128xf32>
    %213 = vector.extract_strided_slice %200 {offsets = [0, 256], sizes = [8, 128], strides = [1, 1]} : vector<8x512xf32> to vector<8x128xf32>
    %214 = math.tanh %213 : vector<8x128xf32>
    %215 = vector.extract_strided_slice %200 {offsets = [0, 384], sizes = [8, 128], strides = [1, 1]} : vector<8x512xf32> to vector<8x128xf32>
    %216 = arith.negf %215 : vector<8x128xf32>
    %217 = math.exp %216 : vector<8x128xf32>
    %cst_60 = arith.constant 1.000000e+00 : f32
    %218 = vector.broadcast %cst_60 : f32 to vector<8x128xf32>
    %219 = arith.addf %218, %217 : vector<8x128xf32>
    %220 = arith.divf %218, %219 : vector<8x128xf32>
    %221 = arith.mulf %212, %187 : vector<8x128xf32>
    %222 = arith.mulf %206, %214 : vector<8x128xf32>
    %223 = arith.addf %221, %222 : vector<8x128xf32>
    %224 = math.tanh %223 : vector<8x128xf32>
    %225 = arith.mulf %220, %224 : vector<8x128xf32>
    %226 = arith.index_cast %c5_i32 : i32 to index
    %c0_61 = arith.constant 0 : index
    %c0_62 = arith.constant 0 : index
    %227 = vector.load %arg7[%226, %c0_61, %c0_62] : memref<8x8x128xf32, #tpu.memory_space<vmem>>, vector<1x8x128xf32>
    %228 = vector.shape_cast %227 : vector<1x8x128xf32> to vector<8x128xf32>
    %229 = vector.shape_cast %225 : vector<8x128xf32> to vector<1x8x128xf32>
    tpu.vector_store %arg7[%226, %c0_61, %c0_62], %229 {strides = array<i32>} : memref<8x8x128xf32, #tpu.memory_space<vmem>>, vector<1x8x128xf32>,
    %c6_i32 = arith.constant 6 : i32
    %c8_i32_63 = arith.constant 8 : i32
    %230 = arith.muli %c6_i32, %c8_i32_63 : i32
    %231 = tpu.assume_multiple %230, 8 : i32
    %232 = arith.index_cast %231 : i32 to index
    %c0_64 = arith.constant 0 : index
    %233 = vector.load %arg10[%232, %c0_64] : memref<64x512xf32, #tpu.memory_space<vmem>>, vector<8x512xf32>
    %234 = arith.truncf %225 : vector<8x128xf32> to vector<8x128xbf16>
    %cst_65 = arith.constant dense<0.000000e+00> : vector<8x512xf32>
    %235 = tpu.matmul %234, %11, %cst_65 {dimension_numbers = #tpu.dot_dimension_numbers<[1], [0], [0], [1], [0, 0, 1, 1], [], []>} : vector<8x128xbf16>, vector<128x512xbf16>, vector<8x512xf32> -> vector<8x512xf32>
    %236 = arith.addf %233, %235 : vector<8x512xf32>
    %237 = vector.extract_strided_slice %236 {offsets = [0, 0], sizes = [8, 128], strides = [1, 1]} : vector<8x512xf32> to vector<8x128xf32>
    %238 = arith.negf %237 : vector<8x128xf32>
    %239 = math.exp %238 : vector<8x128xf32>
    %cst_66 = arith.constant 1.000000e+00 : f32
    %240 = vector.broadcast %cst_66 : f32 to vector<8x128xf32>
    %241 = arith.addf %240, %239 : vector<8x128xf32>
    %242 = arith.divf %240, %241 : vector<8x128xf32>
    %243 = vector.extract_strided_slice %236 {offsets = [0, 128], sizes = [8, 128], strides = [1, 1]} : vector<8x512xf32> to vector<8x128xf32>
    %244 = arith.negf %243 : vector<8x128xf32>
    %245 = math.exp %244 : vector<8x128xf32>
    %cst_67 = arith.constant 1.000000e+00 : f32
    %246 = vector.broadcast %cst_67 : f32 to vector<8x128xf32>
    %247 = arith.addf %246, %245 : vector<8x128xf32>
    %248 = arith.divf %246, %247 : vector<8x128xf32>
    %249 = vector.extract_strided_slice %236 {offsets = [0, 256], sizes = [8, 128], strides = [1, 1]} : vector<8x512xf32> to vector<8x128xf32>
    %250 = math.tanh %249 : vector<8x128xf32>
    %251 = vector.extract_strided_slice %236 {offsets = [0, 384], sizes = [8, 128], strides = [1, 1]} : vector<8x512xf32> to vector<8x128xf32>
    %252 = arith.negf %251 : vector<8x128xf32>
    %253 = math.exp %252 : vector<8x128xf32>
    %cst_68 = arith.constant 1.000000e+00 : f32
    %254 = vector.broadcast %cst_68 : f32 to vector<8x128xf32>
    %255 = arith.addf %254, %253 : vector<8x128xf32>
    %256 = arith.divf %254, %255 : vector<8x128xf32>
    %257 = arith.mulf %248, %223 : vector<8x128xf32>
    %258 = arith.mulf %242, %250 : vector<8x128xf32>
    %259 = arith.addf %257, %258 : vector<8x128xf32>
    %260 = math.tanh %259 : vector<8x128xf32>
    %261 = arith.mulf %256, %260 : vector<8x128xf32>
    %262 = arith.index_cast %c6_i32 : i32 to index
    %c0_69 = arith.constant 0 : index
    %c0_70 = arith.constant 0 : index
    %263 = vector.load %arg7[%262, %c0_69, %c0_70] : memref<8x8x128xf32, #tpu.memory_space<vmem>>, vector<1x8x128xf32>
    %264 = vector.shape_cast %263 : vector<1x8x128xf32> to vector<8x128xf32>
    %265 = vector.shape_cast %261 : vector<8x128xf32> to vector<1x8x128xf32>
    tpu.vector_store %arg7[%262, %c0_69, %c0_70], %265 {strides = array<i32>} : memref<8x8x128xf32, #tpu.memory_space<vmem>>, vector<1x8x128xf32>,
    %c7_i32 = arith.constant 7 : i32
    %c8_i32_71 = arith.constant 8 : i32
    %266 = arith.muli %c7_i32, %c8_i32_71 : i32
    %267 = tpu.assume_multiple %266, 8 : i32
    %268 = arith.index_cast %267 : i32 to index
    %c0_72 = arith.constant 0 : index
    %269 = vector.load %arg10[%268, %c0_72] : memref<64x512xf32, #tpu.memory_space<vmem>>, vector<8x512xf32>
    %270 = arith.truncf %261 : vector<8x128xf32> to vector<8x128xbf16>
    %cst_73 = arith.constant dense<0.000000e+00> : vector<8x512xf32>
    %271 = tpu.matmul %270, %11, %cst_73 {dimension_numbers = #tpu.dot_dimension_numbers<[1], [0], [0], [1], [0, 0, 1, 1], [], []>} : vector<8x128xbf16>, vector<128x512xbf16>, vector<8x512xf32> -> vector<8x512xf32>
    %272 = arith.addf %269, %271 : vector<8x512xf32>
    %273 = vector.extract_strided_slice %272 {offsets = [0, 0], sizes = [8, 128], strides = [1, 1]} : vector<8x512xf32> to vector<8x128xf32>
    %274 = arith.negf %273 : vector<8x128xf32>
    %275 = math.exp %274 : vector<8x128xf32>
    %cst_74 = arith.constant 1.000000e+00 : f32
    %276 = vector.broadcast %cst_74 : f32 to vector<8x128xf32>
    %277 = arith.addf %276, %275 : vector<8x128xf32>
    %278 = arith.divf %276, %277 : vector<8x128xf32>
    %279 = vector.extract_strided_slice %272 {offsets = [0, 128], sizes = [8, 128], strides = [1, 1]} : vector<8x512xf32> to vector<8x128xf32>
    %280 = arith.negf %279 : vector<8x128xf32>
    %281 = math.exp %280 : vector<8x128xf32>
    %cst_75 = arith.constant 1.000000e+00 : f32
    %282 = vector.broadcast %cst_75 : f32 to vector<8x128xf32>
    %283 = arith.addf %282, %281 : vector<8x128xf32>
    %284 = arith.divf %282, %283 : vector<8x128xf32>
    %285 = vector.extract_strided_slice %272 {offsets = [0, 256], sizes = [8, 128], strides = [1, 1]} : vector<8x512xf32> to vector<8x128xf32>
    %286 = math.tanh %285 : vector<8x128xf32>
    %287 = vector.extract_strided_slice %272 {offsets = [0, 384], sizes = [8, 128], strides = [1, 1]} : vector<8x512xf32> to vector<8x128xf32>
    %288 = arith.negf %287 : vector<8x128xf32>
    %289 = math.exp %288 : vector<8x128xf32>
    %cst_76 = arith.constant 1.000000e+00 : f32
    %290 = vector.broadcast %cst_76 : f32 to vector<8x128xf32>
    %291 = arith.addf %290, %289 : vector<8x128xf32>
    %292 = arith.divf %290, %291 : vector<8x128xf32>
    %293 = arith.mulf %284, %259 : vector<8x128xf32>
    %294 = arith.mulf %278, %286 : vector<8x128xf32>
    %295 = arith.addf %293, %294 : vector<8x128xf32>
    %296 = math.tanh %295 : vector<8x128xf32>
    %297 = arith.mulf %292, %296 : vector<8x128xf32>
    %298 = arith.index_cast %c7_i32 : i32 to index
    %c0_77 = arith.constant 0 : index
    %c0_78 = arith.constant 0 : index
    %299 = vector.load %arg7[%298, %c0_77, %c0_78] : memref<8x8x128xf32, #tpu.memory_space<vmem>>, vector<1x8x128xf32>
    %300 = vector.shape_cast %299 : vector<1x8x128xf32> to vector<8x128xf32>
    %301 = vector.shape_cast %297 : vector<8x128xf32> to vector<1x8x128xf32>
    tpu.vector_store %arg7[%298, %c0_77, %c0_78], %301 {strides = array<i32>} : memref<8x8x128xf32, #tpu.memory_space<vmem>>, vector<1x8x128xf32>,
    %c8_i32_79 = arith.constant 8 : i32
    %c0_80 = arith.constant 0 : index
    %c0_81 = arith.constant 0 : index
    %302 = vector.load %arg8[%c0_80, %c0_81] : memref<8x128xf32, #tpu.memory_space<vmem>>, vector<8x128xf32>
    tpu.vector_store %arg8[%c0_80, %c0_81], %297 {strides = array<i32>} : memref<8x128xf32, #tpu.memory_space<vmem>>, vector<8x128xf32>,
    %c0_82 = arith.constant 0 : index
    %c0_83 = arith.constant 0 : index
    %303 = vector.load %arg9[%c0_82, %c0_83] : memref<8x128xf32, #tpu.memory_space<vmem>>, vector<8x128xf32>
    tpu.vector_store %arg9[%c0_82, %c0_83], %295 {strides = array<i32>} : memref<8x128xf32, #tpu.memory_space<vmem>>, vector<8x128xf32>,
    %c8_i32_84 = arith.constant 8 : i32
    %304 = arith.muli %arg1, %c8_i32_84 : i32
    %305 = tpu.iota {dimensions = array<i32: 0>} : vector<8x8x1xi32>
    %306 = vector.broadcast %304 : i32 to vector<8x8x1xi32>
    %307 = arith.addi %306, %305 : vector<8x8x1xi32>
    %c0_85 = arith.constant 0 : index
    %c0_86 = arith.constant 0 : index
    %308 = vector.load %arg2[%c0_85, %c0_86] : memref<8x1xi32, #tpu.memory_space<vmem>>, vector<8x1xi32>
    %309 = vector.shape_cast %308 : vector<8x1xi32> to vector<1x8x1xi32>
    %310 = vector.broadcast %309 : vector<1x8x1xi32> to vector<8x8x1xi32>
    %311 = arith.cmpi slt, %307, %310 : vector<8x8x1xi32>
    %312 = arith.extui %311 : vector<8x8x1xi1> to vector<8x8x1xi32>
    %313 = arith.sitofp %312 : vector<8x8x1xi32> to vector<8x8x1xf32>
    %c0_87 = arith.constant 0 : index
    %c0_88 = arith.constant 0 : index
    %c0_89 = arith.constant 0 : index
    %314 = vector.load %arg7[%c0_87, %c0_88, %c0_89] : memref<8x8x128xf32, #tpu.memory_space<vmem>>, vector<8x8x128xf32>
    %cst_90 = arith.constant 0.000000e+00 : f32
    %315 = vector.broadcast %cst_90 : f32 to vector<8x8x128xf32>
    %316 = arith.maximumf %314, %315 : vector<8x8x128xf32>
    %317 = vector.broadcast %313 : vector<8x8x1xf32> to vector<8x8x128xf32>
    %318 = arith.mulf %316, %317 : vector<8x8x128xf32>
    %c0_91 = arith.constant 0 : index
    %c0_92 = arith.constant 0 : index
    %c0_93 = arith.constant 0 : index
    %319 = vector.load %arg7[%c0_91, %c0_92, %c0_93] : memref<8x8x128xf32, #tpu.memory_space<vmem>>, vector<8x8x128xf32>
    tpu.vector_store %arg7[%c0_91, %c0_92, %c0_93], %318 {strides = array<i32>} : memref<8x8x128xf32, #tpu.memory_space<vmem>>, vector<8x8x128xf32>,
    return
  }
  func.func @transform_0(%arg0: i32, %arg1: i32) -> (i32, i32) {
    %c0_i32 = arith.constant 0 : i32
    %c0_i32_0 = arith.constant 0 : i32
    return %arg0, %c0_i32 : i32, i32
  }
  func.func @transform_1(%arg0: i32, %arg1: i32) -> (i32, i32, i32) {
    %c0_i32 = arith.constant 0 : i32
    %c0_i32_0 = arith.constant 0 : i32
    return %arg1, %arg0, %c0_i32 : i32, i32, i32
  }
  func.func @transform_2(%arg0: i32, %arg1: i32) -> (i32, i32) {
    %c0_i32 = arith.constant 0 : i32
    %c0_i32_0 = arith.constant 0 : i32
    %c0_i32_1 = arith.constant 0 : i32
    return %c0_i32, %c0_i32_0 : i32, i32
  }
  func.func @transform_3(%arg0: i32, %arg1: i32) -> (i32, i32) {
    %c0_i32 = arith.constant 0 : i32
    %c0_i32_0 = arith.constant 0 : i32
    %c0_i32_1 = arith.constant 0 : i32
    return %c0_i32, %c0_i32_0 : i32, i32
  }
  func.func @transform_4(%arg0: i32, %arg1: i32) -> (i32, i32) {
    %c0_i32 = arith.constant 0 : i32
    %c0_i32_0 = arith.constant 0 : i32
    %c0_i32_1 = arith.constant 0 : i32
    return %c0_i32, %c0_i32_0 : i32, i32
  }
  func.func @transform_5(%arg0: i32, %arg1: i32) -> (i32, i32, i32) {
    %c0_i32 = arith.constant 0 : i32
    %c0_i32_0 = arith.constant 0 : i32
    return %arg1, %arg0, %c0_i32 : i32, i32, i32
  }
}

module attributes {stable_mosaic.version = 11 : i64} {
  func.func @kernel(%arg0: i32, %arg1: i32, %arg2: memref<8x1xi32, #tpu.memory_space<vmem>>, %arg3: memref<8x8x16xbf16, #tpu.memory_space<vmem>>, %arg4: memref<16x512xbf16, #tpu.memory_space<vmem>>, %arg5: memref<128x512xbf16, #tpu.memory_space<vmem>>, %arg6: memref<1x512xf32, #tpu.memory_space<vmem>>, %arg7: memref<8x8x128xbf16, #tpu.memory_space<vmem>>, %arg8: memref<8x128xf32, #tpu.memory_space<vmem>>, %arg9: memref<8x128xf32, #tpu.memory_space<vmem>>, %arg10: memref<64x512xf32, #tpu.memory_space<vmem>>) attributes {dimension_semantics = [#tpu.dimension_semantics<parallel>, #tpu.dimension_semantics<arbitrary>], iteration_bounds = array<i64: 1, 1>, scalar_prefetch = 0 : i64, scratch_operands = 3 : i64, tpu.core_type = #tpu.core_type<tc>, window_params = [{transform_indices = @transform_0, window_bounds = array<i64: 8, 1>}, {transform_indices = @transform_1, window_bounds = array<i64: 8, 8, 16>}, {pipeline_mode = #tpu.pipeline_mode<synchronous>, transform_indices = @transform_2, window_bounds = array<i64: 16, 512>}, {pipeline_mode = #tpu.pipeline_mode<synchronous>, transform_indices = @transform_3, window_bounds = array<i64: 128, 512>}, {pipeline_mode = #tpu.pipeline_mode<synchronous>, transform_indices = @transform_4, window_bounds = array<i64: 1, 512>}, {transform_indices = @transform_5, window_bounds = array<i64: 8, 8, 128>}]} {
    %c0_i32 = arith.constant 0 : i32
    %0 = arith.cmpi eq, %arg1, %c0_i32 : i32
    %1 = arith.extui %0 : i1 to i32
    %c0_i32_0 = arith.constant 0 : i32
    %2 = arith.cmpi ne, %1, %c0_i32_0 : i32
    scf.if %2 {
      %cst_84 = arith.constant 0.000000e+00 : f32
      %312 = vector.broadcast %cst_84 : f32 to vector<8x128xf32>
      %c0_85 = arith.constant 0 : index
      %c0_86 = arith.constant 0 : index
      %313 = vector.load %arg8[%c0_85, %c0_86] : memref<8x128xf32, #tpu.memory_space<vmem>>, vector<8x128xf32>
      tpu.vector_store %arg8[%c0_85, %c0_86], %312 {strides = array<i32>} : memref<8x128xf32, #tpu.memory_space<vmem>>, vector<8x128xf32>,
      %cst_87 = arith.constant 0.000000e+00 : f32
      %314 = vector.broadcast %cst_87 : f32 to vector<8x128xf32>
      %c0_88 = arith.constant 0 : index
      %c0_89 = arith.constant 0 : index
      %315 = vector.load %arg9[%c0_88, %c0_89] : memref<8x128xf32, #tpu.memory_space<vmem>>, vector<8x128xf32>
      tpu.vector_store %arg9[%c0_88, %c0_89], %314 {strides = array<i32>} : memref<8x128xf32, #tpu.memory_space<vmem>>, vector<8x128xf32>,
    } else {
    }
    %c0 = arith.constant 0 : index
    %c0_1 = arith.constant 0 : index
    %c0_2 = arith.constant 0 : index
    %3 = vector.load %arg3[%c0, %c0_1, %c0_2] : memref<8x8x16xbf16, #tpu.memory_space<vmem>>, vector<8x8x16xbf16>
    %4 = vector.shape_cast %3 : vector<8x8x16xbf16> to vector<64x16xbf16>
    %c0_3 = arith.constant 0 : index
    %c0_4 = arith.constant 0 : index
    %5 = vector.load %arg4[%c0_3, %c0_4] : memref<16x512xbf16, #tpu.memory_space<vmem>>, vector<16x512xbf16>
    %cst = arith.constant dense<0.000000e+00> : vector<64x512xf32>
    %6 = tpu.matmul %4, %5, %cst {dimension_numbers = #tpu.dot_dimension_numbers<[1], [0], [0], [1], [0, 0, 1, 1], [], []>} : vector<64x16xbf16>, vector<16x512xbf16>, vector<64x512xf32> -> vector<64x512xf32>
    %c0_5 = arith.constant 0 : index
    %c0_6 = arith.constant 0 : index
    %7 = vector.load %arg6[%c0_5, %c0_6] : memref<1x512xf32, #tpu.memory_space<vmem>>, vector<1x512xf32>
    %8 = vector.broadcast %7 : vector<1x512xf32> to vector<64x512xf32>
    %9 = arith.addf %6, %8 : vector<64x512xf32>
    %c0_7 = arith.constant 0 : index
    %c0_8 = arith.constant 0 : index
    %10 = vector.load %arg10[%c0_7, %c0_8] : memref<64x512xf32, #tpu.memory_space<vmem>>, vector<64x512xf32>
    tpu.vector_store %arg10[%c0_7, %c0_8], %9 {strides = array<i32>} : memref<64x512xf32, #tpu.memory_space<vmem>>, vector<64x512xf32>,
    %c0_9 = arith.constant 0 : index
    %c0_10 = arith.constant 0 : index
    %11 = vector.load %arg5[%c0_9, %c0_10] : memref<128x512xbf16, #tpu.memory_space<vmem>>, vector<128x512xbf16>
    %c0_11 = arith.constant 0 : index
    %c0_12 = arith.constant 0 : index
    %12 = vector.load %arg8[%c0_11, %c0_12] : memref<8x128xf32, #tpu.memory_space<vmem>>, vector<8x128xf32>
    %c0_13 = arith.constant 0 : index
    %c0_14 = arith.constant 0 : index
    %13 = vector.load %arg9[%c0_13, %c0_14] : memref<8x128xf32, #tpu.memory_space<vmem>>, vector<8x128xf32>
    %c0_i32_15 = arith.constant 0 : i32
    %c8_i32 = arith.constant 8 : i32
    %14 = arith.muli %c0_i32_15, %c8_i32 : i32
    %15 = tpu.assume_multiple %14, 8 : i32
    %16 = arith.index_cast %15 : i32 to index
    %c0_16 = arith.constant 0 : index
    %17 = vector.load %arg10[%16, %c0_16] : memref<64x512xf32, #tpu.memory_space<vmem>>, vector<8x512xf32>
    %18 = arith.truncf %12 : vector<8x128xf32> to vector<8x128xbf16>
    %cst_17 = arith.constant dense<0.000000e+00> : vector<8x512xf32>
    %19 = tpu.matmul %18, %11, %cst_17 {dimension_numbers = #tpu.dot_dimension_numbers<[1], [0], [0], [1], [0, 0, 1, 1], [], []>} : vector<8x128xbf16>, vector<128x512xbf16>, vector<8x512xf32> -> vector<8x512xf32>
    %20 = arith.addf %17, %19 : vector<8x512xf32>
    %21 = vector.extract_strided_slice %20 {offsets = [0, 0], sizes = [8, 128], strides = [1, 1]} : vector<8x512xf32> to vector<8x128xf32>
    %22 = arith.negf %21 : vector<8x128xf32>
    %23 = math.exp %22 : vector<8x128xf32>
    %cst_18 = arith.constant 1.000000e+00 : f32
    %24 = vector.broadcast %cst_18 : f32 to vector<8x128xf32>
    %25 = arith.addf %24, %23 : vector<8x128xf32>
    %26 = arith.divf %24, %25 : vector<8x128xf32>
    %27 = vector.extract_strided_slice %20 {offsets = [0, 128], sizes = [8, 128], strides = [1, 1]} : vector<8x512xf32> to vector<8x128xf32>
    %28 = arith.negf %27 : vector<8x128xf32>
    %29 = math.exp %28 : vector<8x128xf32>
    %cst_19 = arith.constant 1.000000e+00 : f32
    %30 = vector.broadcast %cst_19 : f32 to vector<8x128xf32>
    %31 = arith.addf %30, %29 : vector<8x128xf32>
    %32 = arith.divf %30, %31 : vector<8x128xf32>
    %33 = vector.extract_strided_slice %20 {offsets = [0, 256], sizes = [8, 128], strides = [1, 1]} : vector<8x512xf32> to vector<8x128xf32>
    %34 = math.tanh %33 : vector<8x128xf32>
    %35 = vector.extract_strided_slice %20 {offsets = [0, 384], sizes = [8, 128], strides = [1, 1]} : vector<8x512xf32> to vector<8x128xf32>
    %36 = arith.negf %35 : vector<8x128xf32>
    %37 = math.exp %36 : vector<8x128xf32>
    %cst_20 = arith.constant 1.000000e+00 : f32
    %38 = vector.broadcast %cst_20 : f32 to vector<8x128xf32>
    %39 = arith.addf %38, %37 : vector<8x128xf32>
    %40 = arith.divf %38, %39 : vector<8x128xf32>
    %41 = arith.mulf %32, %13 : vector<8x128xf32>
    %42 = arith.mulf %26, %34 : vector<8x128xf32>
    %43 = arith.addf %41, %42 : vector<8x128xf32>
    %44 = math.tanh %43 : vector<8x128xf32>
    %45 = arith.mulf %40, %44 : vector<8x128xf32>
    %46 = arith.truncf %45 : vector<8x128xf32> to vector<8x128xbf16>
    %47 = arith.index_cast %c0_i32_15 : i32 to index
    %c0_21 = arith.constant 0 : index
    %c0_22 = arith.constant 0 : index
    %48 = vector.load %arg7[%47, %c0_21, %c0_22] : memref<8x8x128xbf16, #tpu.memory_space<vmem>>, vector<1x8x128xbf16>
    %49 = vector.shape_cast %48 : vector<1x8x128xbf16> to vector<8x128xbf16>
    %50 = vector.shape_cast %46 : vector<8x128xbf16> to vector<1x8x128xbf16>
    tpu.vector_store %arg7[%47, %c0_21, %c0_22], %50 {strides = array<i32>} : memref<8x8x128xbf16, #tpu.memory_space<vmem>>, vector<1x8x128xbf16>,
    %c1_i32 = arith.constant 1 : i32
    %c8_i32_23 = arith.constant 8 : i32
    %51 = arith.muli %c1_i32, %c8_i32_23 : i32
    %52 = tpu.assume_multiple %51, 8 : i32
    %53 = arith.index_cast %52 : i32 to index
    %c0_24 = arith.constant 0 : index
    %54 = vector.load %arg10[%53, %c0_24] : memref<64x512xf32, #tpu.memory_space<vmem>>, vector<8x512xf32>
    %55 = arith.truncf %45 : vector<8x128xf32> to vector<8x128xbf16>
    %cst_25 = arith.constant dense<0.000000e+00> : vector<8x512xf32>
    %56 = tpu.matmul %55, %11, %cst_25 {dimension_numbers = #tpu.dot_dimension_numbers<[1], [0], [0], [1], [0, 0, 1, 1], [], []>} : vector<8x128xbf16>, vector<128x512xbf16>, vector<8x512xf32> -> vector<8x512xf32>
    %57 = arith.addf %54, %56 : vector<8x512xf32>
    %58 = vector.extract_strided_slice %57 {offsets = [0, 0], sizes = [8, 128], strides = [1, 1]} : vector<8x512xf32> to vector<8x128xf32>
    %59 = arith.negf %58 : vector<8x128xf32>
    %60 = math.exp %59 : vector<8x128xf32>
    %cst_26 = arith.constant 1.000000e+00 : f32
    %61 = vector.broadcast %cst_26 : f32 to vector<8x128xf32>
    %62 = arith.addf %61, %60 : vector<8x128xf32>
    %63 = arith.divf %61, %62 : vector<8x128xf32>
    %64 = vector.extract_strided_slice %57 {offsets = [0, 128], sizes = [8, 128], strides = [1, 1]} : vector<8x512xf32> to vector<8x128xf32>
    %65 = arith.negf %64 : vector<8x128xf32>
    %66 = math.exp %65 : vector<8x128xf32>
    %cst_27 = arith.constant 1.000000e+00 : f32
    %67 = vector.broadcast %cst_27 : f32 to vector<8x128xf32>
    %68 = arith.addf %67, %66 : vector<8x128xf32>
    %69 = arith.divf %67, %68 : vector<8x128xf32>
    %70 = vector.extract_strided_slice %57 {offsets = [0, 256], sizes = [8, 128], strides = [1, 1]} : vector<8x512xf32> to vector<8x128xf32>
    %71 = math.tanh %70 : vector<8x128xf32>
    %72 = vector.extract_strided_slice %57 {offsets = [0, 384], sizes = [8, 128], strides = [1, 1]} : vector<8x512xf32> to vector<8x128xf32>
    %73 = arith.negf %72 : vector<8x128xf32>
    %74 = math.exp %73 : vector<8x128xf32>
    %cst_28 = arith.constant 1.000000e+00 : f32
    %75 = vector.broadcast %cst_28 : f32 to vector<8x128xf32>
    %76 = arith.addf %75, %74 : vector<8x128xf32>
    %77 = arith.divf %75, %76 : vector<8x128xf32>
    %78 = arith.mulf %69, %43 : vector<8x128xf32>
    %79 = arith.mulf %63, %71 : vector<8x128xf32>
    %80 = arith.addf %78, %79 : vector<8x128xf32>
    %81 = math.tanh %80 : vector<8x128xf32>
    %82 = arith.mulf %77, %81 : vector<8x128xf32>
    %83 = arith.truncf %82 : vector<8x128xf32> to vector<8x128xbf16>
    %84 = arith.index_cast %c1_i32 : i32 to index
    %c0_29 = arith.constant 0 : index
    %c0_30 = arith.constant 0 : index
    %85 = vector.load %arg7[%84, %c0_29, %c0_30] : memref<8x8x128xbf16, #tpu.memory_space<vmem>>, vector<1x8x128xbf16>
    %86 = vector.shape_cast %85 : vector<1x8x128xbf16> to vector<8x128xbf16>
    %87 = vector.shape_cast %83 : vector<8x128xbf16> to vector<1x8x128xbf16>
    tpu.vector_store %arg7[%84, %c0_29, %c0_30], %87 {strides = array<i32>} : memref<8x8x128xbf16, #tpu.memory_space<vmem>>, vector<1x8x128xbf16>,
    %c2_i32 = arith.constant 2 : i32
    %c8_i32_31 = arith.constant 8 : i32
    %88 = arith.muli %c2_i32, %c8_i32_31 : i32
    %89 = tpu.assume_multiple %88, 8 : i32
    %90 = arith.index_cast %89 : i32 to index
    %c0_32 = arith.constant 0 : index
    %91 = vector.load %arg10[%90, %c0_32] : memref<64x512xf32, #tpu.memory_space<vmem>>, vector<8x512xf32>
    %92 = arith.truncf %82 : vector<8x128xf32> to vector<8x128xbf16>
    %cst_33 = arith.constant dense<0.000000e+00> : vector<8x512xf32>
    %93 = tpu.matmul %92, %11, %cst_33 {dimension_numbers = #tpu.dot_dimension_numbers<[1], [0], [0], [1], [0, 0, 1, 1], [], []>} : vector<8x128xbf16>, vector<128x512xbf16>, vector<8x512xf32> -> vector<8x512xf32>
    %94 = arith.addf %91, %93 : vector<8x512xf32>
    %95 = vector.extract_strided_slice %94 {offsets = [0, 0], sizes = [8, 128], strides = [1, 1]} : vector<8x512xf32> to vector<8x128xf32>
    %96 = arith.negf %95 : vector<8x128xf32>
    %97 = math.exp %96 : vector<8x128xf32>
    %cst_34 = arith.constant 1.000000e+00 : f32
    %98 = vector.broadcast %cst_34 : f32 to vector<8x128xf32>
    %99 = arith.addf %98, %97 : vector<8x128xf32>
    %100 = arith.divf %98, %99 : vector<8x128xf32>
    %101 = vector.extract_strided_slice %94 {offsets = [0, 128], sizes = [8, 128], strides = [1, 1]} : vector<8x512xf32> to vector<8x128xf32>
    %102 = arith.negf %101 : vector<8x128xf32>
    %103 = math.exp %102 : vector<8x128xf32>
    %cst_35 = arith.constant 1.000000e+00 : f32
    %104 = vector.broadcast %cst_35 : f32 to vector<8x128xf32>
    %105 = arith.addf %104, %103 : vector<8x128xf32>
    %106 = arith.divf %104, %105 : vector<8x128xf32>
    %107 = vector.extract_strided_slice %94 {offsets = [0, 256], sizes = [8, 128], strides = [1, 1]} : vector<8x512xf32> to vector<8x128xf32>
    %108 = math.tanh %107 : vector<8x128xf32>
    %109 = vector.extract_strided_slice %94 {offsets = [0, 384], sizes = [8, 128], strides = [1, 1]} : vector<8x512xf32> to vector<8x128xf32>
    %110 = arith.negf %109 : vector<8x128xf32>
    %111 = math.exp %110 : vector<8x128xf32>
    %cst_36 = arith.constant 1.000000e+00 : f32
    %112 = vector.broadcast %cst_36 : f32 to vector<8x128xf32>
    %113 = arith.addf %112, %111 : vector<8x128xf32>
    %114 = arith.divf %112, %113 : vector<8x128xf32>
    %115 = arith.mulf %106, %80 : vector<8x128xf32>
    %116 = arith.mulf %100, %108 : vector<8x128xf32>
    %117 = arith.addf %115, %116 : vector<8x128xf32>
    %118 = math.tanh %117 : vector<8x128xf32>
    %119 = arith.mulf %114, %118 : vector<8x128xf32>
    %120 = arith.truncf %119 : vector<8x128xf32> to vector<8x128xbf16>
    %121 = arith.index_cast %c2_i32 : i32 to index
    %c0_37 = arith.constant 0 : index
    %c0_38 = arith.constant 0 : index
    %122 = vector.load %arg7[%121, %c0_37, %c0_38] : memref<8x8x128xbf16, #tpu.memory_space<vmem>>, vector<1x8x128xbf16>
    %123 = vector.shape_cast %122 : vector<1x8x128xbf16> to vector<8x128xbf16>
    %124 = vector.shape_cast %120 : vector<8x128xbf16> to vector<1x8x128xbf16>
    tpu.vector_store %arg7[%121, %c0_37, %c0_38], %124 {strides = array<i32>} : memref<8x8x128xbf16, #tpu.memory_space<vmem>>, vector<1x8x128xbf16>,
    %c3_i32 = arith.constant 3 : i32
    %c8_i32_39 = arith.constant 8 : i32
    %125 = arith.muli %c3_i32, %c8_i32_39 : i32
    %126 = tpu.assume_multiple %125, 8 : i32
    %127 = arith.index_cast %126 : i32 to index
    %c0_40 = arith.constant 0 : index
    %128 = vector.load %arg10[%127, %c0_40] : memref<64x512xf32, #tpu.memory_space<vmem>>, vector<8x512xf32>
    %129 = arith.truncf %119 : vector<8x128xf32> to vector<8x128xbf16>
    %cst_41 = arith.constant dense<0.000000e+00> : vector<8x512xf32>
    %130 = tpu.matmul %129, %11, %cst_41 {dimension_numbers = #tpu.dot_dimension_numbers<[1], [0], [0], [1], [0, 0, 1, 1], [], []>} : vector<8x128xbf16>, vector<128x512xbf16>, vector<8x512xf32> -> vector<8x512xf32>
    %131 = arith.addf %128, %130 : vector<8x512xf32>
    %132 = vector.extract_strided_slice %131 {offsets = [0, 0], sizes = [8, 128], strides = [1, 1]} : vector<8x512xf32> to vector<8x128xf32>
    %133 = arith.negf %132 : vector<8x128xf32>
    %134 = math.exp %133 : vector<8x128xf32>
    %cst_42 = arith.constant 1.000000e+00 : f32
    %135 = vector.broadcast %cst_42 : f32 to vector<8x128xf32>
    %136 = arith.addf %135, %134 : vector<8x128xf32>
    %137 = arith.divf %135, %136 : vector<8x128xf32>
    %138 = vector.extract_strided_slice %131 {offsets = [0, 128], sizes = [8, 128], strides = [1, 1]} : vector<8x512xf32> to vector<8x128xf32>
    %139 = arith.negf %138 : vector<8x128xf32>
    %140 = math.exp %139 : vector<8x128xf32>
    %cst_43 = arith.constant 1.000000e+00 : f32
    %141 = vector.broadcast %cst_43 : f32 to vector<8x128xf32>
    %142 = arith.addf %141, %140 : vector<8x128xf32>
    %143 = arith.divf %141, %142 : vector<8x128xf32>
    %144 = vector.extract_strided_slice %131 {offsets = [0, 256], sizes = [8, 128], strides = [1, 1]} : vector<8x512xf32> to vector<8x128xf32>
    %145 = math.tanh %144 : vector<8x128xf32>
    %146 = vector.extract_strided_slice %131 {offsets = [0, 384], sizes = [8, 128], strides = [1, 1]} : vector<8x512xf32> to vector<8x128xf32>
    %147 = arith.negf %146 : vector<8x128xf32>
    %148 = math.exp %147 : vector<8x128xf32>
    %cst_44 = arith.constant 1.000000e+00 : f32
    %149 = vector.broadcast %cst_44 : f32 to vector<8x128xf32>
    %150 = arith.addf %149, %148 : vector<8x128xf32>
    %151 = arith.divf %149, %150 : vector<8x128xf32>
    %152 = arith.mulf %143, %117 : vector<8x128xf32>
    %153 = arith.mulf %137, %145 : vector<8x128xf32>
    %154 = arith.addf %152, %153 : vector<8x128xf32>
    %155 = math.tanh %154 : vector<8x128xf32>
    %156 = arith.mulf %151, %155 : vector<8x128xf32>
    %157 = arith.truncf %156 : vector<8x128xf32> to vector<8x128xbf16>
    %158 = arith.index_cast %c3_i32 : i32 to index
    %c0_45 = arith.constant 0 : index
    %c0_46 = arith.constant 0 : index
    %159 = vector.load %arg7[%158, %c0_45, %c0_46] : memref<8x8x128xbf16, #tpu.memory_space<vmem>>, vector<1x8x128xbf16>
    %160 = vector.shape_cast %159 : vector<1x8x128xbf16> to vector<8x128xbf16>
    %161 = vector.shape_cast %157 : vector<8x128xbf16> to vector<1x8x128xbf16>
    tpu.vector_store %arg7[%158, %c0_45, %c0_46], %161 {strides = array<i32>} : memref<8x8x128xbf16, #tpu.memory_space<vmem>>, vector<1x8x128xbf16>,
    %c4_i32 = arith.constant 4 : i32
    %c8_i32_47 = arith.constant 8 : i32
    %162 = arith.muli %c4_i32, %c8_i32_47 : i32
    %163 = tpu.assume_multiple %162, 8 : i32
    %164 = arith.index_cast %163 : i32 to index
    %c0_48 = arith.constant 0 : index
    %165 = vector.load %arg10[%164, %c0_48] : memref<64x512xf32, #tpu.memory_space<vmem>>, vector<8x512xf32>
    %166 = arith.truncf %156 : vector<8x128xf32> to vector<8x128xbf16>
    %cst_49 = arith.constant dense<0.000000e+00> : vector<8x512xf32>
    %167 = tpu.matmul %166, %11, %cst_49 {dimension_numbers = #tpu.dot_dimension_numbers<[1], [0], [0], [1], [0, 0, 1, 1], [], []>} : vector<8x128xbf16>, vector<128x512xbf16>, vector<8x512xf32> -> vector<8x512xf32>
    %168 = arith.addf %165, %167 : vector<8x512xf32>
    %169 = vector.extract_strided_slice %168 {offsets = [0, 0], sizes = [8, 128], strides = [1, 1]} : vector<8x512xf32> to vector<8x128xf32>
    %170 = arith.negf %169 : vector<8x128xf32>
    %171 = math.exp %170 : vector<8x128xf32>
    %cst_50 = arith.constant 1.000000e+00 : f32
    %172 = vector.broadcast %cst_50 : f32 to vector<8x128xf32>
    %173 = arith.addf %172, %171 : vector<8x128xf32>
    %174 = arith.divf %172, %173 : vector<8x128xf32>
    %175 = vector.extract_strided_slice %168 {offsets = [0, 128], sizes = [8, 128], strides = [1, 1]} : vector<8x512xf32> to vector<8x128xf32>
    %176 = arith.negf %175 : vector<8x128xf32>
    %177 = math.exp %176 : vector<8x128xf32>
    %cst_51 = arith.constant 1.000000e+00 : f32
    %178 = vector.broadcast %cst_51 : f32 to vector<8x128xf32>
    %179 = arith.addf %178, %177 : vector<8x128xf32>
    %180 = arith.divf %178, %179 : vector<8x128xf32>
    %181 = vector.extract_strided_slice %168 {offsets = [0, 256], sizes = [8, 128], strides = [1, 1]} : vector<8x512xf32> to vector<8x128xf32>
    %182 = math.tanh %181 : vector<8x128xf32>
    %183 = vector.extract_strided_slice %168 {offsets = [0, 384], sizes = [8, 128], strides = [1, 1]} : vector<8x512xf32> to vector<8x128xf32>
    %184 = arith.negf %183 : vector<8x128xf32>
    %185 = math.exp %184 : vector<8x128xf32>
    %cst_52 = arith.constant 1.000000e+00 : f32
    %186 = vector.broadcast %cst_52 : f32 to vector<8x128xf32>
    %187 = arith.addf %186, %185 : vector<8x128xf32>
    %188 = arith.divf %186, %187 : vector<8x128xf32>
    %189 = arith.mulf %180, %154 : vector<8x128xf32>
    %190 = arith.mulf %174, %182 : vector<8x128xf32>
    %191 = arith.addf %189, %190 : vector<8x128xf32>
    %192 = math.tanh %191 : vector<8x128xf32>
    %193 = arith.mulf %188, %192 : vector<8x128xf32>
    %194 = arith.truncf %193 : vector<8x128xf32> to vector<8x128xbf16>
    %195 = arith.index_cast %c4_i32 : i32 to index
    %c0_53 = arith.constant 0 : index
    %c0_54 = arith.constant 0 : index
    %196 = vector.load %arg7[%195, %c0_53, %c0_54] : memref<8x8x128xbf16, #tpu.memory_space<vmem>>, vector<1x8x128xbf16>
    %197 = vector.shape_cast %196 : vector<1x8x128xbf16> to vector<8x128xbf16>
    %198 = vector.shape_cast %194 : vector<8x128xbf16> to vector<1x8x128xbf16>
    tpu.vector_store %arg7[%195, %c0_53, %c0_54], %198 {strides = array<i32>} : memref<8x8x128xbf16, #tpu.memory_space<vmem>>, vector<1x8x128xbf16>,
    %c5_i32 = arith.constant 5 : i32
    %c8_i32_55 = arith.constant 8 : i32
    %199 = arith.muli %c5_i32, %c8_i32_55 : i32
    %200 = tpu.assume_multiple %199, 8 : i32
    %201 = arith.index_cast %200 : i32 to index
    %c0_56 = arith.constant 0 : index
    %202 = vector.load %arg10[%201, %c0_56] : memref<64x512xf32, #tpu.memory_space<vmem>>, vector<8x512xf32>
    %203 = arith.truncf %193 : vector<8x128xf32> to vector<8x128xbf16>
    %cst_57 = arith.constant dense<0.000000e+00> : vector<8x512xf32>
    %204 = tpu.matmul %203, %11, %cst_57 {dimension_numbers = #tpu.dot_dimension_numbers<[1], [0], [0], [1], [0, 0, 1, 1], [], []>} : vector<8x128xbf16>, vector<128x512xbf16>, vector<8x512xf32> -> vector<8x512xf32>
    %205 = arith.addf %202, %204 : vector<8x512xf32>
    %206 = vector.extract_strided_slice %205 {offsets = [0, 0], sizes = [8, 128], strides = [1, 1]} : vector<8x512xf32> to vector<8x128xf32>
    %207 = arith.negf %206 : vector<8x128xf32>
    %208 = math.exp %207 : vector<8x128xf32>
    %cst_58 = arith.constant 1.000000e+00 : f32
    %209 = vector.broadcast %cst_58 : f32 to vector<8x128xf32>
    %210 = arith.addf %209, %208 : vector<8x128xf32>
    %211 = arith.divf %209, %210 : vector<8x128xf32>
    %212 = vector.extract_strided_slice %205 {offsets = [0, 128], sizes = [8, 128], strides = [1, 1]} : vector<8x512xf32> to vector<8x128xf32>
    %213 = arith.negf %212 : vector<8x128xf32>
    %214 = math.exp %213 : vector<8x128xf32>
    %cst_59 = arith.constant 1.000000e+00 : f32
    %215 = vector.broadcast %cst_59 : f32 to vector<8x128xf32>
    %216 = arith.addf %215, %214 : vector<8x128xf32>
    %217 = arith.divf %215, %216 : vector<8x128xf32>
    %218 = vector.extract_strided_slice %205 {offsets = [0, 256], sizes = [8, 128], strides = [1, 1]} : vector<8x512xf32> to vector<8x128xf32>
    %219 = math.tanh %218 : vector<8x128xf32>
    %220 = vector.extract_strided_slice %205 {offsets = [0, 384], sizes = [8, 128], strides = [1, 1]} : vector<8x512xf32> to vector<8x128xf32>
    %221 = arith.negf %220 : vector<8x128xf32>
    %222 = math.exp %221 : vector<8x128xf32>
    %cst_60 = arith.constant 1.000000e+00 : f32
    %223 = vector.broadcast %cst_60 : f32 to vector<8x128xf32>
    %224 = arith.addf %223, %222 : vector<8x128xf32>
    %225 = arith.divf %223, %224 : vector<8x128xf32>
    %226 = arith.mulf %217, %191 : vector<8x128xf32>
    %227 = arith.mulf %211, %219 : vector<8x128xf32>
    %228 = arith.addf %226, %227 : vector<8x128xf32>
    %229 = math.tanh %228 : vector<8x128xf32>
    %230 = arith.mulf %225, %229 : vector<8x128xf32>
    %231 = arith.truncf %230 : vector<8x128xf32> to vector<8x128xbf16>
    %232 = arith.index_cast %c5_i32 : i32 to index
    %c0_61 = arith.constant 0 : index
    %c0_62 = arith.constant 0 : index
    %233 = vector.load %arg7[%232, %c0_61, %c0_62] : memref<8x8x128xbf16, #tpu.memory_space<vmem>>, vector<1x8x128xbf16>
    %234 = vector.shape_cast %233 : vector<1x8x128xbf16> to vector<8x128xbf16>
    %235 = vector.shape_cast %231 : vector<8x128xbf16> to vector<1x8x128xbf16>
    tpu.vector_store %arg7[%232, %c0_61, %c0_62], %235 {strides = array<i32>} : memref<8x8x128xbf16, #tpu.memory_space<vmem>>, vector<1x8x128xbf16>,
    %c6_i32 = arith.constant 6 : i32
    %c8_i32_63 = arith.constant 8 : i32
    %236 = arith.muli %c6_i32, %c8_i32_63 : i32
    %237 = tpu.assume_multiple %236, 8 : i32
    %238 = arith.index_cast %237 : i32 to index
    %c0_64 = arith.constant 0 : index
    %239 = vector.load %arg10[%238, %c0_64] : memref<64x512xf32, #tpu.memory_space<vmem>>, vector<8x512xf32>
    %240 = arith.truncf %230 : vector<8x128xf32> to vector<8x128xbf16>
    %cst_65 = arith.constant dense<0.000000e+00> : vector<8x512xf32>
    %241 = tpu.matmul %240, %11, %cst_65 {dimension_numbers = #tpu.dot_dimension_numbers<[1], [0], [0], [1], [0, 0, 1, 1], [], []>} : vector<8x128xbf16>, vector<128x512xbf16>, vector<8x512xf32> -> vector<8x512xf32>
    %242 = arith.addf %239, %241 : vector<8x512xf32>
    %243 = vector.extract_strided_slice %242 {offsets = [0, 0], sizes = [8, 128], strides = [1, 1]} : vector<8x512xf32> to vector<8x128xf32>
    %244 = arith.negf %243 : vector<8x128xf32>
    %245 = math.exp %244 : vector<8x128xf32>
    %cst_66 = arith.constant 1.000000e+00 : f32
    %246 = vector.broadcast %cst_66 : f32 to vector<8x128xf32>
    %247 = arith.addf %246, %245 : vector<8x128xf32>
    %248 = arith.divf %246, %247 : vector<8x128xf32>
    %249 = vector.extract_strided_slice %242 {offsets = [0, 128], sizes = [8, 128], strides = [1, 1]} : vector<8x512xf32> to vector<8x128xf32>
    %250 = arith.negf %249 : vector<8x128xf32>
    %251 = math.exp %250 : vector<8x128xf32>
    %cst_67 = arith.constant 1.000000e+00 : f32
    %252 = vector.broadcast %cst_67 : f32 to vector<8x128xf32>
    %253 = arith.addf %252, %251 : vector<8x128xf32>
    %254 = arith.divf %252, %253 : vector<8x128xf32>
    %255 = vector.extract_strided_slice %242 {offsets = [0, 256], sizes = [8, 128], strides = [1, 1]} : vector<8x512xf32> to vector<8x128xf32>
    %256 = math.tanh %255 : vector<8x128xf32>
    %257 = vector.extract_strided_slice %242 {offsets = [0, 384], sizes = [8, 128], strides = [1, 1]} : vector<8x512xf32> to vector<8x128xf32>
    %258 = arith.negf %257 : vector<8x128xf32>
    %259 = math.exp %258 : vector<8x128xf32>
    %cst_68 = arith.constant 1.000000e+00 : f32
    %260 = vector.broadcast %cst_68 : f32 to vector<8x128xf32>
    %261 = arith.addf %260, %259 : vector<8x128xf32>
    %262 = arith.divf %260, %261 : vector<8x128xf32>
    %263 = arith.mulf %254, %228 : vector<8x128xf32>
    %264 = arith.mulf %248, %256 : vector<8x128xf32>
    %265 = arith.addf %263, %264 : vector<8x128xf32>
    %266 = math.tanh %265 : vector<8x128xf32>
    %267 = arith.mulf %262, %266 : vector<8x128xf32>
    %268 = arith.truncf %267 : vector<8x128xf32> to vector<8x128xbf16>
    %269 = arith.index_cast %c6_i32 : i32 to index
    %c0_69 = arith.constant 0 : index
    %c0_70 = arith.constant 0 : index
    %270 = vector.load %arg7[%269, %c0_69, %c0_70] : memref<8x8x128xbf16, #tpu.memory_space<vmem>>, vector<1x8x128xbf16>
    %271 = vector.shape_cast %270 : vector<1x8x128xbf16> to vector<8x128xbf16>
    %272 = vector.shape_cast %268 : vector<8x128xbf16> to vector<1x8x128xbf16>
    tpu.vector_store %arg7[%269, %c0_69, %c0_70], %272 {strides = array<i32>} : memref<8x8x128xbf16, #tpu.memory_space<vmem>>, vector<1x8x128xbf16>,
    %c7_i32 = arith.constant 7 : i32
    %c8_i32_71 = arith.constant 8 : i32
    %273 = arith.muli %c7_i32, %c8_i32_71 : i32
    %274 = tpu.assume_multiple %273, 8 : i32
    %275 = arith.index_cast %274 : i32 to index
    %c0_72 = arith.constant 0 : index
    %276 = vector.load %arg10[%275, %c0_72] : memref<64x512xf32, #tpu.memory_space<vmem>>, vector<8x512xf32>
    %277 = arith.truncf %267 : vector<8x128xf32> to vector<8x128xbf16>
    %cst_73 = arith.constant dense<0.000000e+00> : vector<8x512xf32>
    %278 = tpu.matmul %277, %11, %cst_73 {dimension_numbers = #tpu.dot_dimension_numbers<[1], [0], [0], [1], [0, 0, 1, 1], [], []>} : vector<8x128xbf16>, vector<128x512xbf16>, vector<8x512xf32> -> vector<8x512xf32>
    %279 = arith.addf %276, %278 : vector<8x512xf32>
    %280 = vector.extract_strided_slice %279 {offsets = [0, 0], sizes = [8, 128], strides = [1, 1]} : vector<8x512xf32> to vector<8x128xf32>
    %281 = arith.negf %280 : vector<8x128xf32>
    %282 = math.exp %281 : vector<8x128xf32>
    %cst_74 = arith.constant 1.000000e+00 : f32
    %283 = vector.broadcast %cst_74 : f32 to vector<8x128xf32>
    %284 = arith.addf %283, %282 : vector<8x128xf32>
    %285 = arith.divf %283, %284 : vector<8x128xf32>
    %286 = vector.extract_strided_slice %279 {offsets = [0, 128], sizes = [8, 128], strides = [1, 1]} : vector<8x512xf32> to vector<8x128xf32>
    %287 = arith.negf %286 : vector<8x128xf32>
    %288 = math.exp %287 : vector<8x128xf32>
    %cst_75 = arith.constant 1.000000e+00 : f32
    %289 = vector.broadcast %cst_75 : f32 to vector<8x128xf32>
    %290 = arith.addf %289, %288 : vector<8x128xf32>
    %291 = arith.divf %289, %290 : vector<8x128xf32>
    %292 = vector.extract_strided_slice %279 {offsets = [0, 256], sizes = [8, 128], strides = [1, 1]} : vector<8x512xf32> to vector<8x128xf32>
    %293 = math.tanh %292 : vector<8x128xf32>
    %294 = vector.extract_strided_slice %279 {offsets = [0, 384], sizes = [8, 128], strides = [1, 1]} : vector<8x512xf32> to vector<8x128xf32>
    %295 = arith.negf %294 : vector<8x128xf32>
    %296 = math.exp %295 : vector<8x128xf32>
    %cst_76 = arith.constant 1.000000e+00 : f32
    %297 = vector.broadcast %cst_76 : f32 to vector<8x128xf32>
    %298 = arith.addf %297, %296 : vector<8x128xf32>
    %299 = arith.divf %297, %298 : vector<8x128xf32>
    %300 = arith.mulf %291, %265 : vector<8x128xf32>
    %301 = arith.mulf %285, %293 : vector<8x128xf32>
    %302 = arith.addf %300, %301 : vector<8x128xf32>
    %303 = math.tanh %302 : vector<8x128xf32>
    %304 = arith.mulf %299, %303 : vector<8x128xf32>
    %305 = arith.truncf %304 : vector<8x128xf32> to vector<8x128xbf16>
    %306 = arith.index_cast %c7_i32 : i32 to index
    %c0_77 = arith.constant 0 : index
    %c0_78 = arith.constant 0 : index
    %307 = vector.load %arg7[%306, %c0_77, %c0_78] : memref<8x8x128xbf16, #tpu.memory_space<vmem>>, vector<1x8x128xbf16>
    %308 = vector.shape_cast %307 : vector<1x8x128xbf16> to vector<8x128xbf16>
    %309 = vector.shape_cast %305 : vector<8x128xbf16> to vector<1x8x128xbf16>
    tpu.vector_store %arg7[%306, %c0_77, %c0_78], %309 {strides = array<i32>} : memref<8x8x128xbf16, #tpu.memory_space<vmem>>, vector<1x8x128xbf16>,
    %c8_i32_79 = arith.constant 8 : i32
    %c0_80 = arith.constant 0 : index
    %c0_81 = arith.constant 0 : index
    %310 = vector.load %arg8[%c0_80, %c0_81] : memref<8x128xf32, #tpu.memory_space<vmem>>, vector<8x128xf32>
    tpu.vector_store %arg8[%c0_80, %c0_81], %304 {strides = array<i32>} : memref<8x128xf32, #tpu.memory_space<vmem>>, vector<8x128xf32>,
    %c0_82 = arith.constant 0 : index
    %c0_83 = arith.constant 0 : index
    %311 = vector.load %arg9[%c0_82, %c0_83] : memref<8x128xf32, #tpu.memory_space<vmem>>, vector<8x128xf32>
    tpu.vector_store %arg9[%c0_82, %c0_83], %302 {strides = array<i32>} : memref<8x128xf32, #tpu.memory_space<vmem>>, vector<8x128xf32>,
    return
  }
  func.func @transform_0(%arg0: i32, %arg1: i32) -> (i32, i32) {
    %c0_i32 = arith.constant 0 : i32
    %c0_i32_0 = arith.constant 0 : i32
    return %arg0, %c0_i32 : i32, i32
  }
  func.func @transform_1(%arg0: i32, %arg1: i32) -> (i32, i32, i32) {
    %c0_i32 = arith.constant 0 : i32
    %c0_i32_0 = arith.constant 0 : i32
    return %arg1, %arg0, %c0_i32 : i32, i32, i32
  }
  func.func @transform_2(%arg0: i32, %arg1: i32) -> (i32, i32) {
    %c0_i32 = arith.constant 0 : i32
    %c0_i32_0 = arith.constant 0 : i32
    %c0_i32_1 = arith.constant 0 : i32
    return %c0_i32, %c0_i32_0 : i32, i32
  }
  func.func @transform_3(%arg0: i32, %arg1: i32) -> (i32, i32) {
    %c0_i32 = arith.constant 0 : i32
    %c0_i32_0 = arith.constant 0 : i32
    %c0_i32_1 = arith.constant 0 : i32
    return %c0_i32, %c0_i32_0 : i32, i32
  }
  func.func @transform_4(%arg0: i32, %arg1: i32) -> (i32, i32) {
    %c0_i32 = arith.constant 0 : i32
    %c0_i32_0 = arith.constant 0 : i32
    %c0_i32_1 = arith.constant 0 : i32
    return %c0_i32, %c0_i32_0 : i32, i32
  }
  func.func @transform_5(%arg0: i32, %arg1: i32) -> (i32, i32, i32) {
    %c0_i32 = arith.constant 0 : i32
    %c0_i32_0 = arith.constant 0 : i32
    return %arg1, %arg0, %c0_i32 : i32, i32, i32
  }
}

</mosaic_0001>

<llo_original>
// kernel: encoder_rnn_forward.2
$region0: #{encoder_rnn_forward.2}
  #allocation0 [shape = 'u32[]', space=smem, size = 0x4, offset = 0x4, fixed_abs, tag = 'smem constant byte address 0x4 - core index']
  #allocation1 [shape = 'u32[72,128]{1,0:T(1,128)}', space=vmem, size = 0x9000, scoped, tag = 'internal scratch']
  #allocation2 [shape = 'f32[8,128]{1,0:T(8,128)}', space=vmem, size = 0x1000, scoped, tag = 'scratch operand']
  #allocation3 [shape = 'f32[8,128]{1,0:T(8,128)}', space=vmem, size = 0x1000, scoped, tag = 'scratch operand']
  #allocation4 [shape = 'f32[64,512]{1,0:T(8,128)}', space=vmem, size = 0x20000, scoped, tag = 'scratch operand']
  %s0 = inlined_call_operand.vmem [shape: s32[8,1], index: 0, kind: input, shape index: {}]
  %s1 = inlined_call_operand.vmem [shape: bf16[8,8,16], index: 1, kind: input, shape index: {}]
  %s2 = inlined_call_operand.vmem [shape: bf16[16,512], index: 2, kind: input, shape index: {}]
  %s3 = inlined_call_operand.hbm [shape: bf16[128,512], index: 3, kind: input, shape index: {}]
  %s4 = inlined_call_operand.vmem [shape: f32[1,512], index: 4, kind: input, shape index: {}]
  %s5 = inlined_call_operand.vmem [shape: bf16[8,8,128], index: 5, kind: output, shape index: {}]
  %s6 = sld [smem:[#allocation0]]
  $region38: #{encoder_rnn_forward.2} parent=0
    _
  %s8 = ssub.s32 1, %s6
  %s9 = scalar_select 0, %s8, %s6
  $region1: #{encoder_rnn_forward.2} parent=0
    #allocation5 [shape = 'u8[131072]{0}', space=vmem, size = 0x20000, scoped, tag = 'input window, operand 3, single buffered']
    #allocation6 [shape = 's32[1]{0}', space=sflag, size = 0x4, scoped, tag = 'scoped memory for encoder_rnn_forward.2']
    %10 = vsyncpa [#allocation6], 0
    // Predicated region
    $region2: #{encoder_rnn_forward.2} parent=1 // pred_check
      _
    $region3: #{encoder_rnn_forward.2} parent=1 // pred_check_branch
      %12 = sbr.rel (0) target = $region5
    $region4: #{encoder_rnn_forward.2} parent=1 // pred_region
      _
    $region5: #{encoder_rnn_forward.2} parent=1 // pred_fallthru
      _
    // Predicated region
    $region6: #{encoder_rnn_forward.2} parent=1 // pred_check
      _
    $region7: #{encoder_rnn_forward.2} parent=1 // pred_check_branch
      %14 = sbr.rel (0) target = $region9
    $region8: #{encoder_rnn_forward.2} parent=1 // pred_region
      _
    $region9: #{encoder_rnn_forward.2} parent=1 // pred_fallthru
      _
    // Predicated region
    $region10: #{encoder_rnn_forward.2} parent=1 // pred_check
      _
    $region11: #{encoder_rnn_forward.2} parent=1 // pred_check_branch
      %16 = sbr.rel (0) target = $region13
    $region12: #{encoder_rnn_forward.2} parent=1 // pred_region
      _
    $region13: #{encoder_rnn_forward.2} parent=1 // pred_fallthru
      _
    // Predicated region
    $region14: #{encoder_rnn_forward.2} parent=1 // pred_check
      _
    $region15: #{encoder_rnn_forward.2} parent=1 // pred_check_branch
      %18 = sbr.rel (0) target = $region17
    $region16: #{encoder_rnn_forward.2} parent=1 // pred_region
      %20 = vsyncadd [#allocation6], 0
      %s21 = sshll.u32 %s3, 4
      %s22 = int_to_ptr.hbm [resolvable:$true] %s21
      %s23 = sshll.u32 [#allocation5], 4
      %s24 = int_to_ptr.vmem [resolvable:$true] %s23
      %29 = dma.hbm_to_vmem [thread:$0]  %s22, 4096, %s24, [#allocation6], 256, 256, 16
    $region17: #{encoder_rnn_forward.2} parent=1 // pred_fallthru
      _
    // Predicated region
    $region18: #{encoder_rnn_forward.2} parent=1 // pred_check
      _
    $region19: #{encoder_rnn_forward.2} parent=1 // pred_check_branch
      %31 = sbr.rel (0) target = $region21
    $region20: #{encoder_rnn_forward.2} parent=1 // pred_region
      _
    $region21: #{encoder_rnn_forward.2} parent=1 // pred_fallthru
      _
    // Predicated region
    $region22: #{encoder_rnn_forward.2} parent=1 // pred_check
      _
    $region23: #{encoder_rnn_forward.2} parent=1 // pred_check_branch
      %33 = sbr.rel (0) target = $region25
    $region24: #{encoder_rnn_forward.2} parent=1 // pred_region
      %35 = dma.done [#allocation6], 4096
    $region25: #{encoder_rnn_forward.2} parent=1 // pred_fallthru
      _
    %p37 = scmp.eq.s32.totalorder 0, 0
    // Predicated region
    $region26: #{encoder_rnn_forward.2} parent=1 // pred_check
      %p38 = pneg %p37
    $region27: #{encoder_rnn_forward.2} parent=1 // pred_check_branch
      %40 = sbr.rel (%p38) target = $region29
    $region28: #{encoder_rnn_forward.2} parent=1 // pred_region
      %41 = vst [vmem:[#allocation2] sm:$0xff] 0.0
      %42 = vst [vmem:[#allocation3] sm:$0xff] 0.0
    $region29: #{encoder_rnn_forward.2} parent=1 // pred_fallthru
      _
    %v43 = vld [vmem:[%s1] sm:$0xf]
    %v44 = vld [vmem:[%s1 + $0x4] sm:$0xf]
    %v45 = vld [vmem:[%s1 + $0x8] sm:$0xf]
    %v46 = vld [vmem:[%s1 + $0xc] sm:$0xf]
    %v47 = vld [vmem:[%s1 + $0x10] sm:$0xf]
    %v48 = vld [vmem:[%s1 + $0x14] sm:$0xf]
    %v49 = vld [vmem:[%s1 + $0x18] sm:$0xf]
    %v50 = vld [vmem:[%s1 + $0x1c] sm:$0xf]
    %v51 = vld [vmem:[%s2] sm:$0xff]
    %v52 = vld [vmem:[%s2 + $0x8] sm:$0xff]
    %v53 = vld [vmem:[%s2 + $0x10] sm:$0xff]
    %v54 = vld [vmem:[%s2 + $0x18] sm:$0xff]
    %v55 = vld [vmem:[%s4] sm:$0xf]
    %v57 = vperm.slane %v55, 0
    %v58 = vperm.slane %v55, 1
    %v59 = vperm.slane %v55, 2
    %v60 = vperm.slane %v55, 3
    %v73 = vunpack.c.l.b16 %v43
    %v74 = vunpack.c.l.b16 %v44
    %v75 = vunpack.c.l.b16 %v45
    %v76 = vunpack.c.l.b16 %v46
    %v77 = vunpack.c.l.b16 %v47
    %v78 = vunpack.c.l.b16 %v48
    %v79 = vunpack.c.l.b16 %v49
    %v80 = vunpack.c.l.b16 %v50
    %v81 = vpack.c.b16 %v74, %v73
    %v82 = vpack.c.b16 %v76, %v75
    %v83 = vpack.c.b16 %v78, %v77
    %v84 = vpack.c.b16 %v80, %v79
    %v89 = vunpack.c.l.b16 %v51
    %v90 = vunpack.c.h.b16 %v51
    %v91 = vunpack.c.l.b16 %v52
    %v92 = vunpack.c.h.b16 %v52
    %v93 = vunpack.c.l.b16 %v53
    %v94 = vunpack.c.h.b16 %v53
    %v95 = vunpack.c.l.b16 %v54
    %v96 = vunpack.c.h.b16 %v54
    %v97 = vpack.c.b16 %v93, %v89
    %v98 = vpack.c.b16 %v94, %v90
    %v99 = vpack.c.b16 %v95, %v91
    %v100 = vpack.c.b16 %v96, %v92
    %vm105 = vcmask 130048
    %v107 = vsel %vm105, %v81, 0
    %v110 = vsel %vm105, %v82, 0
    %v113 = vsel %vm105, %v83, 0
    %v116 = vsel %vm105, %v84, 0
    %118 = vmatpush.bf16.msra.mxu0 0
    %119 = vmatpush.bf16.msra.mxu0 0
    %120 = vmatpush.bf16.msra.mxu0 0
    %121 = vmatpush.bf16.msra.mxu0 0
    %122 = vmatpush.bf16.msra.mxu0 0
    %123 = vmatpush.bf16.msra.mxu0 0
    %124 = vmatpush.bf16.msra.mxu0 0
    %125 = vmatpush.bf16.msra.mxu0 %v97
    %126 = vmatmul.bf16.gmra.mxu0 %v107
    %v127 = vpop.f32.mrf.mxu0
    %v128 = vadd.f32 %v57, %v127
    %v129 = vpop.f32.mrf.mxu0
    %v130 = vadd.f32 %v57, %v129
    %131 = vmatmul.bf16.gmra.mxu0 %v110
    %v132 = vpop.f32.mrf.mxu0
    %v133 = vadd.f32 %v57, %v132
    %v134 = vpop.f32.mrf.mxu0
    %v135 = vadd.f32 %v57, %v134
    %136 = vmatmul.bf16.gmra.mxu0 %v113
    %v137 = vpop.f32.mrf.mxu0
    %v138 = vadd.f32 %v57, %v137
    %v139 = vpop.f32.mrf.mxu0
    %v140 = vadd.f32 %v57, %v139
    %141 = vmatmul.bf16.gmra.mxu0 %v116
    %v142 = vpop.f32.mrf.mxu0
    %v143 = vadd.f32 %v57, %v142
    %v144 = vpop.f32.mrf.mxu0
    %v145 = vadd.f32 %v57, %v144
    %146 = vdwg.mxu0
    %147 = vmatpush.bf16.msra.mxu0 0
    %148 = vmatpush.bf16.msra.mxu0 0
    %149 = vmatpush.bf16.msra.mxu0 0
    %150 = vmatpush.bf16.msra.mxu0 0
    %151 = vmatpush.bf16.msra.mxu0 0
    %152 = vmatpush.bf16.msra.mxu0 0
    %153 = vmatpush.bf16.msra.mxu0 0
    %154 = vmatpush.bf16.msra.mxu0 %v98
    %155 = vmatmul.bf16.gmra.mxu0 %v107
    %v156 = vpop.f32.mrf.mxu0
    %v157 = vadd.f32 %v58, %v156
    %v158 = vpop.f32.mrf.mxu0
    %v159 = vadd.f32 %v58, %v158
    %160 = vmatmul.bf16.gmra.mxu0 %v110
    %v161 = vpop.f32.mrf.mxu0
    %v162 = vadd.f32 %v58, %v161
    %v163 = vpop.f32.mrf.mxu0
    %v164 = vadd.f32 %v58, %v163
    %165 = vmatmul.bf16.gmra.mxu0 %v113
    %v166 = vpop.f32.mrf.mxu0
    %v167 = vadd.f32 %v58, %v166
    %v168 = vpop.f32.mrf.mxu0
    %v169 = vadd.f32 %v58, %v168
    %170 = vmatmul.bf16.gmra.mxu0 %v116
    %v171 = vpop.f32.mrf.mxu0
    %v172 = vadd.f32 %v58, %v171
    %v173 = vpop.f32.mrf.mxu0
    %v174 = vadd.f32 %v58, %v173
    %175 = vdwg.mxu0
    %176 = vmatpush.bf16.msra.mxu0 0
    %177 = vmatpush.bf16.msra.mxu0 0
    %178 = vmatpush.bf16.msra.mxu0 0
    %179 = vmatpush.bf16.msra.mxu0 0
    %180 = vmatpush.bf16.msra.mxu0 0
    %181 = vmatpush.bf16.msra.mxu0 0
    %182 = vmatpush.bf16.msra.mxu0 0
    %183 = vmatpush.bf16.msra.mxu0 %v99
    %184 = vmatmul.bf16.gmra.mxu0 %v107
    %v185 = vpop.f32.mrf.mxu0
    %v186 = vadd.f32 %v59, %v185
    %v187 = vpop.f32.mrf.mxu0
    %v188 = vadd.f32 %v59, %v187
    %189 = vmatmul.bf16.gmra.mxu0 %v110
    %v190 = vpop.f32.mrf.mxu0
    %v191 = vadd.f32 %v59, %v190
    %v192 = vpop.f32.mrf.mxu0
    %v193 = vadd.f32 %v59, %v192
    %194 = vmatmul.bf16.gmra.mxu0 %v113
    %v195 = vpop.f32.mrf.mxu0
    %v196 = vadd.f32 %v59, %v195
    %v197 = vpop.f32.mrf.mxu0
    %v198 = vadd.f32 %v59, %v197
    %199 = vmatmul.bf16.gmra.mxu0 %v116
    %v200 = vpop.f32.mrf.mxu0
    %v201 = vadd.f32 %v59, %v200
    %v202 = vpop.f32.mrf.mxu0
    %v203 = vadd.f32 %v59, %v202
    %204 = vdwg.mxu0
    %205 = vmatpush.bf16.msra.mxu0 0
    %206 = vmatpush.bf16.msra.mxu0 0
    %207 = vmatpush.bf16.msra.mxu0 0
    %208 = vmatpush.bf16.msra.mxu0 0
    %209 = vmatpush.bf16.msra.mxu0 0
    %210 = vmatpush.bf16.msra.mxu0 0
    %211 = vmatpush.bf16.msra.mxu0 0
    %212 = vmatpush.bf16.msra.mxu0 %v100
    %213 = vmatmul.bf16.gmra.mxu0 %v107
    %v214 = vpop.f32.mrf.mxu0
    %v215 = vadd.f32 %v60, %v214
    %v216 = vpop.f32.mrf.mxu0
    %v217 = vadd.f32 %v60, %v216
    %218 = vmatmul.bf16.gmra.mxu0 %v110
    %v219 = vpop.f32.mrf.mxu0
    %v220 = vadd.f32 %v60, %v219
    %v221 = vpop.f32.mrf.mxu0
    %v222 = vadd.f32 %v60, %v221
    %223 = vmatmul.bf16.gmra.mxu0 %v113
    %v224 = vpop.f32.mrf.mxu0
    %v225 = vadd.f32 %v60, %v224
    %v226 = vpop.f32.mrf.mxu0
    %v227 = vadd.f32 %v60, %v226
    %228 = vmatmul.bf16.gmra.mxu0 %v116
    %v229 = vpop.f32.mrf.mxu0
    %v230 = vadd.f32 %v60, %v229
    %v231 = vpop.f32.mrf.mxu0
    %v232 = vadd.f32 %v60, %v231
    %233 = vdwg.mxu0
    %234 = vst [vmem:[#allocation4] sm:$0xff] %v128
    %235 = vst [vmem:[#allocation4 + $0x8] sm:$0xff] %v157
    %236 = vst [vmem:[#allocation4 + $0x10] sm:$0xff] %v186
    %237 = vst [vmem:[#allocation4 + $0x18] sm:$0xff] %v215
    %238 = vst [vmem:[#allocation4 + $0x20] sm:$0xff] %v130
    %239 = vst [vmem:[#allocation4 + $0x28] sm:$0xff] %v159
    %240 = vst [vmem:[#allocation4 + $0x30] sm:$0xff] %v188
    %241 = vst [vmem:[#allocation4 + $0x38] sm:$0xff] %v217
    %242 = vst [vmem:[#allocation4 + $0x40] sm:$0xff] %v133
    %243 = vst [vmem:[#allocation4 + $0x48] sm:$0xff] %v162
    %244 = vst [vmem:[#allocation4 + $0x50] sm:$0xff] %v191
    %245 = vst [vmem:[#allocation4 + $0x58] sm:$0xff] %v220
    %246 = vst [vmem:[#allocation4 + $0x60] sm:$0xff] %v135
    %247 = vst [vmem:[#allocation4 + $0x68] sm:$0xff] %v164
    %248 = vst [vmem:[#allocation4 + $0x70] sm:$0xff] %v193
    %249 = vst [vmem:[#allocation4 + $0x78] sm:$0xff] %v222
    %250 = vst [vmem:[#allocation4 + $0x80] sm:$0xff] %v138
    %251 = vst [vmem:[#allocation4 + $0x88] sm:$0xff] %v167
    %252 = vst [vmem:[#allocation4 + $0x90] sm:$0xff] %v196
    %253 = vst [vmem:[#allocation4 + $0x98] sm:$0xff] %v225
    %254 = vst [vmem:[#allocation4 + $0xa0] sm:$0xff] %v140
    %255 = vst [vmem:[#allocation4 + $0xa8] sm:$0xff] %v169
    %256 = vst [vmem:[#allocation4 + $0xb0] sm:$0xff] %v198
    %257 = vst [vmem:[#allocation4 + $0xb8] sm:$0xff] %v227
    %258 = vst [vmem:[#allocation4 + $0xc0] sm:$0xff] %v143
    %259 = vst [vmem:[#allocation4 + $0xc8] sm:$0xff] %v172
    %260 = vst [vmem:[#allocation4 + $0xd0] sm:$0xff] %v201
    %261 = vst [vmem:[#allocation4 + $0xd8] sm:$0xff] %v230
    %262 = vst [vmem:[#allocation4 + $0xe0] sm:$0xff] %v145
    %263 = vst [vmem:[#allocation4 + $0xe8] sm:$0xff] %v174
    %264 = vst [vmem:[#allocation4 + $0xf0] sm:$0xff] %v203
    %265 = vst [vmem:[#allocation4 + $0xf8] sm:$0xff] %v232
    %v266 = vld [vmem:[#allocation5] sm:$0xff]
    %v267 = vld [vmem:[#allocation5 + $0x8] sm:$0xff]
    %v268 = vld [vmem:[#allocation5 + $0x10] sm:$0xff]
    %v269 = vld [vmem:[#allocation5 + $0x18] sm:$0xff]
    %v270 = vld [vmem:[#allocation5 + $0x20] sm:$0xff]
    %v271 = vld [vmem:[#allocation5 + $0x28] sm:$0xff]
    %v272 = vld [vmem:[#allocation5 + $0x30] sm:$0xff]
    %v273 = vld [vmem:[#allocation5 + $0x38] sm:$0xff]
    %v274 = vld [vmem:[#allocation5 + $0x40] sm:$0xff]
    %v275 = vld [vmem:[#allocation5 + $0x48] sm:$0xff]
    %v276 = vld [vmem:[#allocation5 + $0x50] sm:$0xff]
    %v277 = vld [vmem:[#allocation5 + $0x58] sm:$0xff]
    %v278 = vld [vmem:[#allocation5 + $0x60] sm:$0xff]
    %v279 = vld [vmem:[#allocation5 + $0x68] sm:$0xff]
    %v280 = vld [vmem:[#allocation5 + $0x70] sm:$0xff]
    %v281 = vld [vmem:[#allocation5 + $0x78] sm:$0xff]
    %v282 = vld [vmem:[#allocation5 + $0x80] sm:$0xff]
    %v283 = vld [vmem:[#allocation5 + $0x88] sm:$0xff]
    %v284 = vld [vmem:[#allocation5 + $0x90] sm:$0xff]
    %v285 = vld [vmem:[#allocation5 + $0x98] sm:$0xff]
    %v286 = vld [vmem:[#allocation5 + $0xa0] sm:$0xff]
    %v287 = vld [vmem:[#allocation5 + $0xa8] sm:$0xff]
    %v288 = vld [vmem:[#allocation5 + $0xb0] sm:$0xff]
    %v289 = vld [vmem:[#allocation5 + $0xb8] sm:$0xff]
    %v290 = vld [vmem:[#allocation5 + $0xc0] sm:$0xff]
    %v291 = vld [vmem:[#allocation5 + $0xc8] sm:$0xff]
    %v292 = vld [vmem:[#allocation5 + $0xd0] sm:$0xff]
    %v293 = vld [vmem:[#allocation5 + $0xd8] sm:$0xff]
    %v294 = vld [vmem:[#allocation5 + $0xe0] sm:$0xff]
    %v295 = vld [vmem:[#allocation5 + $0xe8] sm:$0xff]
    %v296 = vld [vmem:[#allocation5 + $0xf0] sm:$0xff]
    %v297 = vld [vmem:[#allocation5 + $0xf8] sm:$0xff]
    %v298 = vld [vmem:[#allocation2] sm:$0xff]
    %v299 = vld [vmem:[#allocation3] sm:$0xff]
    %s300 = smul.u32 0, 4
    %s301 = smul.addr %s300, 8
    %s302 = scalar_lea.vmem [#allocation4], %s301
    %v303 = vld [vmem:[%s302] sm:$0xff]
    %v304 = vld [vmem:[%s302 + $0x8] sm:$0xff]
    %v305 = vld [vmem:[%s302 + $0x10] sm:$0xff]
    %v306 = vld [vmem:[%s302 + $0x18] sm:$0xff]
    %v307 = vpack.c.bf16 %v298, %v298
    %v340 = vunpack.c.l.b16 %v266
    %v341 = vunpack.c.h.b16 %v266
    %v342 = vunpack.c.l.b16 %v267
    %v343 = vunpack.c.h.b16 %v267
    %v344 = vunpack.c.l.b16 %v268
    %v345 = vunpack.c.h.b16 %v268
    %v346 = vunpack.c.l.b16 %v269
    %v347 = vunpack.c.h.b16 %v269
    %v348 = vunpack.c.l.b16 %v270
    %v349 = vunpack.c.h.b16 %v270
    %v350 = vunpack.c.l.b16 %v271
    %v351 = vunpack.c.h.b16 %v271
    %v352 = vunpack.c.l.b16 %v272
    %v353 = vunpack.c.h.b16 %v272
    %v354 = vunpack.c.l.b16 %v273
    %v355 = vunpack.c.h.b16 %v273
    %v356 = vunpack.c.l.b16 %v274
    %v357 = vunpack.c.h.b16 %v274
    %v358 = vunpack.c.l.b16 %v275
    %v359 = vunpack.c.h.b16 %v275
    %v360 = vunpack.c.l.b16 %v276
    %v361 = vunpack.c.h.b16 %v276
    %v362 = vunpack.c.l.b16 %v277
    %v363 = vunpack.c.h.b16 %v277
    %v364 = vunpack.c.l.b16 %v278
    %v365 = vunpack.c.h.b16 %v278
    %v366 = vunpack.c.l.b16 %v279
    %v367 = vunpack.c.h.b16 %v279
    %v368 = vunpack.c.l.b16 %v280
    %v369 = vunpack.c.h.b16 %v280
    %v370 = vunpack.c.l.b16 %v281
    %v371 = vunpack.c.h.b16 %v281
    %v372 = vunpack.c.l.b16 %v282
    %v373 = vunpack.c.h.b16 %v282
    %v374 = vunpack.c.l.b16 %v283
    %v375 = vunpack.c.h.b16 %v283
    %v376 = vunpack.c.l.b16 %v284
    %v377 = vunpack.c.h.b16 %v284
    %v378 = vunpack.c.l.b16 %v285
    %v379 = vunpack.c.h.b16 %v285
    %v380 = vunpack.c.l.b16 %v286
    %v381 = vunpack.c.h.b16 %v286
    %v382 = vunpack.c.l.b16 %v287
    %v383 = vunpack.c.h.b16 %v287
    %v384 = vunpack.c.l.b16 %v288
    %v385 = vunpack.c.h.b16 %v288
    %v386 = vunpack.c.l.b16 %v289
    %v387 = vunpack.c.h.b16 %v289
    %v388 = vunpack.c.l.b16 %v290
    %v389 = vunpack.c.h.b16 %v290
    %v390 = vunpack.c.l.b16 %v291
    %v391 = vunpack.c.h.b16 %v291
    %v392 = vunpack.c.l.b16 %v292
    %v393 = vunpack.c.h.b16 %v292
    %v394 = vunpack.c.l.b16 %v293
    %v395 = vunpack.c.h.b16 %v293
    %v396 = vunpack.c.l.b16 %v294
    %v397 = vunpack.c.h.b16 %v294
    %v398 = vunpack.c.l.b16 %v295
    %v399 = vunpack.c.h.b16 %v295
    %v400 = vunpack.c.l.b16 %v296
    %v401 = vunpack.c.h.b16 %v296
    %v402 = vunpack.c.l.b16 %v297
    %v403 = vunpack.c.h.b16 %v297
    %v404 = vpack.c.b16 %v344, %v340
    %v405 = vpack.c.b16 %v345, %v341
    %v406 = vpack.c.b16 %v346, %v342
    %v407 = vpack.c.b16 %v347, %v343
    %v408 = vpack.c.b16 %v352, %v348
    %v409 = vpack.c.b16 %v353, %v349
    %v410 = vpack.c.b16 %v354, %v350
    %v411 = vpack.c.b16 %v355, %v351
    %v412 = vpack.c.b16 %v360, %v356
    %v413 = vpack.c.b16 %v361, %v357
    %v414 = vpack.c.b16 %v362, %v358
    %v415 = vpack.c.b16 %v363, %v359
    %v416 = vpack.c.b16 %v368, %v364
    %v417 = vpack.c.b16 %v369, %v365
    %v418 = vpack.c.b16 %v370, %v366
    %v419 = vpack.c.b16 %v371, %v367
    %v420 = vpack.c.b16 %v376, %v372
    %v421 = vpack.c.b16 %v377, %v373
    %v422 = vpack.c.b16 %v378, %v374
    %v423 = vpack.c.b16 %v379, %v375
    %v424 = vpack.c.b16 %v384, %v380
    %v425 = vpack.c.b16 %v385, %v381
    %v426 = vpack.c.b16 %v386, %v382
    %v427 = vpack.c.b16 %v387, %v383
    %v428 = vpack.c.b16 %v392, %v388
    %v429 = vpack.c.b16 %v393, %v389
    %v430 = vpack.c.b16 %v394, %v390
    %v431 = vpack.c.b16 %v395, %v391
    %v432 = vpack.c.b16 %v400, %v396
    %v433 = vpack.c.b16 %v401, %v397
    %v434 = vpack.c.b16 %v402, %v398
    %v435 = vpack.c.b16 %v403, %v399
    %468 = vmatpush.bf16.msra.mxu0 %v432
    %469 = vmatpush.bf16.msra.mxu0 %v428
    %470 = vmatpush.bf16.msra.mxu0 %v424
    %471 = vmatpush.bf16.msra.mxu0 %v420
    %472 = vmatpush.bf16.msra.mxu0 %v416
    %473 = vmatpush.bf16.msra.mxu0 %v412
    %474 = vmatpush.bf16.msra.mxu0 %v408
    %475 = vmatpush.bf16.msra.mxu0 %v404
    %476 = vmatmul.bf16.gmra.mxu0 %v307
    %v477 = vpop.f32.mrf.mxu0
    %v478 = vadd.f32 0.0, %v477
    %v479 = vpop.f32.mrf.mxu0
    %480 = vdwg.mxu0
    %481 = vmatpush.bf16.msra.mxu0 %v433
    %482 = vmatpush.bf16.msra.mxu0 %v429
    %483 = vmatpush.bf16.msra.mxu0 %v425
    %484 = vmatpush.bf16.msra.mxu0 %v421
    %485 = vmatpush.bf16.msra.mxu0 %v417
    %486 = vmatpush.bf16.msra.mxu0 %v413
    %487 = vmatpush.bf16.msra.mxu0 %v409
    %488 = vmatpush.bf16.msra.mxu0 %v405
    %489 = vmatmul.bf16.gmra.mxu0 %v307
    %v490 = vpop.f32.mrf.mxu0
    %v491 = vadd.f32 0.0, %v490
    %v492 = vpop.f32.mrf.mxu0
    %493 = vdwg.mxu0
    %494 = vmatpush.bf16.msra.mxu0 %v434
    %495 = vmatpush.bf16.msra.mxu0 %v430
    %496 = vmatpush.bf16.msra.mxu0 %v426
    %497 = vmatpush.bf16.msra.mxu0 %v422
    %498 = vmatpush.bf16.msra.mxu0 %v418
    %499 = vmatpush.bf16.msra.mxu0 %v414
    %500 = vmatpush.bf16.msra.mxu0 %v410
    %501 = vmatpush.bf16.msra.mxu0 %v406
    %502 = vmatmul.bf16.gmra.mxu0 %v307
    %v503 = vpop.f32.mrf.mxu0
    %v504 = vadd.f32 0.0, %v503
    %v505 = vpop.f32.mrf.mxu0
    %506 = vdwg.mxu0
    %507 = vmatpush.bf16.msra.mxu0 %v435
    %508 = vmatpush.bf16.msra.mxu0 %v431
    %509 = vmatpush.bf16.msra.mxu0 %v427
    %510 = vmatpush.bf16.msra.mxu0 %v423
    %511 = vmatpush.bf16.msra.mxu0 %v419
    %512 = vmatpush.bf16.msra.mxu0 %v415
    %513 = vmatpush.bf16.msra.mxu0 %v411
    %514 = vmatpush.bf16.msra.mxu0 %v407
    %515 = vmatmul.bf16.gmra.mxu0 %v307
    %v516 = vpop.f32.mrf.mxu0
    %v517 = vadd.f32 0.0, %v516
    %v518 = vpop.f32.mrf.mxu0
    %519 = vdwg.mxu0
    %v520 = vadd.f32 %v303, %v478
    %v521 = vadd.f32 %v304, %v491
    %v522 = vadd.f32 %v305, %v504
    %v523 = vadd.f32 %v306, %v517
    %v524 = vxor.u32 %v520, 2147483648
    %v525 = vmul.f32 %v524, 1.442695
    %v526 = vpow.pop %v525
    %v527 = vadd.f32 %v526, 1.0
    %v528 = vrcp.pop %v527
    %v529 = vmul.f32 %v527, %v528
    %v530 = vsub.f32 1.0, %v529
    %v531 = vmul.f32 %v528, %v530
    %v532 = vadd.f32 %v528, %v531
    %vm533 = vweird.f32 %v527
    %vm534 = vweird.f32 %v528
    %vm535 = vmor %vm533, %vm534
    %v536 = vsel %vm535, %v528, %v532
    %v537 = vand.u32 2147483647, %v527
    %vm538 = vcmp.eq.f32.partialorder %v537, 8.507059e+37
    %v539 = vand.u32 %v527, 2147483648
    %v540 = vor.u32 1.1754944e-38, %v539
    %v541 = vsel %vm538, %v540, %v536
    %v542 = vmul.f32 1.0, %v541
    %v543 = vxor.u32 %v521, 2147483648
    %v544 = vmul.f32 %v543, 1.442695
    %v545 = vpow.pop %v544
    %v546 = vadd.f32 %v545, 1.0
    %v547 = vrcp.pop %v546
    %v548 = vmul.f32 %v546, %v547
    %v549 = vsub.f32 1.0, %v548
    %v550 = vmul.f32 %v547, %v549
    %v551 = vadd.f32 %v547, %v550
    %vm552 = vweird.f32 %v546
    %vm553 = vweird.f32 %v547
    %vm554 = vmor %vm552, %vm553
    %v555 = vsel %vm554, %v547, %v551
    %v556 = vand.u32 2147483647, %v546
    %vm557 = vcmp.eq.f32.partialorder %v556, 8.507059e+37
    %v558 = vand.u32 %v546, 2147483648
    %v559 = vor.u32 1.1754944e-38, %v558
    %v560 = vsel %vm557, %v559, %v555
    %v561 = vmul.f32 1.0, %v560
    %v562 = vtanh.pop %v522
    %v563 = vxor.u32 %v523, 2147483648
    %v564 = vmul.f32 %v563, 1.442695
    %v565 = vpow.pop %v564
    %v566 = vadd.f32 %v565, 1.0
    %v567 = vrcp.pop %v566
    %v568 = vmul.f32 %v566, %v567
    %v569 = vsub.f32 1.0, %v568
    %v570 = vmul.f32 %v567, %v569
    %v571 = vadd.f32 %v567, %v570
    %vm572 = vweird.f32 %v566
    %vm573 = vweird.f32 %v567
    %vm574 = vmor %vm572, %vm573
    %v575 = vsel %vm574, %v567, %v571
    %v576 = vand.u32 2147483647, %v566
    %vm577 = vcmp.eq.f32.partialorder %v576, 8.507059e+37
    %v578 = vand.u32 %v566, 2147483648
    %v579 = vor.u32 1.1754944e-38, %v578
    %v580 = vsel %vm577, %v579, %v575
    %v581 = vmul.f32 1.0, %v580
    %v582 = vmul.f32 %v561, %v299
    %v583 = vmul.f32 %v542, %v562
    %v584 = vadd.f32 %v582, %v583
    %v585 = vtanh.pop %v584
    %v586 = vmul.f32 %v581, %v585
    %v587 = vpack.c.bf16 %v586, %v586
    %588 = vst [vmem:[%s5] sm:$0xf] %v587
    %s589 = smul.u32 1, 4
    %s590 = smul.addr %s589, 8
    %s591 = scalar_lea.vmem [#allocation4], %s590
    %v592 = vld [vmem:[%s591] sm:$0xff]
    %v593 = vld [vmem:[%s591 + $0x8] sm:$0xff]
    %v594 = vld [vmem:[%s591 + $0x10] sm:$0xff]
    %v595 = vld [vmem:[%s591 + $0x18] sm:$0xff]
    %596 = vmatpush.bf16.msra.mxu0 %v432
    %597 = vmatpush.bf16.msra.mxu0 %v428
    %598 = vmatpush.bf16.msra.mxu0 %v424
    %599 = vmatpush.bf16.msra.mxu0 %v420
    %600 = vmatpush.bf16.msra.mxu0 %v416
    %601 = vmatpush.bf16.msra.mxu0 %v412
    %602 = vmatpush.bf16.msra.mxu0 %v408
    %603 = vmatpush.bf16.msra.mxu0 %v404
    %604 = vmatmul.bf16.gmra.mxu0 %v587
    %v605 = vpop.f32.mrf.mxu0
    %v606 = vadd.f32 0.0, %v605
    %v607 = vpop.f32.mrf.mxu0
    %608 = vdwg.mxu0
    %609 = vmatpush.bf16.msra.mxu0 %v433
    %610 = vmatpush.bf16.msra.mxu0 %v429
    %611 = vmatpush.bf16.msra.mxu0 %v425
    %612 = vmatpush.bf16.msra.mxu0 %v421
    %613 = vmatpush.bf16.msra.mxu0 %v417
    %614 = vmatpush.bf16.msra.mxu0 %v413
    %615 = vmatpush.bf16.msra.mxu0 %v409
    %616 = vmatpush.bf16.msra.mxu0 %v405
    %617 = vmatmul.bf16.gmra.mxu0 %v587
    %v618 = vpop.f32.mrf.mxu0
    %v619 = vadd.f32 0.0, %v618
    %v620 = vpop.f32.mrf.mxu0
    %621 = vdwg.mxu0
    %622 = vmatpush.bf16.msra.mxu0 %v434
    %623 = vmatpush.bf16.msra.mxu0 %v430
    %624 = vmatpush.bf16.msra.mxu0 %v426
    %625 = vmatpush.bf16.msra.mxu0 %v422
    %626 = vmatpush.bf16.msra.mxu0 %v418
    %627 = vmatpush.bf16.msra.mxu0 %v414
    %628 = vmatpush.bf16.msra.mxu0 %v410
    %629 = vmatpush.bf16.msra.mxu0 %v406
    %630 = vmatmul.bf16.gmra.mxu0 %v587
    %v631 = vpop.f32.mrf.mxu0
    %v632 = vadd.f32 0.0, %v631
    %v633 = vpop.f32.mrf.mxu0
    %634 = vdwg.mxu0
    %635 = vmatpush.bf16.msra.mxu0 %v435
    %636 = vmatpush.bf16.msra.mxu0 %v431
    %637 = vmatpush.bf16.msra.mxu0 %v427
    %638 = vmatpush.bf16.msra.mxu0 %v423
    %639 = vmatpush.bf16.msra.mxu0 %v419
    %640 = vmatpush.bf16.msra.mxu0 %v415
    %641 = vmatpush.bf16.msra.mxu0 %v411
    %642 = vmatpush.bf16.msra.mxu0 %v407
    %643 = vmatmul.bf16.gmra.mxu0 %v587
    %v644 = vpop.f32.mrf.mxu0
    %v645 = vadd.f32 0.0, %v644
    %v646 = vpop.f32.mrf.mxu0
    %647 = vdwg.mxu0
    %v648 = vadd.f32 %v592, %v606
    %v649 = vadd.f32 %v593, %v619
    %v650 = vadd.f32 %v594, %v632
    %v651 = vadd.f32 %v595, %v645
    %v652 = vxor.u32 %v648, 2147483648
    %v653 = vmul.f32 %v652, 1.442695
    %v654 = vpow.pop %v653
    %v655 = vadd.f32 %v654, 1.0
    %v656 = vrcp.pop %v655
    %v657 = vmul.f32 %v655, %v656
    %v658 = vsub.f32 1.0, %v657
    %v659 = vmul.f32 %v656, %v658
    %v660 = vadd.f32 %v656, %v659
    %vm661 = vweird.f32 %v655
    %vm662 = vweird.f32 %v656
    %vm663 = vmor %vm661, %vm662
    %v664 = vsel %vm663, %v656, %v660
    %v665 = vand.u32 2147483647, %v655
    %vm666 = vcmp.eq.f32.partialorder %v665, 8.507059e+37
    %v667 = vand.u32 %v655, 2147483648
    %v668 = vor.u32 1.1754944e-38, %v667
    %v669 = vsel %vm666, %v668, %v664
    %v670 = vmul.f32 1.0, %v669
    %v671 = vxor.u32 %v649, 2147483648
    %v672 = vmul.f32 %v671, 1.442695
    %v673 = vpow.pop %v672
    %v674 = vadd.f32 %v673, 1.0
    %v675 = vrcp.pop %v674
    %v676 = vmul.f32 %v674, %v675
    %v677 = vsub.f32 1.0, %v676
    %v678 = vmul.f32 %v675, %v677
    %v679 = vadd.f32 %v675, %v678
    %vm680 = vweird.f32 %v674
    %vm681 = vweird.f32 %v675
    %vm682 = vmor %vm680, %vm681
    %v683 = vsel %vm682, %v675, %v679
    %v684 = vand.u32 2147483647, %v674
    %vm685 = vcmp.eq.f32.partialorder %v684, 8.507059e+37
    %v686 = vand.u32 %v674, 2147483648
    %v687 = vor.u32 1.1754944e-38, %v686
    %v688 = vsel %vm685, %v687, %v683
    %v689 = vmul.f32 1.0, %v688
    %v690 = vtanh.pop %v650
    %v691 = vxor.u32 %v651, 2147483648
    %v692 = vmul.f32 %v691, 1.442695
    %v693 = vpow.pop %v692
    %v694 = vadd.f32 %v693, 1.0
    %v695 = vrcp.pop %v694
    %v696 = vmul.f32 %v694, %v695
    %v697 = vsub.f32 1.0, %v696
    %v698 = vmul.f32 %v695, %v697
    %v699 = vadd.f32 %v695, %v698
    %vm700 = vweird.f32 %v694
    %vm701 = vweird.f32 %v695
    %vm702 = vmor %vm700, %vm701
    %v703 = vsel %vm702, %v695, %v699
    %v704 = vand.u32 2147483647, %v694
    %vm705 = vcmp.eq.f32.partialorder %v704, 8.507059e+37
    %v706 = vand.u32 %v694, 2147483648
    %v707 = vor.u32 1.1754944e-38, %v706
    %v708 = vsel %vm705, %v707, %v703
    %v709 = vmul.f32 1.0, %v708
    %v710 = vmul.f32 %v689, %v584
    %v711 = vmul.f32 %v670, %v690
    %v712 = vadd.f32 %v710, %v711
    %v713 = vtanh.pop %v712
    %v714 = vmul.f32 %v709, %v713
    %v715 = vpack.c.bf16 %v714, %v714
    %s716 = scalar_lea.vmem %s5, 4
    %717 = vst [vmem:[%s716] sm:$0xf] %v715
    %s718 = smul.u32 2, 4
    %s719 = smul.addr %s718, 8
    %s720 = scalar_lea.vmem [#allocation4], %s719
    %v721 = vld [vmem:[%s720] sm:$0xff]
    %v722 = vld [vmem:[%s720 + $0x8] sm:$0xff]
    %v723 = vld [vmem:[%s720 + $0x10] sm:$0xff]
    %v724 = vld [vmem:[%s720 + $0x18] sm:$0xff]
    %725 = vmatpush.bf16.msra.mxu0 %v432
    %726 = vmatpush.bf16.msra.mxu0 %v428
    %727 = vmatpush.bf16.msra.mxu0 %v424
    %728 = vmatpush.bf16.msra.mxu0 %v420
    %729 = vmatpush.bf16.msra.mxu0 %v416
    %730 = vmatpush.bf16.msra.mxu0 %v412
    %731 = vmatpush.bf16.msra.mxu0 %v408
    %732 = vmatpush.bf16.msra.mxu0 %v404
    %733 = vmatmul.bf16.gmra.mxu0 %v715
    %v734 = vpop.f32.mrf.mxu0
    %v735 = vadd.f32 0.0, %v734
    %v736 = vpop.f32.mrf.mxu0
    %737 = vdwg.mxu0
    %738 = vmatpush.bf16.msra.mxu0 %v433
    %739 = vmatpush.bf16.msra.mxu0 %v429
    %740 = vmatpush.bf16.msra.mxu0 %v425
    %741 = vmatpush.bf16.msra.mxu0 %v421
    %742 = vmatpush.bf16.msra.mxu0 %v417
    %743 = vmatpush.bf16.msra.mxu0 %v413
    %744 = vmatpush.bf16.msra.mxu0 %v409
    %745 = vmatpush.bf16.msra.mxu0 %v405
    %746 = vmatmul.bf16.gmra.mxu0 %v715
    %v747 = vpop.f32.mrf.mxu0
    %v748 = vadd.f32 0.0, %v747
    %v749 = vpop.f32.mrf.mxu0
    %750 = vdwg.mxu0
    %751 = vmatpush.bf16.msra.mxu0 %v434
    %752 = vmatpush.bf16.msra.mxu0 %v430
    %753 = vmatpush.bf16.msra.mxu0 %v426
    %754 = vmatpush.bf16.msra.mxu0 %v422
    %755 = vmatpush.bf16.msra.mxu0 %v418
    %756 = vmatpush.bf16.msra.mxu0 %v414
    %757 = vmatpush.bf16.msra.mxu0 %v410
    %758 = vmatpush.bf16.msra.mxu0 %v406
    %759 = vmatmul.bf16.gmra.mxu0 %v715
    %v760 = vpop.f32.mrf.mxu0
    %v761 = vadd.f32 0.0, %v760
    %v762 = vpop.f32.mrf.mxu0
    %763 = vdwg.mxu0
    %764 = vmatpush.bf16.msra.mxu0 %v435
    %765 = vmatpush.bf16.msra.mxu0 %v431
    %766 = vmatpush.bf16.msra.mxu0 %v427
    %767 = vmatpush.bf16.msra.mxu0 %v423
    %768 = vmatpush.bf16.msra.mxu0 %v419
    %769 = vmatpush.bf16.msra.mxu0 %v415
    %770 = vmatpush.bf16.msra.mxu0 %v411
    %771 = vmatpush.bf16.msra.mxu0 %v407
    %772 = vmatmul.bf16.gmra.mxu0 %v715
    %v773 = vpop.f32.mrf.mxu0
    %v774 = vadd.f32 0.0, %v773
    %v775 = vpop.f32.mrf.mxu0
    %776 = vdwg.mxu0
    %v777 = vadd.f32 %v721, %v735
    %v778 = vadd.f32 %v722, %v748
    %v779 = vadd.f32 %v723, %v761
    %v780 = vadd.f32 %v724, %v774
    %v781 = vxor.u32 %v777, 2147483648
    %v782 = vmul.f32 %v781, 1.442695
    %v783 = vpow.pop %v782
    %v784 = vadd.f32 %v783, 1.0
    %v785 = vrcp.pop %v784
    %v786 = vmul.f32 %v784, %v785
    %v787 = vsub.f32 1.0, %v786
    %v788 = vmul.f32 %v785, %v787
    %v789 = vadd.f32 %v785, %v788
    %vm790 = vweird.f32 %v784
    %vm791 = vweird.f32 %v785
    %vm792 = vmor %vm790, %vm791
    %v793 = vsel %vm792, %v785, %v789
    %v794 = vand.u32 2147483647, %v784
    %vm795 = vcmp.eq.f32.partialorder %v794, 8.507059e+37
    %v796 = vand.u32 %v784, 2147483648
    %v797 = vor.u32 1.1754944e-38, %v796
    %v798 = vsel %vm795, %v797, %v793
    %v799 = vmul.f32 1.0, %v798
    %v800 = vxor.u32 %v778, 2147483648
    %v801 = vmul.f32 %v800, 1.442695
    %v802 = vpow.pop %v801
    %v803 = vadd.f32 %v802, 1.0
    %v804 = vrcp.pop %v803
    %v805 = vmul.f32 %v803, %v804
    %v806 = vsub.f32 1.0, %v805
    %v807 = vmul.f32 %v804, %v806
    %v808 = vadd.f32 %v804, %v807
    %vm809 = vweird.f32 %v803
    %vm810 = vweird.f32 %v804
    %vm811 = vmor %vm809, %vm810
    %v812 = vsel %vm811, %v804, %v808
    %v813 = vand.u32 2147483647, %v803
    %vm814 = vcmp.eq.f32.partialorder %v813, 8.507059e+37
    %v815 = vand.u32 %v803, 2147483648
    %v816 = vor.u32 1.1754944e-38, %v815
    %v817 = vsel %vm814, %v816, %v812
    %v818 = vmul.f32 1.0, %v817
    %v819 = vtanh.pop %v779
    %v820 = vxor.u32 %v780, 2147483648
    %v821 = vmul.f32 %v820, 1.442695
    %v822 = vpow.pop %v821
    %v823 = vadd.f32 %v822, 1.0
    %v824 = vrcp.pop %v823
    %v825 = vmul.f32 %v823, %v824
    %v826 = vsub.f32 1.0, %v825
    %v827 = vmul.f32 %v824, %v826
    %v828 = vadd.f32 %v824, %v827
    %vm829 = vweird.f32 %v823
    %vm830 = vweird.f32 %v824
    %vm831 = vmor %vm829, %vm830
    %v832 = vsel %vm831, %v824, %v828
    %v833 = vand.u32 2147483647, %v823
    %vm834 = vcmp.eq.f32.partialorder %v833, 8.507059e+37
    %v835 = vand.u32 %v823, 2147483648
    %v836 = vor.u32 1.1754944e-38, %v835
    %v837 = vsel %vm834, %v836, %v832
    %v838 = vmul.f32 1.0, %v837
    %v839 = vmul.f32 %v818, %v712
    %v840 = vmul.f32 %v799, %v819
    %v841 = vadd.f32 %v839, %v840
    %v842 = vtanh.pop %v841
    %v843 = vmul.f32 %v838, %v842
    %v844 = vpack.c.bf16 %v843, %v843
    %s845 = scalar_lea.vmem %s5, 8
    %846 = vst [vmem:[%s845] sm:$0xf] %v844
    %s847 = smul.u32 3, 4
    %s848 = smul.addr %s847, 8
    %s849 = scalar_lea.vmem [#allocation4], %s848
    %v850 = vld [vmem:[%s849] sm:$0xff]
    %v851 = vld [vmem:[%s849 + $0x8] sm:$0xff]
    %v852 = vld [vmem:[%s849 + $0x10] sm:$0xff]
    %v853 = vld [vmem:[%s849 + $0x18] sm:$0xff]
    %854 = vmatpush.bf16.msra.mxu0 %v432
    %855 = vmatpush.bf16.msra.mxu0 %v428
    %856 = vmatpush.bf16.msra.mxu0 %v424
    %857 = vmatpush.bf16.msra.mxu0 %v420
    %858 = vmatpush.bf16.msra.mxu0 %v416
    %859 = vmatpush.bf16.msra.mxu0 %v412
    %860 = vmatpush.bf16.msra.mxu0 %v408
    %861 = vmatpush.bf16.msra.mxu0 %v404
    %862 = vmatmul.bf16.gmra.mxu0 %v844
    %v863 = vpop.f32.mrf.mxu0
    %v864 = vadd.f32 0.0, %v863
    %v865 = vpop.f32.mrf.mxu0
    %866 = vdwg.mxu0
    %867 = vmatpush.bf16.msra.mxu0 %v433
    %868 = vmatpush.bf16.msra.mxu0 %v429
    %869 = vmatpush.bf16.msra.mxu0 %v425
    %870 = vmatpush.bf16.msra.mxu0 %v421
    %871 = vmatpush.bf16.msra.mxu0 %v417
    %872 = vmatpush.bf16.msra.mxu0 %v413
    %873 = vmatpush.bf16.msra.mxu0 %v409
    %874 = vmatpush.bf16.msra.mxu0 %v405
    %875 = vmatmul.bf16.gmra.mxu0 %v844
    %v876 = vpop.f32.mrf.mxu0
    %v877 = vadd.f32 0.0, %v876
    %v878 = vpop.f32.mrf.mxu0
    %879 = vdwg.mxu0
    %880 = vmatpush.bf16.msra.mxu0 %v434
    %881 = vmatpush.bf16.msra.mxu0 %v430
    %882 = vmatpush.bf16.msra.mxu0 %v426
    %883 = vmatpush.bf16.msra.mxu0 %v422
    %884 = vmatpush.bf16.msra.mxu0 %v418
    %885 = vmatpush.bf16.msra.mxu0 %v414
    %886 = vmatpush.bf16.msra.mxu0 %v410
    %887 = vmatpush.bf16.msra.mxu0 %v406
    %888 = vmatmul.bf16.gmra.mxu0 %v844
    %v889 = vpop.f32.mrf.mxu0
    %v890 = vadd.f32 0.0, %v889
    %v891 = vpop.f32.mrf.mxu0
    %892 = vdwg.mxu0
    %893 = vmatpush.bf16.msra.mxu0 %v435
    %894 = vmatpush.bf16.msra.mxu0 %v431
    %895 = vmatpush.bf16.msra.mxu0 %v427
    %896 = vmatpush.bf16.msra.mxu0 %v423
    %897 = vmatpush.bf16.msra.mxu0 %v419
    %898 = vmatpush.bf16.msra.mxu0 %v415
    %899 = vmatpush.bf16.msra.mxu0 %v411
    %900 = vmatpush.bf16.msra.mxu0 %v407
    %901 = vmatmul.bf16.gmra.mxu0 %v844
    %v902 = vpop.f32.mrf.mxu0
    %v903 = vadd.f32 0.0, %v902
    %v904 = vpop.f32.mrf.mxu0
    %905 = vdwg.mxu0
    %v906 = vadd.f32 %v850, %v864
    %v907 = vadd.f32 %v851, %v877
    %v908 = vadd.f32 %v852, %v890
    %v909 = vadd.f32 %v853, %v903
    %v910 = vxor.u32 %v906, 2147483648
    %v911 = vmul.f32 %v910, 1.442695
    %v912 = vpow.pop %v911
    %v913 = vadd.f32 %v912, 1.0
    %v914 = vrcp.pop %v913
    %v915 = vmul.f32 %v913, %v914
    %v916 = vsub.f32 1.0, %v915
    %v917 = vmul.f32 %v914, %v916
    %v918 = vadd.f32 %v914, %v917
    %vm919 = vweird.f32 %v913
    %vm920 = vweird.f32 %v914
    %vm921 = vmor %vm919, %vm920
    %v922 = vsel %vm921, %v914, %v918
    %v923 = vand.u32 2147483647, %v913
    %vm924 = vcmp.eq.f32.partialorder %v923, 8.507059e+37
    %v925 = vand.u32 %v913, 2147483648
    %v926 = vor.u32 1.1754944e-38, %v925
    %v927 = vsel %vm924, %v926, %v922
    %v928 = vmul.f32 1.0, %v927
    %v929 = vxor.u32 %v907, 2147483648
    %v930 = vmul.f32 %v929, 1.442695
    %v931 = vpow.pop %v930
    %v932 = vadd.f32 %v931, 1.0
    %v933 = vrcp.pop %v932
    %v934 = vmul.f32 %v932, %v933
    %v935 = vsub.f32 1.0, %v934
    %v936 = vmul.f32 %v933, %v935
    %v937 = vadd.f32 %v933, %v936
    %vm938 = vweird.f32 %v932
    %vm939 = vweird.f32 %v933
    %vm940 = vmor %vm938, %vm939
    %v941 = vsel %vm940, %v933, %v937
    %v942 = vand.u32 2147483647, %v932
    %vm943 = vcmp.eq.f32.partialorder %v942, 8.507059e+37
    %v944 = vand.u32 %v932, 2147483648
    %v945 = vor.u32 1.1754944e-38, %v944
    %v946 = vsel %vm943, %v945, %v941
    %v947 = vmul.f32 1.0, %v946
    %v948 = vtanh.pop %v908
    %v949 = vxor.u32 %v909, 2147483648
    %v950 = vmul.f32 %v949, 1.442695
    %v951 = vpow.pop %v950
    %v952 = vadd.f32 %v951, 1.0
    %v953 = vrcp.pop %v952
    %v954 = vmul.f32 %v952, %v953
    %v955 = vsub.f32 1.0, %v954
    %v956 = vmul.f32 %v953, %v955
    %v957 = vadd.f32 %v953, %v956
    %vm958 = vweird.f32 %v952
    %vm959 = vweird.f32 %v953
    %vm960 = vmor %vm958, %vm959
    %v961 = vsel %vm960, %v953, %v957
    %v962 = vand.u32 2147483647, %v952
    %vm963 = vcmp.eq.f32.partialorder %v962, 8.507059e+37
    %v964 = vand.u32 %v952, 2147483648
    %v965 = vor.u32 1.1754944e-38, %v964
    %v966 = vsel %vm963, %v965, %v961
    %v967 = vmul.f32 1.0, %v966
    %v968 = vmul.f32 %v947, %v841
    %v969 = vmul.f32 %v928, %v948
    %v970 = vadd.f32 %v968, %v969
    %v971 = vtanh.pop %v970
    %v972 = vmul.f32 %v967, %v971
    %v973 = vpack.c.bf16 %v972, %v972
    %s974 = scalar_lea.vmem %s5, 12
    %975 = vst [vmem:[%s974] sm:$0xf] %v973
    %s976 = smul.u32 4, 4
    %s977 = smul.addr %s976, 8
    %s978 = scalar_lea.vmem [#allocation4], %s977
    %v979 = vld [vmem:[%s978] sm:$0xff]
    %v980 = vld [vmem:[%s978 + $0x8] sm:$0xff]
    %v981 = vld [vmem:[%s978 + $0x10] sm:$0xff]
    %v982 = vld [vmem:[%s978 + $0x18] sm:$0xff]
    %983 = vmatpush.bf16.msra.mxu0 %v432
    %984 = vmatpush.bf16.msra.mxu0 %v428
    %985 = vmatpush.bf16.msra.mxu0 %v424
    %986 = vmatpush.bf16.msra.mxu0 %v420
    %987 = vmatpush.bf16.msra.mxu0 %v416
    %988 = vmatpush.bf16.msra.mxu0 %v412
    %989 = vmatpush.bf16.msra.mxu0 %v408
    %990 = vmatpush.bf16.msra.mxu0 %v404
    %991 = vmatmul.bf16.gmra.mxu0 %v973
    %v992 = vpop.f32.mrf.mxu0
    %v993 = vadd.f32 0.0, %v992
    %v994 = vpop.f32.mrf.mxu0
    %995 = vdwg.mxu0
    %996 = vmatpush.bf16.msra.mxu0 %v433
    %997 = vmatpush.bf16.msra.mxu0 %v429
    %998 = vmatpush.bf16.msra.mxu0 %v425
    %999 = vmatpush.bf16.msra.mxu0 %v421
    %1000 = vmatpush.bf16.msra.mxu0 %v417
    %1001 = vmatpush.bf16.msra.mxu0 %v413
    %1002 = vmatpush.bf16.msra.mxu0 %v409
    %1003 = vmatpush.bf16.msra.mxu0 %v405
    %1004 = vmatmul.bf16.gmra.mxu0 %v973
    %v1005 = vpop.f32.mrf.mxu0
    %v1006 = vadd.f32 0.0, %v1005
    %v1007 = vpop.f32.mrf.mxu0
    %1008 = vdwg.mxu0
    %1009 = vmatpush.bf16.msra.mxu0 %v434
    %1010 = vmatpush.bf16.msra.mxu0 %v430
    %1011 = vmatpush.bf16.msra.mxu0 %v426
    %1012 = vmatpush.bf16.msra.mxu0 %v422
    %1013 = vmatpush.bf16.msra.mxu0 %v418
    %1014 = vmatpush.bf16.msra.mxu0 %v414
    %1015 = vmatpush.bf16.msra.mxu0 %v410
    %1016 = vmatpush.bf16.msra.mxu0 %v406
    %1017 = vmatmul.bf16.gmra.mxu0 %v973
    %v1018 = vpop.f32.mrf.mxu0
    %v1019 = vadd.f32 0.0, %v1018
    %v1020 = vpop.f32.mrf.mxu0
    %1021 = vdwg.mxu0
    %1022 = vmatpush.bf16.msra.mxu0 %v435
    %1023 = vmatpush.bf16.msra.mxu0 %v431
    %1024 = vmatpush.bf16.msra.mxu0 %v427
    %1025 = vmatpush.bf16.msra.mxu0 %v423
    %1026 = vmatpush.bf16.msra.mxu0 %v419
    %1027 = vmatpush.bf16.msra.mxu0 %v415
    %1028 = vmatpush.bf16.msra.mxu0 %v411
    %1029 = vmatpush.bf16.msra.mxu0 %v407
    %1030 = vmatmul.bf16.gmra.mxu0 %v973
    %v1031 = vpop.f32.mrf.mxu0
    %v1032 = vadd.f32 0.0, %v1031
    %v1033 = vpop.f32.mrf.mxu0
    %1034 = vdwg.mxu0
    %v1035 = vadd.f32 %v979, %v993
    %v1036 = vadd.f32 %v980, %v1006
    %v1037 = vadd.f32 %v981, %v1019
    %v1038 = vadd.f32 %v982, %v1032
    %v1039 = vxor.u32 %v1035, 2147483648
    %v1040 = vmul.f32 %v1039, 1.442695
    %v1041 = vpow.pop %v1040
    %v1042 = vadd.f32 %v1041, 1.0
    %v1043 = vrcp.pop %v1042
    %v1044 = vmul.f32 %v1042, %v1043
    %v1045 = vsub.f32 1.0, %v1044
    %v1046 = vmul.f32 %v1043, %v1045
    %v1047 = vadd.f32 %v1043, %v1046
    %vm1048 = vweird.f32 %v1042
    %vm1049 = vweird.f32 %v1043
    %vm1050 = vmor %vm1048, %vm1049
    %v1051 = vsel %vm1050, %v1043, %v1047
    %v1052 = vand.u32 2147483647, %v1042
    %vm1053 = vcmp.eq.f32.partialorder %v1052, 8.507059e+37
    %v1054 = vand.u32 %v1042, 2147483648
    %v1055 = vor.u32 1.1754944e-38, %v1054
    %v1056 = vsel %vm1053, %v1055, %v1051
    %v1057 = vmul.f32 1.0, %v1056
    %v1058 = vxor.u32 %v1036, 2147483648
    %v1059 = vmul.f32 %v1058, 1.442695
    %v1060 = vpow.pop %v1059
    %v1061 = vadd.f32 %v1060, 1.0
    %v1062 = vrcp.pop %v1061
    %v1063 = vmul.f32 %v1061, %v1062
    %v1064 = vsub.f32 1.0, %v1063
    %v1065 = vmul.f32 %v1062, %v1064
    %v1066 = vadd.f32 %v1062, %v1065
    %vm1067 = vweird.f32 %v1061
    %vm1068 = vweird.f32 %v1062
    %vm1069 = vmor %vm1067, %vm1068
    %v1070 = vsel %vm1069, %v1062, %v1066
    %v1071 = vand.u32 2147483647, %v1061
    %vm1072 = vcmp.eq.f32.partialorder %v1071, 8.507059e+37
    %v1073 = vand.u32 %v1061, 2147483648
    %v1074 = vor.u32 1.1754944e-38, %v1073
    %v1075 = vsel %vm1072, %v1074, %v1070
    %v1076 = vmul.f32 1.0, %v1075
    %v1077 = vtanh.pop %v1037
    %v1078 = vxor.u32 %v1038, 2147483648
    %v1079 = vmul.f32 %v1078, 1.442695
    %v1080 = vpow.pop %v1079
    %v1081 = vadd.f32 %v1080, 1.0
    %v1082 = vrcp.pop %v1081
    %v1083 = vmul.f32 %v1081, %v1082
    %v1084 = vsub.f32 1.0, %v1083
    %v1085 = vmul.f32 %v1082, %v1084
    %v1086 = vadd.f32 %v1082, %v1085
    %vm1087 = vweird.f32 %v1081
    %vm1088 = vweird.f32 %v1082
    %vm1089 = vmor %vm1087, %vm1088
    %v1090 = vsel %vm1089, %v1082, %v1086
    %v1091 = vand.u32 2147483647, %v1081
    %vm1092 = vcmp.eq.f32.partialorder %v1091, 8.507059e+37
    %v1093 = vand.u32 %v1081, 2147483648
    %v1094 = vor.u32 1.1754944e-38, %v1093
    %v1095 = vsel %vm1092, %v1094, %v1090
    %v1096 = vmul.f32 1.0, %v1095
    %v1097 = vmul.f32 %v1076, %v970
    %v1098 = vmul.f32 %v1057, %v1077
    %v1099 = vadd.f32 %v1097, %v1098
    %v1100 = vtanh.pop %v1099
    %v1101 = vmul.f32 %v1096, %v1100
    %v1102 = vpack.c.bf16 %v1101, %v1101
    %s1103 = scalar_lea.vmem %s5, 16
    %1104 = vst [vmem:[%s1103] sm:$0xf] %v1102
    %s1105 = smul.u32 5, 4
    %s1106 = smul.addr %s1105, 8
    %s1107 = scalar_lea.vmem [#allocation4], %s1106
    %v1108 = vld [vmem:[%s1107] sm:$0xff]
    %v1109 = vld [vmem:[%s1107 + $0x8] sm:$0xff]
    %v1110 = vld [vmem:[%s1107 + $0x10] sm:$0xff]
    %v1111 = vld [vmem:[%s1107 + $0x18] sm:$0xff]
    %1112 = vmatpush.bf16.msra.mxu0 %v432
    %1113 = vmatpush.bf16.msra.mxu0 %v428
    %1114 = vmatpush.bf16.msra.mxu0 %v424
    %1115 = vmatpush.bf16.msra.mxu0 %v420
    %1116 = vmatpush.bf16.msra.mxu0 %v416
    %1117 = vmatpush.bf16.msra.mxu0 %v412
    %1118 = vmatpush.bf16.msra.mxu0 %v408
    %1119 = vmatpush.bf16.msra.mxu0 %v404
    %1120 = vmatmul.bf16.gmra.mxu0 %v1102
    %v1121 = vpop.f32.mrf.mxu0
    %v1122 = vadd.f32 0.0, %v1121
    %v1123 = vpop.f32.mrf.mxu0
    %1124 = vdwg.mxu0
    %1125 = vmatpush.bf16.msra.mxu0 %v433
    %1126 = vmatpush.bf16.msra.mxu0 %v429
    %1127 = vmatpush.bf16.msra.mxu0 %v425
    %1128 = vmatpush.bf16.msra.mxu0 %v421
    %1129 = vmatpush.bf16.msra.mxu0 %v417
    %1130 = vmatpush.bf16.msra.mxu0 %v413
    %1131 = vmatpush.bf16.msra.mxu0 %v409
    %1132 = vmatpush.bf16.msra.mxu0 %v405
    %1133 = vmatmul.bf16.gmra.mxu0 %v1102
    %v1134 = vpop.f32.mrf.mxu0
    %v1135 = vadd.f32 0.0, %v1134
    %v1136 = vpop.f32.mrf.mxu0
    %1137 = vdwg.mxu0
    %1138 = vmatpush.bf16.msra.mxu0 %v434
    %1139 = vmatpush.bf16.msra.mxu0 %v430
    %1140 = vmatpush.bf16.msra.mxu0 %v426
    %1141 = vmatpush.bf16.msra.mxu0 %v422
    %1142 = vmatpush.bf16.msra.mxu0 %v418
    %1143 = vmatpush.bf16.msra.mxu0 %v414
    %1144 = vmatpush.bf16.msra.mxu0 %v410
    %1145 = vmatpush.bf16.msra.mxu0 %v406
    %1146 = vmatmul.bf16.gmra.mxu0 %v1102
    %v1147 = vpop.f32.mrf.mxu0
    %v1148 = vadd.f32 0.0, %v1147
    %v1149 = vpop.f32.mrf.mxu0
    %1150 = vdwg.mxu0
    %1151 = vmatpush.bf16.msra.mxu0 %v435
    %1152 = vmatpush.bf16.msra.mxu0 %v431
    %1153 = vmatpush.bf16.msra.mxu0 %v427
    %1154 = vmatpush.bf16.msra.mxu0 %v423
    %1155 = vmatpush.bf16.msra.mxu0 %v419
    %1156 = vmatpush.bf16.msra.mxu0 %v415
    %1157 = vmatpush.bf16.msra.mxu0 %v411
    %1158 = vmatpush.bf16.msra.mxu0 %v407
    %1159 = vmatmul.bf16.gmra.mxu0 %v1102
    %v1160 = vpop.f32.mrf.mxu0
    %v1161 = vadd.f32 0.0, %v1160
    %v1162 = vpop.f32.mrf.mxu0
    %1163 = vdwg.mxu0
    %v1164 = vadd.f32 %v1108, %v1122
    %v1165 = vadd.f32 %v1109, %v1135
    %v1166 = vadd.f32 %v1110, %v1148
    %v1167 = vadd.f32 %v1111, %v1161
    %v1168 = vxor.u32 %v1164, 2147483648
    %v1169 = vmul.f32 %v1168, 1.442695
    %v1170 = vpow.pop %v1169
    %v1171 = vadd.f32 %v1170, 1.0
    %v1172 = vrcp.pop %v1171
    %v1173 = vmul.f32 %v1171, %v1172
    %v1174 = vsub.f32 1.0, %v1173
    %v1175 = vmul.f32 %v1172, %v1174
    %v1176 = vadd.f32 %v1172, %v1175
    %vm1177 = vweird.f32 %v1171
    %vm1178 = vweird.f32 %v1172
    %vm1179 = vmor %vm1177, %vm1178
    %v1180 = vsel %vm1179, %v1172, %v1176
    %v1181 = vand.u32 2147483647, %v1171
    %vm1182 = vcmp.eq.f32.partialorder %v1181, 8.507059e+37
    %v1183 = vand.u32 %v1171, 2147483648
    %v1184 = vor.u32 1.1754944e-38, %v1183
    %v1185 = vsel %vm1182, %v1184, %v1180
    %v1186 = vmul.f32 1.0, %v1185
    %v1187 = vxor.u32 %v1165, 2147483648
    %v1188 = vmul.f32 %v1187, 1.442695
    %v1189 = vpow.pop %v1188
    %v1190 = vadd.f32 %v1189, 1.0
    %v1191 = vrcp.pop %v1190
    %v1192 = vmul.f32 %v1190, %v1191
    %v1193 = vsub.f32 1.0, %v1192
    %v1194 = vmul.f32 %v1191, %v1193
    %v1195 = vadd.f32 %v1191, %v1194
    %vm1196 = vweird.f32 %v1190
    %vm1197 = vweird.f32 %v1191
    %vm1198 = vmor %vm1196, %vm1197
    %v1199 = vsel %vm1198, %v1191, %v1195
    %v1200 = vand.u32 2147483647, %v1190
    %vm1201 = vcmp.eq.f32.partialorder %v1200, 8.507059e+37
    %v1202 = vand.u32 %v1190, 2147483648
    %v1203 = vor.u32 1.1754944e-38, %v1202
    %v1204 = vsel %vm1201, %v1203, %v1199
    %v1205 = vmul.f32 1.0, %v1204
    %v1206 = vtanh.pop %v1166
    %v1207 = vxor.u32 %v1167, 2147483648
    %v1208 = vmul.f32 %v1207, 1.442695
    %v1209 = vpow.pop %v1208
    %v1210 = vadd.f32 %v1209, 1.0
    %v1211 = vrcp.pop %v1210
    %v1212 = vmul.f32 %v1210, %v1211
    %v1213 = vsub.f32 1.0, %v1212
    %v1214 = vmul.f32 %v1211, %v1213
    %v1215 = vadd.f32 %v1211, %v1214
    %vm1216 = vweird.f32 %v1210
    %vm1217 = vweird.f32 %v1211
    %vm1218 = vmor %vm1216, %vm1217
    %v1219 = vsel %vm1218, %v1211, %v1215
    %v1220 = vand.u32 2147483647, %v1210
    %vm1221 = vcmp.eq.f32.partialorder %v1220, 8.507059e+37
    %v1222 = vand.u32 %v1210, 2147483648
    %v1223 = vor.u32 1.1754944e-38, %v1222
    %v1224 = vsel %vm1221, %v1223, %v1219
    %v1225 = vmul.f32 1.0, %v1224
    %v1226 = vmul.f32 %v1205, %v1099
    %v1227 = vmul.f32 %v1186, %v1206
    %v1228 = vadd.f32 %v1226, %v1227
    %v1229 = vtanh.pop %v1228
    %v1230 = vmul.f32 %v1225, %v1229
    %v1231 = vpack.c.bf16 %v1230, %v1230
    %s1232 = scalar_lea.vmem %s5, 20
    %1233 = vst [vmem:[%s1232] sm:$0xf] %v1231
    %s1234 = smul.u32 6, 4
    %s1235 = smul.addr %s1234, 8
    %s1236 = scalar_lea.vmem [#allocation4], %s1235
    %v1237 = vld [vmem:[%s1236] sm:$0xff]
    %v1238 = vld [vmem:[%s1236 + $0x8] sm:$0xff]
    %v1239 = vld [vmem:[%s1236 + $0x10] sm:$0xff]
    %v1240 = vld [vmem:[%s1236 + $0x18] sm:$0xff]
    %1241 = vmatpush.bf16.msra.mxu0 %v432
    %1242 = vmatpush.bf16.msra.mxu0 %v428
    %1243 = vmatpush.bf16.msra.mxu0 %v424
    %1244 = vmatpush.bf16.msra.mxu0 %v420
    %1245 = vmatpush.bf16.msra.mxu0 %v416
    %1246 = vmatpush.bf16.msra.mxu0 %v412
    %1247 = vmatpush.bf16.msra.mxu0 %v408
    %1248 = vmatpush.bf16.msra.mxu0 %v404
    %1249 = vmatmul.bf16.gmra.mxu0 %v1231
    %v1250 = vpop.f32.mrf.mxu0
    %v1251 = vadd.f32 0.0, %v1250
    %v1252 = vpop.f32.mrf.mxu0
    %1253 = vdwg.mxu0
    %1254 = vmatpush.bf16.msra.mxu0 %v433
    %1255 = vmatpush.bf16.msra.mxu0 %v429
    %1256 = vmatpush.bf16.msra.mxu0 %v425
    %1257 = vmatpush.bf16.msra.mxu0 %v421
    %1258 = vmatpush.bf16.msra.mxu0 %v417
    %1259 = vmatpush.bf16.msra.mxu0 %v413
    %1260 = vmatpush.bf16.msra.mxu0 %v409
    %1261 = vmatpush.bf16.msra.mxu0 %v405
    %1262 = vmatmul.bf16.gmra.mxu0 %v1231
    %v1263 = vpop.f32.mrf.mxu0
    %v1264 = vadd.f32 0.0, %v1263
    %v1265 = vpop.f32.mrf.mxu0
    %1266 = vdwg.mxu0
    %1267 = vmatpush.bf16.msra.mxu0 %v434
    %1268 = vmatpush.bf16.msra.mxu0 %v430
    %1269 = vmatpush.bf16.msra.mxu0 %v426
    %1270 = vmatpush.bf16.msra.mxu0 %v422
    %1271 = vmatpush.bf16.msra.mxu0 %v418
    %1272 = vmatpush.bf16.msra.mxu0 %v414
    %1273 = vmatpush.bf16.msra.mxu0 %v410
    %1274 = vmatpush.bf16.msra.mxu0 %v406
    %1275 = vmatmul.bf16.gmra.mxu0 %v1231
    %v1276 = vpop.f32.mrf.mxu0
    %v1277 = vadd.f32 0.0, %v1276
    %v1278 = vpop.f32.mrf.mxu0
    %1279 = vdwg.mxu0
    %1280 = vmatpush.bf16.msra.mxu0 %v435
    %1281 = vmatpush.bf16.msra.mxu0 %v431
    %1282 = vmatpush.bf16.msra.mxu0 %v427
    %1283 = vmatpush.bf16.msra.mxu0 %v423
    %1284 = vmatpush.bf16.msra.mxu0 %v419
    %1285 = vmatpush.bf16.msra.mxu0 %v415
    %1286 = vmatpush.bf16.msra.mxu0 %v411
    %1287 = vmatpush.bf16.msra.mxu0 %v407
    %1288 = vmatmul.bf16.gmra.mxu0 %v1231
    %v1289 = vpop.f32.mrf.mxu0
    %v1290 = vadd.f32 0.0, %v1289
    %v1291 = vpop.f32.mrf.mxu0
    %1292 = vdwg.mxu0
    %v1293 = vadd.f32 %v1237, %v1251
    %v1294 = vadd.f32 %v1238, %v1264
    %v1295 = vadd.f32 %v1239, %v1277
    %v1296 = vadd.f32 %v1240, %v1290
    %v1297 = vxor.u32 %v1293, 2147483648
    %v1298 = vmul.f32 %v1297, 1.442695
    %v1299 = vpow.pop %v1298
    %v1300 = vadd.f32 %v1299, 1.0
    %v1301 = vrcp.pop %v1300
    %v1302 = vmul.f32 %v1300, %v1301
    %v1303 = vsub.f32 1.0, %v1302
    %v1304 = vmul.f32 %v1301, %v1303
    %v1305 = vadd.f32 %v1301, %v1304
    %vm1306 = vweird.f32 %v1300
    %vm1307 = vweird.f32 %v1301
    %vm1308 = vmor %vm1306, %vm1307
    %v1309 = vsel %vm1308, %v1301, %v1305
    %v1310 = vand.u32 2147483647, %v1300
    %vm1311 = vcmp.eq.f32.partialorder %v1310, 8.507059e+37
    %v1312 = vand.u32 %v1300, 2147483648
    %v1313 = vor.u32 1.1754944e-38, %v1312
    %v1314 = vsel %vm1311, %v1313, %v1309
    %v1315 = vmul.f32 1.0, %v1314
    %v1316 = vxor.u32 %v1294, 2147483648
    %v1317 = vmul.f32 %v1316, 1.442695
    %v1318 = vpow.pop %v1317
    %v1319 = vadd.f32 %v1318, 1.0
    %v1320 = vrcp.pop %v1319
    %v1321 = vmul.f32 %v1319, %v1320
    %v1322 = vsub.f32 1.0, %v1321
    %v1323 = vmul.f32 %v1320, %v1322
    %v1324 = vadd.f32 %v1320, %v1323
    %vm1325 = vweird.f32 %v1319
    %vm1326 = vweird.f32 %v1320
    %vm1327 = vmor %vm1325, %vm1326
    %v1328 = vsel %vm1327, %v1320, %v1324
    %v1329 = vand.u32 2147483647, %v1319
    %vm1330 = vcmp.eq.f32.partialorder %v1329, 8.507059e+37
    %v1331 = vand.u32 %v1319, 2147483648
    %v1332 = vor.u32 1.1754944e-38, %v1331
    %v1333 = vsel %vm1330, %v1332, %v1328
    %v1334 = vmul.f32 1.0, %v1333
    %v1335 = vtanh.pop %v1295
    %v1336 = vxor.u32 %v1296, 2147483648
    %v1337 = vmul.f32 %v1336, 1.442695
    %v1338 = vpow.pop %v1337
    %v1339 = vadd.f32 %v1338, 1.0
    %v1340 = vrcp.pop %v1339
    %v1341 = vmul.f32 %v1339, %v1340
    %v1342 = vsub.f32 1.0, %v1341
    %v1343 = vmul.f32 %v1340, %v1342
    %v1344 = vadd.f32 %v1340, %v1343
    %vm1345 = vweird.f32 %v1339
    %vm1346 = vweird.f32 %v1340
    %vm1347 = vmor %vm1345, %vm1346
    %v1348 = vsel %vm1347, %v1340, %v1344
    %v1349 = vand.u32 2147483647, %v1339
    %vm1350 = vcmp.eq.f32.partialorder %v1349, 8.507059e+37
    %v1351 = vand.u32 %v1339, 2147483648
    %v1352 = vor.u32 1.1754944e-38, %v1351
    %v1353 = vsel %vm1350, %v1352, %v1348
    %v1354 = vmul.f32 1.0, %v1353
    %v1355 = vmul.f32 %v1334, %v1228
    %v1356 = vmul.f32 %v1315, %v1335
    %v1357 = vadd.f32 %v1355, %v1356
    %v1358 = vtanh.pop %v1357
    %v1359 = vmul.f32 %v1354, %v1358
    %v1360 = vpack.c.bf16 %v1359, %v1359
    %s1361 = scalar_lea.vmem %s5, 24
    %1362 = vst [vmem:[%s1361] sm:$0xf] %v1360
    %s1363 = smul.u32 7, 4
    %s1364 = smul.addr %s1363, 8
    %s1365 = scalar_lea.vmem [#allocation4], %s1364
    %v1366 = vld [vmem:[%s1365] sm:$0xff]
    %v1367 = vld [vmem:[%s1365 + $0x8] sm:$0xff]
    %v1368 = vld [vmem:[%s1365 + $0x10] sm:$0xff]
    %v1369 = vld [vmem:[%s1365 + $0x18] sm:$0xff]
    %1370 = vmatpush.bf16.msra.mxu0 %v432
    %1371 = vmatpush.bf16.msra.mxu0 %v428
    %1372 = vmatpush.bf16.msra.mxu0 %v424
    %1373 = vmatpush.bf16.msra.mxu0 %v420
    %1374 = vmatpush.bf16.msra.mxu0 %v416
    %1375 = vmatpush.bf16.msra.mxu0 %v412
    %1376 = vmatpush.bf16.msra.mxu0 %v408
    %1377 = vmatpush.bf16.msra.mxu0 %v404
    %1378 = vmatmul.bf16.gmra.mxu0 %v1360
    %v1379 = vpop.f32.mrf.mxu0
    %v1380 = vadd.f32 0.0, %v1379
    %v1381 = vpop.f32.mrf.mxu0
    %1382 = vdwg.mxu0
    %1383 = vmatpush.bf16.msra.mxu0 %v433
    %1384 = vmatpush.bf16.msra.mxu0 %v429
    %1385 = vmatpush.bf16.msra.mxu0 %v425
    %1386 = vmatpush.bf16.msra.mxu0 %v421
    %1387 = vmatpush.bf16.msra.mxu0 %v417
    %1388 = vmatpush.bf16.msra.mxu0 %v413
    %1389 = vmatpush.bf16.msra.mxu0 %v409
    %1390 = vmatpush.bf16.msra.mxu0 %v405
    %1391 = vmatmul.bf16.gmra.mxu0 %v1360
    %v1392 = vpop.f32.mrf.mxu0
    %v1393 = vadd.f32 0.0, %v1392
    %v1394 = vpop.f32.mrf.mxu0
    %1395 = vdwg.mxu0
    %1396 = vmatpush.bf16.msra.mxu0 %v434
    %1397 = vmatpush.bf16.msra.mxu0 %v430
    %1398 = vmatpush.bf16.msra.mxu0 %v426
    %1399 = vmatpush.bf16.msra.mxu0 %v422
    %1400 = vmatpush.bf16.msra.mxu0 %v418
    %1401 = vmatpush.bf16.msra.mxu0 %v414
    %1402 = vmatpush.bf16.msra.mxu0 %v410
    %1403 = vmatpush.bf16.msra.mxu0 %v406
    %1404 = vmatmul.bf16.gmra.mxu0 %v1360
    %v1405 = vpop.f32.mrf.mxu0
    %v1406 = vadd.f32 0.0, %v1405
    %v1407 = vpop.f32.mrf.mxu0
    %1408 = vdwg.mxu0
    %1409 = vmatpush.bf16.msra.mxu0 %v435
    %1410 = vmatpush.bf16.msra.mxu0 %v431
    %1411 = vmatpush.bf16.msra.mxu0 %v427
    %1412 = vmatpush.bf16.msra.mxu0 %v423
    %1413 = vmatpush.bf16.msra.mxu0 %v419
    %1414 = vmatpush.bf16.msra.mxu0 %v415
    %1415 = vmatpush.bf16.msra.mxu0 %v411
    %1416 = vmatpush.bf16.msra.mxu0 %v407
    %1417 = vmatmul.bf16.gmra.mxu0 %v1360
    %v1418 = vpop.f32.mrf.mxu0
    %v1419 = vadd.f32 0.0, %v1418
    %v1420 = vpop.f32.mrf.mxu0
    %1421 = vdwg.mxu0
    %v1422 = vadd.f32 %v1366, %v1380
    %v1423 = vadd.f32 %v1367, %v1393
    %v1424 = vadd.f32 %v1368, %v1406
    %v1425 = vadd.f32 %v1369, %v1419
    %v1426 = vxor.u32 %v1422, 2147483648
    %v1427 = vmul.f32 %v1426, 1.442695
    %v1428 = vpow.pop %v1427
    %v1429 = vadd.f32 %v1428, 1.0
    %v1430 = vrcp.pop %v1429
    %v1431 = vmul.f32 %v1429, %v1430
    %v1432 = vsub.f32 1.0, %v1431
    %v1433 = vmul.f32 %v1430, %v1432
    %v1434 = vadd.f32 %v1430, %v1433
    %vm1435 = vweird.f32 %v1429
    %vm1436 = vweird.f32 %v1430
    %vm1437 = vmor %vm1435, %vm1436
    %v1438 = vsel %vm1437, %v1430, %v1434
    %v1439 = vand.u32 2147483647, %v1429
    %vm1440 = vcmp.eq.f32.partialorder %v1439, 8.507059e+37
    %v1441 = vand.u32 %v1429, 2147483648
    %v1442 = vor.u32 1.1754944e-38, %v1441
    %v1443 = vsel %vm1440, %v1442, %v1438
    %v1444 = vmul.f32 1.0, %v1443
    %v1445 = vxor.u32 %v1423, 2147483648
    %v1446 = vmul.f32 %v1445, 1.442695
    %v1447 = vpow.pop %v1446
    %v1448 = vadd.f32 %v1447, 1.0
    %v1449 = vrcp.pop %v1448
    %v1450 = vmul.f32 %v1448, %v1449
    %v1451 = vsub.f32 1.0, %v1450
    %v1452 = vmul.f32 %v1449, %v1451
    %v1453 = vadd.f32 %v1449, %v1452
    %vm1454 = vweird.f32 %v1448
    %vm1455 = vweird.f32 %v1449
    %vm1456 = vmor %vm1454, %vm1455
    %v1457 = vsel %vm1456, %v1449, %v1453
    %v1458 = vand.u32 2147483647, %v1448
    %vm1459 = vcmp.eq.f32.partialorder %v1458, 8.507059e+37
    %v1460 = vand.u32 %v1448, 2147483648
    %v1461 = vor.u32 1.1754944e-38, %v1460
    %v1462 = vsel %vm1459, %v1461, %v1457
    %v1463 = vmul.f32 1.0, %v1462
    %v1464 = vtanh.pop %v1424
    %v1465 = vxor.u32 %v1425, 2147483648
    %v1466 = vmul.f32 %v1465, 1.442695
    %v1467 = vpow.pop %v1466
    %v1468 = vadd.f32 %v1467, 1.0
    %v1469 = vrcp.pop %v1468
    %v1470 = vmul.f32 %v1468, %v1469
    %v1471 = vsub.f32 1.0, %v1470
    %v1472 = vmul.f32 %v1469, %v1471
    %v1473 = vadd.f32 %v1469, %v1472
    %vm1474 = vweird.f32 %v1468
    %vm1475 = vweird.f32 %v1469
    %vm1476 = vmor %vm1474, %vm1475
    %v1477 = vsel %vm1476, %v1469, %v1473
    %v1478 = vand.u32 2147483647, %v1468
    %vm1479 = vcmp.eq.f32.partialorder %v1478, 8.507059e+37
    %v1480 = vand.u32 %v1468, 2147483648
    %v1481 = vor.u32 1.1754944e-38, %v1480
    %v1482 = vsel %vm1479, %v1481, %v1477
    %v1483 = vmul.f32 1.0, %v1482
    %v1484 = vmul.f32 %v1463, %v1357
    %v1485 = vmul.f32 %v1444, %v1464
    %v1486 = vadd.f32 %v1484, %v1485
    %v1487 = vtanh.pop %v1486
    %v1488 = vmul.f32 %v1483, %v1487
    %v1489 = vpack.c.bf16 %v1488, %v1488
    %s1490 = scalar_lea.vmem %s5, 28
    %1491 = vst [vmem:[%s1490] sm:$0xf] %v1489
    %1492 = vst [vmem:[#allocation2] sm:$0xff] %v1488
    %1493 = vst [vmem:[#allocation3] sm:$0xff] %v1486
    // Predicated region
    $region30: #{encoder_rnn_forward.2} parent=1 // pred_check
      _
    $region31: #{encoder_rnn_forward.2} parent=1 // pred_check_branch
      %1495 = sbr.rel (0) target = $region33
    $region32: #{encoder_rnn_forward.2} parent=1 // pred_region
      _
    $region33: #{encoder_rnn_forward.2} parent=1 // pred_fallthru
      _
    // Predicated region
    $region34: #{encoder_rnn_forward.2} parent=1 // pred_check
      _
    $region35: #{encoder_rnn_forward.2} parent=1 // pred_check_branch
      %1497 = sbr.rel (0) target = $region37
    $region36: #{encoder_rnn_forward.2} parent=1 // pred_region
      _
    $region37: #{encoder_rnn_forward.2} parent=1 // pred_fallthru
      _
    %1498 = vsyncpa [#allocation6], 1

// kernel: encoder_rnn_forward.3
$region0: #{encoder_rnn_forward.3}
  #allocation0 [shape = 'u32[]', space=smem, size = 0x4, offset = 0x4, fixed_abs, tag = 'smem constant byte address 0x4 - core index']
  #allocation1 [shape = 'u32[72,128]{1,0:T(1,128)}', space=vmem, size = 0x9000, scoped, tag = 'internal scratch']
  #allocation2 [shape = 'f32[8,128]{1,0:T(8,128)}', space=vmem, size = 0x1000, scoped, tag = 'scratch operand']
  #allocation3 [shape = 'f32[8,128]{1,0:T(8,128)}', space=vmem, size = 0x1000, scoped, tag = 'scratch operand']
  #allocation4 [shape = 'f32[64,512]{1,0:T(8,128)}', space=vmem, size = 0x20000, scoped, tag = 'scratch operand']
  %s0 = inlined_call_operand.vmem [shape: s32[8,1], index: 0, kind: input, shape index: {}]
  %s1 = inlined_call_operand.vmem [shape: bf16[8,8,128], index: 1, kind: input, shape index: {}]
  %s2 = inlined_call_operand.hbm [shape: bf16[128,512], index: 2, kind: input, shape index: {}]
  %s3 = inlined_call_operand.hbm [shape: bf16[128,512], index: 3, kind: input, shape index: {}]
  %s4 = inlined_call_operand.vmem [shape: f32[1,512], index: 4, kind: input, shape index: {}]
  %s5 = inlined_call_operand.vmem [shape: f32[8,8,128], index: 5, kind: output, shape index: {}]
  %s6 = sld [smem:[#allocation0]]
  $region42: #{encoder_rnn_forward.3} parent=0
    _
  %s8 = ssub.s32 1, %s6
  %s9 = scalar_select 0, %s8, %s6
  $region1: #{encoder_rnn_forward.3} parent=0
    #allocation5 [shape = 'u8[131072]{0}', space=vmem, size = 0x20000, scoped, tag = 'input window, operand 2, single buffered']
    #allocation6 [shape = 's32[1]{0}', space=sflag, size = 0x4, scoped, tag = 'scoped memory for encoder_rnn_forward.3']
    #allocation7 [shape = 'u8[131072]{0}', space=vmem, size = 0x20000, scoped, tag = 'input window, operand 3, single buffered']
    #allocation8 [shape = 's32[1]{0}', space=sflag, size = 0x4, scoped, tag = 'scoped memory for encoder_rnn_forward.3']
    %10 = vsyncpa [#allocation6], 0
    %11 = vsyncpa [#allocation8], 0
    // Predicated region
    $region2: #{encoder_rnn_forward.3} parent=1 // pred_check
      _
    $region3: #{encoder_rnn_forward.3} parent=1 // pred_check_branch
      %13 = sbr.rel (0) target = $region5
    $region4: #{encoder_rnn_forward.3} parent=1 // pred_region
      _
    $region5: #{encoder_rnn_forward.3} parent=1 // pred_fallthru
      _
    // Predicated region
    $region6: #{encoder_rnn_forward.3} parent=1 // pred_check
      _
    $region7: #{encoder_rnn_forward.3} parent=1 // pred_check_branch
      %15 = sbr.rel (0) target = $region9
    $region8: #{encoder_rnn_forward.3} parent=1 // pred_region
      _
    $region9: #{encoder_rnn_forward.3} parent=1 // pred_fallthru
      _
    // Predicated region
    $region10: #{encoder_rnn_forward.3} parent=1 // pred_check
      _
    $region11: #{encoder_rnn_forward.3} parent=1 // pred_check_branch
      %17 = sbr.rel (0) target = $region13
    $region12: #{encoder_rnn_forward.3} parent=1 // pred_region
      %19 = vsyncadd [#allocation6], 0
      %s20 = sshll.u32 %s2, 4
      %s21 = int_to_ptr.hbm [resolvable:$true] %s20
      %s22 = sshll.u32 [#allocation5], 4
      %s23 = int_to_ptr.vmem [resolvable:$true] %s22
      %28 = dma.hbm_to_vmem [thread:$0]  %s21, 4096, %s23, [#allocation6], 256, 256, 16
    $region13: #{encoder_rnn_forward.3} parent=1 // pred_fallthru
      _
    // Predicated region
    $region14: #{encoder_rnn_forward.3} parent=1 // pred_check
      _
    $region15: #{encoder_rnn_forward.3} parent=1 // pred_check_branch
      %30 = sbr.rel (0) target = $region17
    $region16: #{encoder_rnn_forward.3} parent=1 // pred_region
      %32 = vsyncadd [#allocation8], 0
      %s33 = sshll.u32 %s3, 4
      %s34 = int_to_ptr.hbm [resolvable:$true] %s33
      %s35 = sshll.u32 [#allocation7], 4
      %s36 = int_to_ptr.vmem [resolvable:$true] %s35
      %41 = dma.hbm_to_vmem [thread:$0]  %s34, 4096, %s36, [#allocation8], 256, 256, 16
    $region17: #{encoder_rnn_forward.3} parent=1 // pred_fallthru
      _
    // Predicated region
    $region18: #{encoder_rnn_forward.3} parent=1 // pred_check
      _
    $region19: #{encoder_rnn_forward.3} parent=1 // pred_check_branch
      %43 = sbr.rel (0) target = $region21
    $region20: #{encoder_rnn_forward.3} parent=1 // pred_region
      _
    $region21: #{encoder_rnn_forward.3} parent=1 // pred_fallthru
      _
    // Predicated region
    $region22: #{encoder_rnn_forward.3} parent=1 // pred_check
      _
    $region23: #{encoder_rnn_forward.3} parent=1 // pred_check_branch
      %45 = sbr.rel (0) target = $region25
    $region24: #{encoder_rnn_forward.3} parent=1 // pred_region
      %47 = dma.done [#allocation6], 4096
    $region25: #{encoder_rnn_forward.3} parent=1 // pred_fallthru
      _
    // Predicated region
    $region26: #{encoder_rnn_forward.3} parent=1 // pred_check
      _
    $region27: #{encoder_rnn_forward.3} parent=1 // pred_check_branch
      %49 = sbr.rel (0) target = $region29
    $region28: #{encoder_rnn_forward.3} parent=1 // pred_region
      %51 = dma.done [#allocation8], 4096
    $region29: #{encoder_rnn_forward.3} parent=1 // pred_fallthru
      _
    %p52 = scmp.eq.s32.totalorder 0, 0
    // Predicated region
    $region30: #{encoder_rnn_forward.3} parent=1 // pred_check
      %p53 = pneg %p52
    $region31: #{encoder_rnn_forward.3} parent=1 // pred_check_branch
      %55 = sbr.rel (%p53) target = $region33
    $region32: #{encoder_rnn_forward.3} parent=1 // pred_region
      %56 = vst [vmem:[#allocation2] sm:$0xff] 0.0
      %57 = vst [vmem:[#allocation3] sm:$0xff] 0.0
    $region33: #{encoder_rnn_forward.3} parent=1 // pred_fallthru
      _
    %v58 = vld [vmem:[%s1] sm:$0xf]
    %v59 = vld [vmem:[%s1 + $0x4] sm:$0xf]
    %v60 = vld [vmem:[%s1 + $0x8] sm:$0xf]
    %v61 = vld [vmem:[%s1 + $0xc] sm:$0xf]
    %v62 = vld [vmem:[%s1 + $0x10] sm:$0xf]
    %v63 = vld [vmem:[%s1 + $0x14] sm:$0xf]
    %v64 = vld [vmem:[%s1 + $0x18] sm:$0xf]
    %v65 = vld [vmem:[%s1 + $0x1c] sm:$0xf]
    %v66 = vld [vmem:[#allocation5] sm:$0xff]
    %v67 = vld [vmem:[#allocation5 + $0x8] sm:$0xff]
    %v68 = vld [vmem:[#allocation5 + $0x10] sm:$0xff]
    %v69 = vld [vmem:[#allocation5 + $0x18] sm:$0xff]
    %v70 = vld [vmem:[#allocation5 + $0x20] sm:$0xff]
    %v71 = vld [vmem:[#allocation5 + $0x28] sm:$0xff]
    %v72 = vld [vmem:[#allocation5 + $0x30] sm:$0xff]
    %v73 = vld [vmem:[#allocation5 + $0x38] sm:$0xff]
    %v74 = vld [vmem:[#allocation5 + $0x40] sm:$0xff]
    %v75 = vld [vmem:[#allocation5 + $0x48] sm:$0xff]
    %v76 = vld [vmem:[#allocation5 + $0x50] sm:$0xff]
    %v77 = vld [vmem:[#allocation5 + $0x58] sm:$0xff]
    %v78 = vld [vmem:[#allocation5 + $0x60] sm:$0xff]
    %v79 = vld [vmem:[#allocation5 + $0x68] sm:$0xff]
    %v80 = vld [vmem:[#allocation5 + $0x70] sm:$0xff]
    %v81 = vld [vmem:[#allocation5 + $0x78] sm:$0xff]
    %v82 = vld [vmem:[#allocation5 + $0x80] sm:$0xff]
    %v83 = vld [vmem:[#allocation5 + $0x88] sm:$0xff]
    %v84 = vld [vmem:[#allocation5 + $0x90] sm:$0xff]
    %v85 = vld [vmem:[#allocation5 + $0x98] sm:$0xff]
    %v86 = vld [vmem:[#allocation5 + $0xa0] sm:$0xff]
    %v87 = vld [vmem:[#allocation5 + $0xa8] sm:$0xff]
    %v88 = vld [vmem:[#allocation5 + $0xb0] sm:$0xff]
    %v89 = vld [vmem:[#allocation5 + $0xb8] sm:$0xff]
    %v90 = vld [vmem:[#allocation5 + $0xc0] sm:$0xff]
    %v91 = vld [vmem:[#allocation5 + $0xc8] sm:$0xff]
    %v92 = vld [vmem:[#allocation5 + $0xd0] sm:$0xff]
    %v93 = vld [vmem:[#allocation5 + $0xd8] sm:$0xff]
    %v94 = vld [vmem:[#allocation5 + $0xe0] sm:$0xff]
    %v95 = vld [vmem:[#allocation5 + $0xe8] sm:$0xff]
    %v96 = vld [vmem:[#allocation5 + $0xf0] sm:$0xff]
    %v97 = vld [vmem:[#allocation5 + $0xf8] sm:$0xff]
    %v98 = vld [vmem:[%s4] sm:$0xf]
    %v100 = vperm.slane %v98, 0
    %v101 = vperm.slane %v98, 1
    %v102 = vperm.slane %v98, 2
    %v103 = vperm.slane %v98, 3
    %v116 = vunpack.c.l.b16 %v58
    %v117 = vunpack.c.l.b16 %v59
    %v118 = vunpack.c.l.b16 %v60
    %v119 = vunpack.c.l.b16 %v61
    %v120 = vunpack.c.l.b16 %v62
    %v121 = vunpack.c.l.b16 %v63
    %v122 = vunpack.c.l.b16 %v64
    %v123 = vunpack.c.l.b16 %v65
    %v124 = vpack.c.b16 %v117, %v116
    %v125 = vpack.c.b16 %v119, %v118
    %v126 = vpack.c.b16 %v121, %v120
    %v127 = vpack.c.b16 %v123, %v122
    %v164 = vunpack.c.l.b16 %v66
    %v165 = vunpack.c.h.b16 %v66
    %v166 = vunpack.c.l.b16 %v67
    %v167 = vunpack.c.h.b16 %v67
    %v168 = vunpack.c.l.b16 %v68
    %v169 = vunpack.c.h.b16 %v68
    %v170 = vunpack.c.l.b16 %v69
    %v171 = vunpack.c.h.b16 %v69
    %v172 = vunpack.c.l.b16 %v70
    %v173 = vunpack.c.h.b16 %v70
    %v174 = vunpack.c.l.b16 %v71
    %v175 = vunpack.c.h.b16 %v71
    %v176 = vunpack.c.l.b16 %v72
    %v177 = vunpack.c.h.b16 %v72
    %v178 = vunpack.c.l.b16 %v73
    %v179 = vunpack.c.h.b16 %v73
    %v180 = vunpack.c.l.b16 %v74
    %v181 = vunpack.c.h.b16 %v74
    %v182 = vunpack.c.l.b16 %v75
    %v183 = vunpack.c.h.b16 %v75
    %v184 = vunpack.c.l.b16 %v76
    %v185 = vunpack.c.h.b16 %v76
    %v186 = vunpack.c.l.b16 %v77
    %v187 = vunpack.c.h.b16 %v77
    %v188 = vunpack.c.l.b16 %v78
    %v189 = vunpack.c.h.b16 %v78
    %v190 = vunpack.c.l.b16 %v79
    %v191 = vunpack.c.h.b16 %v79
    %v192 = vunpack.c.l.b16 %v80
    %v193 = vunpack.c.h.b16 %v80
    %v194 = vunpack.c.l.b16 %v81
    %v195 = vunpack.c.h.b16 %v81
    %v196 = vunpack.c.l.b16 %v82
    %v197 = vunpack.c.h.b16 %v82
    %v198 = vunpack.c.l.b16 %v83
    %v199 = vunpack.c.h.b16 %v83
    %v200 = vunpack.c.l.b16 %v84
    %v201 = vunpack.c.h.b16 %v84
    %v202 = vunpack.c.l.b16 %v85
    %v203 = vunpack.c.h.b16 %v85
    %v204 = vunpack.c.l.b16 %v86
    %v205 = vunpack.c.h.b16 %v86
    %v206 = vunpack.c.l.b16 %v87
    %v207 = vunpack.c.h.b16 %v87
    %v208 = vunpack.c.l.b16 %v88
    %v209 = vunpack.c.h.b16 %v88
    %v210 = vunpack.c.l.b16 %v89
    %v211 = vunpack.c.h.b16 %v89
    %v212 = vunpack.c.l.b16 %v90
    %v213 = vunpack.c.h.b16 %v90
    %v214 = vunpack.c.l.b16 %v91
    %v215 = vunpack.c.h.b16 %v91
    %v216 = vunpack.c.l.b16 %v92
    %v217 = vunpack.c.h.b16 %v92
    %v218 = vunpack.c.l.b16 %v93
    %v219 = vunpack.c.h.b16 %v93
    %v220 = vunpack.c.l.b16 %v94
    %v221 = vunpack.c.h.b16 %v94
    %v222 = vunpack.c.l.b16 %v95
    %v223 = vunpack.c.h.b16 %v95
    %v224 = vunpack.c.l.b16 %v96
    %v225 = vunpack.c.h.b16 %v96
    %v226 = vunpack.c.l.b16 %v97
    %v227 = vunpack.c.h.b16 %v97
    %v228 = vpack.c.b16 %v168, %v164
    %v229 = vpack.c.b16 %v169, %v165
    %v230 = vpack.c.b16 %v170, %v166
    %v231 = vpack.c.b16 %v171, %v167
    %v232 = vpack.c.b16 %v176, %v172
    %v233 = vpack.c.b16 %v177, %v173
    %v234 = vpack.c.b16 %v178, %v174
    %v235 = vpack.c.b16 %v179, %v175
    %v236 = vpack.c.b16 %v184, %v180
    %v237 = vpack.c.b16 %v185, %v181
    %v238 = vpack.c.b16 %v186, %v182
    %v239 = vpack.c.b16 %v187, %v183
    %v240 = vpack.c.b16 %v192, %v188
    %v241 = vpack.c.b16 %v193, %v189
    %v242 = vpack.c.b16 %v194, %v190
    %v243 = vpack.c.b16 %v195, %v191
    %v244 = vpack.c.b16 %v200, %v196
    %v245 = vpack.c.b16 %v201, %v197
    %v246 = vpack.c.b16 %v202, %v198
    %v247 = vpack.c.b16 %v203, %v199
    %v248 = vpack.c.b16 %v208, %v204
    %v249 = vpack.c.b16 %v209, %v205
    %v250 = vpack.c.b16 %v210, %v206
    %v251 = vpack.c.b16 %v211, %v207
    %v252 = vpack.c.b16 %v216, %v212
    %v253 = vpack.c.b16 %v217, %v213
    %v254 = vpack.c.b16 %v218, %v214
    %v255 = vpack.c.b16 %v219, %v215
    %v256 = vpack.c.b16 %v224, %v220
    %v257 = vpack.c.b16 %v225, %v221
    %v258 = vpack.c.b16 %v226, %v222
    %v259 = vpack.c.b16 %v227, %v223
    %292 = vmatpush.bf16.msra.mxu0 %v256
    %293 = vmatpush.bf16.msra.mxu0 %v252
    %294 = vmatpush.bf16.msra.mxu0 %v248
    %295 = vmatpush.bf16.msra.mxu0 %v244
    %296 = vmatpush.bf16.msra.mxu0 %v240
    %297 = vmatpush.bf16.msra.mxu0 %v236
    %298 = vmatpush.bf16.msra.mxu0 %v232
    %299 = vmatpush.bf16.msra.mxu0 %v228
    %300 = vmatmul.bf16.gmra.mxu0 %v124
    %v301 = vpop.f32.mrf.mxu0
    %v302 = vadd.f32 %v100, %v301
    %v303 = vpop.f32.mrf.mxu0
    %v304 = vadd.f32 %v100, %v303
    %305 = vmatmul.bf16.gmra.mxu0 %v125
    %v306 = vpop.f32.mrf.mxu0
    %v307 = vadd.f32 %v100, %v306
    %v308 = vpop.f32.mrf.mxu0
    %v309 = vadd.f32 %v100, %v308
    %310 = vmatmul.bf16.gmra.mxu0 %v126
    %v311 = vpop.f32.mrf.mxu0
    %v312 = vadd.f32 %v100, %v311
    %v313 = vpop.f32.mrf.mxu0
    %v314 = vadd.f32 %v100, %v313
    %315 = vmatmul.bf16.gmra.mxu0 %v127
    %v316 = vpop.f32.mrf.mxu0
    %v317 = vadd.f32 %v100, %v316
    %v318 = vpop.f32.mrf.mxu0
    %v319 = vadd.f32 %v100, %v318
    %320 = vdwg.mxu0
    %321 = vmatpush.bf16.msra.mxu0 %v257
    %322 = vmatpush.bf16.msra.mxu0 %v253
    %323 = vmatpush.bf16.msra.mxu0 %v249
    %324 = vmatpush.bf16.msra.mxu0 %v245
    %325 = vmatpush.bf16.msra.mxu0 %v241
    %326 = vmatpush.bf16.msra.mxu0 %v237
    %327 = vmatpush.bf16.msra.mxu0 %v233
    %328 = vmatpush.bf16.msra.mxu0 %v229
    %329 = vmatmul.bf16.gmra.mxu0 %v124
    %v330 = vpop.f32.mrf.mxu0
    %v331 = vadd.f32 %v101, %v330
    %v332 = vpop.f32.mrf.mxu0
    %v333 = vadd.f32 %v101, %v332
    %334 = vmatmul.bf16.gmra.mxu0 %v125
    %v335 = vpop.f32.mrf.mxu0
    %v336 = vadd.f32 %v101, %v335
    %v337 = vpop.f32.mrf.mxu0
    %v338 = vadd.f32 %v101, %v337
    %339 = vmatmul.bf16.gmra.mxu0 %v126
    %v340 = vpop.f32.mrf.mxu0
    %v341 = vadd.f32 %v101, %v340
    %v342 = vpop.f32.mrf.mxu0
    %v343 = vadd.f32 %v101, %v342
    %344 = vmatmul.bf16.gmra.mxu0 %v127
    %v345 = vpop.f32.mrf.mxu0
    %v346 = vadd.f32 %v101, %v345
    %v347 = vpop.f32.mrf.mxu0
    %v348 = vadd.f32 %v101, %v347
    %349 = vdwg.mxu0
    %350 = vmatpush.bf16.msra.mxu0 %v258
    %351 = vmatpush.bf16.msra.mxu0 %v254
    %352 = vmatpush.bf16.msra.mxu0 %v250
    %353 = vmatpush.bf16.msra.mxu0 %v246
    %354 = vmatpush.bf16.msra.mxu0 %v242
    %355 = vmatpush.bf16.msra.mxu0 %v238
    %356 = vmatpush.bf16.msra.mxu0 %v234
    %357 = vmatpush.bf16.msra.mxu0 %v230
    %358 = vmatmul.bf16.gmra.mxu0 %v124
    %v359 = vpop.f32.mrf.mxu0
    %v360 = vadd.f32 %v102, %v359
    %v361 = vpop.f32.mrf.mxu0
    %v362 = vadd.f32 %v102, %v361
    %363 = vmatmul.bf16.gmra.mxu0 %v125
    %v364 = vpop.f32.mrf.mxu0
    %v365 = vadd.f32 %v102, %v364
    %v366 = vpop.f32.mrf.mxu0
    %v367 = vadd.f32 %v102, %v366
    %368 = vmatmul.bf16.gmra.mxu0 %v126
    %v369 = vpop.f32.mrf.mxu0
    %v370 = vadd.f32 %v102, %v369
    %v371 = vpop.f32.mrf.mxu0
    %v372 = vadd.f32 %v102, %v371
    %373 = vmatmul.bf16.gmra.mxu0 %v127
    %v374 = vpop.f32.mrf.mxu0
    %v375 = vadd.f32 %v102, %v374
    %v376 = vpop.f32.mrf.mxu0
    %v377 = vadd.f32 %v102, %v376
    %378 = vdwg.mxu0
    %379 = vmatpush.bf16.msra.mxu0 %v259
    %380 = vmatpush.bf16.msra.mxu0 %v255
    %381 = vmatpush.bf16.msra.mxu0 %v251
    %382 = vmatpush.bf16.msra.mxu0 %v247
    %383 = vmatpush.bf16.msra.mxu0 %v243
    %384 = vmatpush.bf16.msra.mxu0 %v239
    %385 = vmatpush.bf16.msra.mxu0 %v235
    %386 = vmatpush.bf16.msra.mxu0 %v231
    %387 = vmatmul.bf16.gmra.mxu0 %v124
    %v388 = vpop.f32.mrf.mxu0
    %v389 = vadd.f32 %v103, %v388
    %v390 = vpop.f32.mrf.mxu0
    %v391 = vadd.f32 %v103, %v390
    %392 = vmatmul.bf16.gmra.mxu0 %v125
    %v393 = vpop.f32.mrf.mxu0
    %v394 = vadd.f32 %v103, %v393
    %v395 = vpop.f32.mrf.mxu0
    %v396 = vadd.f32 %v103, %v395
    %397 = vmatmul.bf16.gmra.mxu0 %v126
    %v398 = vpop.f32.mrf.mxu0
    %v399 = vadd.f32 %v103, %v398
    %v400 = vpop.f32.mrf.mxu0
    %v401 = vadd.f32 %v103, %v400
    %402 = vmatmul.bf16.gmra.mxu0 %v127
    %v403 = vpop.f32.mrf.mxu0
    %v404 = vadd.f32 %v103, %v403
    %v405 = vpop.f32.mrf.mxu0
    %v406 = vadd.f32 %v103, %v405
    %407 = vdwg.mxu0
    %408 = vst [vmem:[#allocation4] sm:$0xff] %v302
    %409 = vst [vmem:[#allocation4 + $0x8] sm:$0xff] %v331
    %410 = vst [vmem:[#allocation4 + $0x10] sm:$0xff] %v360
    %411 = vst [vmem:[#allocation4 + $0x18] sm:$0xff] %v389
    %412 = vst [vmem:[#allocation4 + $0x20] sm:$0xff] %v304
    %413 = vst [vmem:[#allocation4 + $0x28] sm:$0xff] %v333
    %414 = vst [vmem:[#allocation4 + $0x30] sm:$0xff] %v362
    %415 = vst [vmem:[#allocation4 + $0x38] sm:$0xff] %v391
    %416 = vst [vmem:[#allocation4 + $0x40] sm:$0xff] %v307
    %417 = vst [vmem:[#allocation4 + $0x48] sm:$0xff] %v336
    %418 = vst [vmem:[#allocation4 + $0x50] sm:$0xff] %v365
    %419 = vst [vmem:[#allocation4 + $0x58] sm:$0xff] %v394
    %420 = vst [vmem:[#allocation4 + $0x60] sm:$0xff] %v309
    %421 = vst [vmem:[#allocation4 + $0x68] sm:$0xff] %v338
    %422 = vst [vmem:[#allocation4 + $0x70] sm:$0xff] %v367
    %423 = vst [vmem:[#allocation4 + $0x78] sm:$0xff] %v396
    %424 = vst [vmem:[#allocation4 + $0x80] sm:$0xff] %v312
    %425 = vst [vmem:[#allocation4 + $0x88] sm:$0xff] %v341
    %426 = vst [vmem:[#allocation4 + $0x90] sm:$0xff] %v370
    %427 = vst [vmem:[#allocation4 + $0x98] sm:$0xff] %v399
    %428 = vst [vmem:[#allocation4 + $0xa0] sm:$0xff] %v314
    %429 = vst [vmem:[#allocation4 + $0xa8] sm:$0xff] %v343
    %430 = vst [vmem:[#allocation4 + $0xb0] sm:$0xff] %v372
    %431 = vst [vmem:[#allocation4 + $0xb8] sm:$0xff] %v401
    %432 = vst [vmem:[#allocation4 + $0xc0] sm:$0xff] %v317
    %433 = vst [vmem:[#allocation4 + $0xc8] sm:$0xff] %v346
    %434 = vst [vmem:[#allocation4 + $0xd0] sm:$0xff] %v375
    %435 = vst [vmem:[#allocation4 + $0xd8] sm:$0xff] %v404
    %436 = vst [vmem:[#allocation4 + $0xe0] sm:$0xff] %v319
    %437 = vst [vmem:[#allocation4 + $0xe8] sm:$0xff] %v348
    %438 = vst [vmem:[#allocation4 + $0xf0] sm:$0xff] %v377
    %439 = vst [vmem:[#allocation4 + $0xf8] sm:$0xff] %v406
    %v440 = vld [vmem:[#allocation7] sm:$0xff]
    %v441 = vld [vmem:[#allocation7 + $0x8] sm:$0xff]
    %v442 = vld [vmem:[#allocation7 + $0x10] sm:$0xff]
    %v443 = vld [vmem:[#allocation7 + $0x18] sm:$0xff]
    %v444 = vld [vmem:[#allocation7 + $0x20] sm:$0xff]
    %v445 = vld [vmem:[#allocation7 + $0x28] sm:$0xff]
    %v446 = vld [vmem:[#allocation7 + $0x30] sm:$0xff]
    %v447 = vld [vmem:[#allocation7 + $0x38] sm:$0xff]
    %v448 = vld [vmem:[#allocation7 + $0x40] sm:$0xff]
    %v449 = vld [vmem:[#allocation7 + $0x48] sm:$0xff]
    %v450 = vld [vmem:[#allocation7 + $0x50] sm:$0xff]
    %v451 = vld [vmem:[#allocation7 + $0x58] sm:$0xff]
    %v452 = vld [vmem:[#allocation7 + $0x60] sm:$0xff]
    %v453 = vld [vmem:[#allocation7 + $0x68] sm:$0xff]
    %v454 = vld [vmem:[#allocation7 + $0x70] sm:$0xff]
    %v455 = vld [vmem:[#allocation7 + $0x78] sm:$0xff]
    %v456 = vld [vmem:[#allocation7 + $0x80] sm:$0xff]
    %v457 = vld [vmem:[#allocation7 + $0x88] sm:$0xff]
    %v458 = vld [vmem:[#allocation7 + $0x90] sm:$0xff]
    %v459 = vld [vmem:[#allocation7 + $0x98] sm:$0xff]
    %v460 = vld [vmem:[#allocation7 + $0xa0] sm:$0xff]
    %v461 = vld [vmem:[#allocation7 + $0xa8] sm:$0xff]
    %v462 = vld [vmem:[#allocation7 + $0xb0] sm:$0xff]
    %v463 = vld [vmem:[#allocation7 + $0xb8] sm:$0xff]
    %v464 = vld [vmem:[#allocation7 + $0xc0] sm:$0xff]
    %v465 = vld [vmem:[#allocation7 + $0xc8] sm:$0xff]
    %v466 = vld [vmem:[#allocation7 + $0xd0] sm:$0xff]
    %v467 = vld [vmem:[#allocation7 + $0xd8] sm:$0xff]
    %v468 = vld [vmem:[#allocation7 + $0xe0] sm:$0xff]
    %v469 = vld [vmem:[#allocation7 + $0xe8] sm:$0xff]
    %v470 = vld [vmem:[#allocation7 + $0xf0] sm:$0xff]
    %v471 = vld [vmem:[#allocation7 + $0xf8] sm:$0xff]
    %v472 = vld [vmem:[#allocation2] sm:$0xff]
    %v473 = vld [vmem:[#allocation3] sm:$0xff]
    %s474 = smul.u32 0, 4
    %s475 = smul.addr %s474, 8
    %s476 = scalar_lea.vmem [#allocation4], %s475
    %v477 = vld [vmem:[%s476] sm:$0xff]
    %v478 = vld [vmem:[%s476 + $0x8] sm:$0xff]
    %v479 = vld [vmem:[%s476 + $0x10] sm:$0xff]
    %v480 = vld [vmem:[%s476 + $0x18] sm:$0xff]
    %v481 = vpack.c.bf16 %v472, %v472
    %v514 = vunpack.c.l.b16 %v440
    %v515 = vunpack.c.h.b16 %v440
    %v516 = vunpack.c.l.b16 %v441
    %v517 = vunpack.c.h.b16 %v441
    %v518 = vunpack.c.l.b16 %v442
    %v519 = vunpack.c.h.b16 %v442
    %v520 = vunpack.c.l.b16 %v443
    %v521 = vunpack.c.h.b16 %v443
    %v522 = vunpack.c.l.b16 %v444
    %v523 = vunpack.c.h.b16 %v444
    %v524 = vunpack.c.l.b16 %v445
    %v525 = vunpack.c.h.b16 %v445
    %v526 = vunpack.c.l.b16 %v446
    %v527 = vunpack.c.h.b16 %v446
    %v528 = vunpack.c.l.b16 %v447
    %v529 = vunpack.c.h.b16 %v447
    %v530 = vunpack.c.l.b16 %v448
    %v531 = vunpack.c.h.b16 %v448
    %v532 = vunpack.c.l.b16 %v449
    %v533 = vunpack.c.h.b16 %v449
    %v534 = vunpack.c.l.b16 %v450
    %v535 = vunpack.c.h.b16 %v450
    %v536 = vunpack.c.l.b16 %v451
    %v537 = vunpack.c.h.b16 %v451
    %v538 = vunpack.c.l.b16 %v452
    %v539 = vunpack.c.h.b16 %v452
    %v540 = vunpack.c.l.b16 %v453
    %v541 = vunpack.c.h.b16 %v453
    %v542 = vunpack.c.l.b16 %v454
    %v543 = vunpack.c.h.b16 %v454
    %v544 = vunpack.c.l.b16 %v455
    %v545 = vunpack.c.h.b16 %v455
    %v546 = vunpack.c.l.b16 %v456
    %v547 = vunpack.c.h.b16 %v456
    %v548 = vunpack.c.l.b16 %v457
    %v549 = vunpack.c.h.b16 %v457
    %v550 = vunpack.c.l.b16 %v458
    %v551 = vunpack.c.h.b16 %v458
    %v552 = vunpack.c.l.b16 %v459
    %v553 = vunpack.c.h.b16 %v459
    %v554 = vunpack.c.l.b16 %v460
    %v555 = vunpack.c.h.b16 %v460
    %v556 = vunpack.c.l.b16 %v461
    %v557 = vunpack.c.h.b16 %v461
    %v558 = vunpack.c.l.b16 %v462
    %v559 = vunpack.c.h.b16 %v462
    %v560 = vunpack.c.l.b16 %v463
    %v561 = vunpack.c.h.b16 %v463
    %v562 = vunpack.c.l.b16 %v464
    %v563 = vunpack.c.h.b16 %v464
    %v564 = vunpack.c.l.b16 %v465
    %v565 = vunpack.c.h.b16 %v465
    %v566 = vunpack.c.l.b16 %v466
    %v567 = vunpack.c.h.b16 %v466
    %v568 = vunpack.c.l.b16 %v467
    %v569 = vunpack.c.h.b16 %v467
    %v570 = vunpack.c.l.b16 %v468
    %v571 = vunpack.c.h.b16 %v468
    %v572 = vunpack.c.l.b16 %v469
    %v573 = vunpack.c.h.b16 %v469
    %v574 = vunpack.c.l.b16 %v470
    %v575 = vunpack.c.h.b16 %v470
    %v576 = vunpack.c.l.b16 %v471
    %v577 = vunpack.c.h.b16 %v471
    %v578 = vpack.c.b16 %v518, %v514
    %v579 = vpack.c.b16 %v519, %v515
    %v580 = vpack.c.b16 %v520, %v516
    %v581 = vpack.c.b16 %v521, %v517
    %v582 = vpack.c.b16 %v526, %v522
    %v583 = vpack.c.b16 %v527, %v523
    %v584 = vpack.c.b16 %v528, %v524
    %v585 = vpack.c.b16 %v529, %v525
    %v586 = vpack.c.b16 %v534, %v530
    %v587 = vpack.c.b16 %v535, %v531
    %v588 = vpack.c.b16 %v536, %v532
    %v589 = vpack.c.b16 %v537, %v533
    %v590 = vpack.c.b16 %v542, %v538
    %v591 = vpack.c.b16 %v543, %v539
    %v592 = vpack.c.b16 %v544, %v540
    %v593 = vpack.c.b16 %v545, %v541
    %v594 = vpack.c.b16 %v550, %v546
    %v595 = vpack.c.b16 %v551, %v547
    %v596 = vpack.c.b16 %v552, %v548
    %v597 = vpack.c.b16 %v553, %v549
    %v598 = vpack.c.b16 %v558, %v554
    %v599 = vpack.c.b16 %v559, %v555
    %v600 = vpack.c.b16 %v560, %v556
    %v601 = vpack.c.b16 %v561, %v557
    %v602 = vpack.c.b16 %v566, %v562
    %v603 = vpack.c.b16 %v567, %v563
    %v604 = vpack.c.b16 %v568, %v564
    %v605 = vpack.c.b16 %v569, %v565
    %v606 = vpack.c.b16 %v574, %v570
    %v607 = vpack.c.b16 %v575, %v571
    %v608 = vpack.c.b16 %v576, %v572
    %v609 = vpack.c.b16 %v577, %v573
    %642 = vmatpush.bf16.msra.mxu0 %v606
    %643 = vmatpush.bf16.msra.mxu0 %v602
    %644 = vmatpush.bf16.msra.mxu0 %v598
    %645 = vmatpush.bf16.msra.mxu0 %v594
    %646 = vmatpush.bf16.msra.mxu0 %v590
    %647 = vmatpush.bf16.msra.mxu0 %v586
    %648 = vmatpush.bf16.msra.mxu0 %v582
    %649 = vmatpush.bf16.msra.mxu0 %v578
    %650 = vmatmul.bf16.gmra.mxu0 %v481
    %v651 = vpop.f32.mrf.mxu0
    %v652 = vadd.f32 0.0, %v651
    %v653 = vpop.f32.mrf.mxu0
    %654 = vdwg.mxu0
    %655 = vmatpush.bf16.msra.mxu0 %v607
    %656 = vmatpush.bf16.msra.mxu0 %v603
    %657 = vmatpush.bf16.msra.mxu0 %v599
    %658 = vmatpush.bf16.msra.mxu0 %v595
    %659 = vmatpush.bf16.msra.mxu0 %v591
    %660 = vmatpush.bf16.msra.mxu0 %v587
    %661 = vmatpush.bf16.msra.mxu0 %v583
    %662 = vmatpush.bf16.msra.mxu0 %v579
    %663 = vmatmul.bf16.gmra.mxu0 %v481
    %v664 = vpop.f32.mrf.mxu0
    %v665 = vadd.f32 0.0, %v664
    %v666 = vpop.f32.mrf.mxu0
    %667 = vdwg.mxu0
    %668 = vmatpush.bf16.msra.mxu0 %v608
    %669 = vmatpush.bf16.msra.mxu0 %v604
    %670 = vmatpush.bf16.msra.mxu0 %v600
    %671 = vmatpush.bf16.msra.mxu0 %v596
    %672 = vmatpush.bf16.msra.mxu0 %v592
    %673 = vmatpush.bf16.msra.mxu0 %v588
    %674 = vmatpush.bf16.msra.mxu0 %v584
    %675 = vmatpush.bf16.msra.mxu0 %v580
    %676 = vmatmul.bf16.gmra.mxu0 %v481
    %v677 = vpop.f32.mrf.mxu0
    %v678 = vadd.f32 0.0, %v677
    %v679 = vpop.f32.mrf.mxu0
    %680 = vdwg.mxu0
    %681 = vmatpush.bf16.msra.mxu0 %v609
    %682 = vmatpush.bf16.msra.mxu0 %v605
    %683 = vmatpush.bf16.msra.mxu0 %v601
    %684 = vmatpush.bf16.msra.mxu0 %v597
    %685 = vmatpush.bf16.msra.mxu0 %v593
    %686 = vmatpush.bf16.msra.mxu0 %v589
    %687 = vmatpush.bf16.msra.mxu0 %v585
    %688 = vmatpush.bf16.msra.mxu0 %v581
    %689 = vmatmul.bf16.gmra.mxu0 %v481
    %v690 = vpop.f32.mrf.mxu0
    %v691 = vadd.f32 0.0, %v690
    %v692 = vpop.f32.mrf.mxu0
    %693 = vdwg.mxu0
    %v694 = vadd.f32 %v477, %v652
    %v695 = vadd.f32 %v478, %v665
    %v696 = vadd.f32 %v479, %v678
    %v697 = vadd.f32 %v480, %v691
    %v698 = vxor.u32 %v694, 2147483648
    %v699 = vmul.f32 %v698, 1.442695
    %v700 = vpow.pop %v699
    %v701 = vadd.f32 %v700, 1.0
    %v702 = vrcp.pop %v701
    %v703 = vmul.f32 %v701, %v702
    %v704 = vsub.f32 1.0, %v703
    %v705 = vmul.f32 %v702, %v704
    %v706 = vadd.f32 %v702, %v705
    %vm707 = vweird.f32 %v701
    %vm708 = vweird.f32 %v702
    %vm709 = vmor %vm707, %vm708
    %v710 = vsel %vm709, %v702, %v706
    %v711 = vand.u32 2147483647, %v701
    %vm712 = vcmp.eq.f32.partialorder %v711, 8.507059e+37
    %v713 = vand.u32 %v701, 2147483648
    %v714 = vor.u32 1.1754944e-38, %v713
    %v715 = vsel %vm712, %v714, %v710
    %v716 = vmul.f32 1.0, %v715
    %v717 = vxor.u32 %v695, 2147483648
    %v718 = vmul.f32 %v717, 1.442695
    %v719 = vpow.pop %v718
    %v720 = vadd.f32 %v719, 1.0
    %v721 = vrcp.pop %v720
    %v722 = vmul.f32 %v720, %v721
    %v723 = vsub.f32 1.0, %v722
    %v724 = vmul.f32 %v721, %v723
    %v725 = vadd.f32 %v721, %v724
    %vm726 = vweird.f32 %v720
    %vm727 = vweird.f32 %v721
    %vm728 = vmor %vm726, %vm727
    %v729 = vsel %vm728, %v721, %v725
    %v730 = vand.u32 2147483647, %v720
    %vm731 = vcmp.eq.f32.partialorder %v730, 8.507059e+37
    %v732 = vand.u32 %v720, 2147483648
    %v733 = vor.u32 1.1754944e-38, %v732
    %v734 = vsel %vm731, %v733, %v729
    %v735 = vmul.f32 1.0, %v734
    %v736 = vtanh.pop %v696
    %v737 = vxor.u32 %v697, 2147483648
    %v738 = vmul.f32 %v737, 1.442695
    %v739 = vpow.pop %v738
    %v740 = vadd.f32 %v739, 1.0
    %v741 = vrcp.pop %v740
    %v742 = vmul.f32 %v740, %v741
    %v743 = vsub.f32 1.0, %v742
    %v744 = vmul.f32 %v741, %v743
    %v745 = vadd.f32 %v741, %v744
    %vm746 = vweird.f32 %v740
    %vm747 = vweird.f32 %v741
    %vm748 = vmor %vm746, %vm747
    %v749 = vsel %vm748, %v741, %v745
    %v750 = vand.u32 2147483647, %v740
    %vm751 = vcmp.eq.f32.partialorder %v750, 8.507059e+37
    %v752 = vand.u32 %v740, 2147483648
    %v753 = vor.u32 1.1754944e-38, %v752
    %v754 = vsel %vm751, %v753, %v749
    %v755 = vmul.f32 1.0, %v754
    %v756 = vmul.f32 %v735, %v473
    %v757 = vmul.f32 %v716, %v736
    %v758 = vadd.f32 %v756, %v757
    %v759 = vtanh.pop %v758
    %v760 = vmul.f32 %v755, %v759
    %761 = vst [vmem:[%s5] sm:$0xff] %v760
    %s762 = smul.u32 1, 4
    %s763 = smul.addr %s762, 8
    %s764 = scalar_lea.vmem [#allocation4], %s763
    %v765 = vld [vmem:[%s764] sm:$0xff]
    %v766 = vld [vmem:[%s764 + $0x8] sm:$0xff]
    %v767 = vld [vmem:[%s764 + $0x10] sm:$0xff]
    %v768 = vld [vmem:[%s764 + $0x18] sm:$0xff]
    %v769 = vpack.c.bf16 %v760, %v760
    %770 = vmatpush.bf16.msra.mxu0 %v606
    %771 = vmatpush.bf16.msra.mxu0 %v602
    %772 = vmatpush.bf16.msra.mxu0 %v598
    %773 = vmatpush.bf16.msra.mxu0 %v594
    %774 = vmatpush.bf16.msra.mxu0 %v590
    %775 = vmatpush.bf16.msra.mxu0 %v586
    %776 = vmatpush.bf16.msra.mxu0 %v582
    %777 = vmatpush.bf16.msra.mxu0 %v578
    %778 = vmatmul.bf16.gmra.mxu0 %v769
    %v779 = vpop.f32.mrf.mxu0
    %v780 = vadd.f32 0.0, %v779
    %v781 = vpop.f32.mrf.mxu0
    %782 = vdwg.mxu0
    %783 = vmatpush.bf16.msra.mxu0 %v607
    %784 = vmatpush.bf16.msra.mxu0 %v603
    %785 = vmatpush.bf16.msra.mxu0 %v599
    %786 = vmatpush.bf16.msra.mxu0 %v595
    %787 = vmatpush.bf16.msra.mxu0 %v591
    %788 = vmatpush.bf16.msra.mxu0 %v587
    %789 = vmatpush.bf16.msra.mxu0 %v583
    %790 = vmatpush.bf16.msra.mxu0 %v579
    %791 = vmatmul.bf16.gmra.mxu0 %v769
    %v792 = vpop.f32.mrf.mxu0
    %v793 = vadd.f32 0.0, %v792
    %v794 = vpop.f32.mrf.mxu0
    %795 = vdwg.mxu0
    %796 = vmatpush.bf16.msra.mxu0 %v608
    %797 = vmatpush.bf16.msra.mxu0 %v604
    %798 = vmatpush.bf16.msra.mxu0 %v600
    %799 = vmatpush.bf16.msra.mxu0 %v596
    %800 = vmatpush.bf16.msra.mxu0 %v592
    %801 = vmatpush.bf16.msra.mxu0 %v588
    %802 = vmatpush.bf16.msra.mxu0 %v584
    %803 = vmatpush.bf16.msra.mxu0 %v580
    %804 = vmatmul.bf16.gmra.mxu0 %v769
    %v805 = vpop.f32.mrf.mxu0
    %v806 = vadd.f32 0.0, %v805
    %v807 = vpop.f32.mrf.mxu0
    %808 = vdwg.mxu0
    %809 = vmatpush.bf16.msra.mxu0 %v609
    %810 = vmatpush.bf16.msra.mxu0 %v605
    %811 = vmatpush.bf16.msra.mxu0 %v601
    %812 = vmatpush.bf16.msra.mxu0 %v597
    %813 = vmatpush.bf16.msra.mxu0 %v593
    %814 = vmatpush.bf16.msra.mxu0 %v589
    %815 = vmatpush.bf16.msra.mxu0 %v585
    %816 = vmatpush.bf16.msra.mxu0 %v581
    %817 = vmatmul.bf16.gmra.mxu0 %v769
    %v818 = vpop.f32.mrf.mxu0
    %v819 = vadd.f32 0.0, %v818
    %v820 = vpop.f32.mrf.mxu0
    %821 = vdwg.mxu0
    %v822 = vadd.f32 %v765, %v780
    %v823 = vadd.f32 %v766, %v793
    %v824 = vadd.f32 %v767, %v806
    %v825 = vadd.f32 %v768, %v819
    %v826 = vxor.u32 %v822, 2147483648
    %v827 = vmul.f32 %v826, 1.442695
    %v828 = vpow.pop %v827
    %v829 = vadd.f32 %v828, 1.0
    %v830 = vrcp.pop %v829
    %v831 = vmul.f32 %v829, %v830
    %v832 = vsub.f32 1.0, %v831
    %v833 = vmul.f32 %v830, %v832
    %v834 = vadd.f32 %v830, %v833
    %vm835 = vweird.f32 %v829
    %vm836 = vweird.f32 %v830
    %vm837 = vmor %vm835, %vm836
    %v838 = vsel %vm837, %v830, %v834
    %v839 = vand.u32 2147483647, %v829
    %vm840 = vcmp.eq.f32.partialorder %v839, 8.507059e+37
    %v841 = vand.u32 %v829, 2147483648
    %v842 = vor.u32 1.1754944e-38, %v841
    %v843 = vsel %vm840, %v842, %v838
    %v844 = vmul.f32 1.0, %v843
    %v845 = vxor.u32 %v823, 2147483648
    %v846 = vmul.f32 %v845, 1.442695
    %v847 = vpow.pop %v846
    %v848 = vadd.f32 %v847, 1.0
    %v849 = vrcp.pop %v848
    %v850 = vmul.f32 %v848, %v849
    %v851 = vsub.f32 1.0, %v850
    %v852 = vmul.f32 %v849, %v851
    %v853 = vadd.f32 %v849, %v852
    %vm854 = vweird.f32 %v848
    %vm855 = vweird.f32 %v849
    %vm856 = vmor %vm854, %vm855
    %v857 = vsel %vm856, %v849, %v853
    %v858 = vand.u32 2147483647, %v848
    %vm859 = vcmp.eq.f32.partialorder %v858, 8.507059e+37
    %v860 = vand.u32 %v848, 2147483648
    %v861 = vor.u32 1.1754944e-38, %v860
    %v862 = vsel %vm859, %v861, %v857
    %v863 = vmul.f32 1.0, %v862
    %v864 = vtanh.pop %v824
    %v865 = vxor.u32 %v825, 2147483648
    %v866 = vmul.f32 %v865, 1.442695
    %v867 = vpow.pop %v866
    %v868 = vadd.f32 %v867, 1.0
    %v869 = vrcp.pop %v868
    %v870 = vmul.f32 %v868, %v869
    %v871 = vsub.f32 1.0, %v870
    %v872 = vmul.f32 %v869, %v871
    %v873 = vadd.f32 %v869, %v872
    %vm874 = vweird.f32 %v868
    %vm875 = vweird.f32 %v869
    %vm876 = vmor %vm874, %vm875
    %v877 = vsel %vm876, %v869, %v873
    %v878 = vand.u32 2147483647, %v868
    %vm879 = vcmp.eq.f32.partialorder %v878, 8.507059e+37
    %v880 = vand.u32 %v868, 2147483648
    %v881 = vor.u32 1.1754944e-38, %v880
    %v882 = vsel %vm879, %v881, %v877
    %v883 = vmul.f32 1.0, %v882
    %v884 = vmul.f32 %v863, %v758
    %v885 = vmul.f32 %v844, %v864
    %v886 = vadd.f32 %v884, %v885
    %v887 = vtanh.pop %v886
    %v888 = vmul.f32 %v883, %v887
    %s889 = scalar_lea.vmem %s5, 8
    %890 = vst [vmem:[%s889] sm:$0xff] %v888
    %s891 = smul.u32 2, 4
    %s892 = smul.addr %s891, 8
    %s893 = scalar_lea.vmem [#allocation4], %s892
    %v894 = vld [vmem:[%s893] sm:$0xff]
    %v895 = vld [vmem:[%s893 + $0x8] sm:$0xff]
    %v896 = vld [vmem:[%s893 + $0x10] sm:$0xff]
    %v897 = vld [vmem:[%s893 + $0x18] sm:$0xff]
    %v898 = vpack.c.bf16 %v888, %v888
    %899 = vmatpush.bf16.msra.mxu0 %v606
    %900 = vmatpush.bf16.msra.mxu0 %v602
    %901 = vmatpush.bf16.msra.mxu0 %v598
    %902 = vmatpush.bf16.msra.mxu0 %v594
    %903 = vmatpush.bf16.msra.mxu0 %v590
    %904 = vmatpush.bf16.msra.mxu0 %v586
    %905 = vmatpush.bf16.msra.mxu0 %v582
    %906 = vmatpush.bf16.msra.mxu0 %v578
    %907 = vmatmul.bf16.gmra.mxu0 %v898
    %v908 = vpop.f32.mrf.mxu0
    %v909 = vadd.f32 0.0, %v908
    %v910 = vpop.f32.mrf.mxu0
    %911 = vdwg.mxu0
    %912 = vmatpush.bf16.msra.mxu0 %v607
    %913 = vmatpush.bf16.msra.mxu0 %v603
    %914 = vmatpush.bf16.msra.mxu0 %v599
    %915 = vmatpush.bf16.msra.mxu0 %v595
    %916 = vmatpush.bf16.msra.mxu0 %v591
    %917 = vmatpush.bf16.msra.mxu0 %v587
    %918 = vmatpush.bf16.msra.mxu0 %v583
    %919 = vmatpush.bf16.msra.mxu0 %v579
    %920 = vmatmul.bf16.gmra.mxu0 %v898
    %v921 = vpop.f32.mrf.mxu0
    %v922 = vadd.f32 0.0, %v921
    %v923 = vpop.f32.mrf.mxu0
    %924 = vdwg.mxu0
    %925 = vmatpush.bf16.msra.mxu0 %v608
    %926 = vmatpush.bf16.msra.mxu0 %v604
    %927 = vmatpush.bf16.msra.mxu0 %v600
    %928 = vmatpush.bf16.msra.mxu0 %v596
    %929 = vmatpush.bf16.msra.mxu0 %v592
    %930 = vmatpush.bf16.msra.mxu0 %v588
    %931 = vmatpush.bf16.msra.mxu0 %v584
    %932 = vmatpush.bf16.msra.mxu0 %v580
    %933 = vmatmul.bf16.gmra.mxu0 %v898
    %v934 = vpop.f32.mrf.mxu0
    %v935 = vadd.f32 0.0, %v934
    %v936 = vpop.f32.mrf.mxu0
    %937 = vdwg.mxu0
    %938 = vmatpush.bf16.msra.mxu0 %v609
    %939 = vmatpush.bf16.msra.mxu0 %v605
    %940 = vmatpush.bf16.msra.mxu0 %v601
    %941 = vmatpush.bf16.msra.mxu0 %v597
    %942 = vmatpush.bf16.msra.mxu0 %v593
    %943 = vmatpush.bf16.msra.mxu0 %v589
    %944 = vmatpush.bf16.msra.mxu0 %v585
    %945 = vmatpush.bf16.msra.mxu0 %v581
    %946 = vmatmul.bf16.gmra.mxu0 %v898
    %v947 = vpop.f32.mrf.mxu0
    %v948 = vadd.f32 0.0, %v947
    %v949 = vpop.f32.mrf.mxu0
    %950 = vdwg.mxu0
    %v951 = vadd.f32 %v894, %v909
    %v952 = vadd.f32 %v895, %v922
    %v953 = vadd.f32 %v896, %v935
    %v954 = vadd.f32 %v897, %v948
    %v955 = vxor.u32 %v951, 2147483648
    %v956 = vmul.f32 %v955, 1.442695
    %v957 = vpow.pop %v956
    %v958 = vadd.f32 %v957, 1.0
    %v959 = vrcp.pop %v958
    %v960 = vmul.f32 %v958, %v959
    %v961 = vsub.f32 1.0, %v960
    %v962 = vmul.f32 %v959, %v961
    %v963 = vadd.f32 %v959, %v962
    %vm964 = vweird.f32 %v958
    %vm965 = vweird.f32 %v959
    %vm966 = vmor %vm964, %vm965
    %v967 = vsel %vm966, %v959, %v963
    %v968 = vand.u32 2147483647, %v958
    %vm969 = vcmp.eq.f32.partialorder %v968, 8.507059e+37
    %v970 = vand.u32 %v958, 2147483648
    %v971 = vor.u32 1.1754944e-38, %v970
    %v972 = vsel %vm969, %v971, %v967
    %v973 = vmul.f32 1.0, %v972
    %v974 = vxor.u32 %v952, 2147483648
    %v975 = vmul.f32 %v974, 1.442695
    %v976 = vpow.pop %v975
    %v977 = vadd.f32 %v976, 1.0
    %v978 = vrcp.pop %v977
    %v979 = vmul.f32 %v977, %v978
    %v980 = vsub.f32 1.0, %v979
    %v981 = vmul.f32 %v978, %v980
    %v982 = vadd.f32 %v978, %v981
    %vm983 = vweird.f32 %v977
    %vm984 = vweird.f32 %v978
    %vm985 = vmor %vm983, %vm984
    %v986 = vsel %vm985, %v978, %v982
    %v987 = vand.u32 2147483647, %v977
    %vm988 = vcmp.eq.f32.partialorder %v987, 8.507059e+37
    %v989 = vand.u32 %v977, 2147483648
    %v990 = vor.u32 1.1754944e-38, %v989
    %v991 = vsel %vm988, %v990, %v986
    %v992 = vmul.f32 1.0, %v991
    %v993 = vtanh.pop %v953
    %v994 = vxor.u32 %v954, 2147483648
    %v995 = vmul.f32 %v994, 1.442695
    %v996 = vpow.pop %v995
    %v997 = vadd.f32 %v996, 1.0
    %v998 = vrcp.pop %v997
    %v999 = vmul.f32 %v997, %v998
    %v1000 = vsub.f32 1.0, %v999
    %v1001 = vmul.f32 %v998, %v1000
    %v1002 = vadd.f32 %v998, %v1001
    %vm1003 = vweird.f32 %v997
    %vm1004 = vweird.f32 %v998
    %vm1005 = vmor %vm1003, %vm1004
    %v1006 = vsel %vm1005, %v998, %v1002
    %v1007 = vand.u32 2147483647, %v997
    %vm1008 = vcmp.eq.f32.partialorder %v1007, 8.507059e+37
    %v1009 = vand.u32 %v997, 2147483648
    %v1010 = vor.u32 1.1754944e-38, %v1009
    %v1011 = vsel %vm1008, %v1010, %v1006
    %v1012 = vmul.f32 1.0, %v1011
    %v1013 = vmul.f32 %v992, %v886
    %v1014 = vmul.f32 %v973, %v993
    %v1015 = vadd.f32 %v1013, %v1014
    %v1016 = vtanh.pop %v1015
    %v1017 = vmul.f32 %v1012, %v1016
    %s1018 = scalar_lea.vmem %s5, 16
    %1019 = vst [vmem:[%s1018] sm:$0xff] %v1017
    %s1020 = smul.u32 3, 4
    %s1021 = smul.addr %s1020, 8
    %s1022 = scalar_lea.vmem [#allocation4], %s1021
    %v1023 = vld [vmem:[%s1022] sm:$0xff]
    %v1024 = vld [vmem:[%s1022 + $0x8] sm:$0xff]
    %v1025 = vld [vmem:[%s1022 + $0x10] sm:$0xff]
    %v1026 = vld [vmem:[%s1022 + $0x18] sm:$0xff]
    %v1027 = vpack.c.bf16 %v1017, %v1017
    %1028 = vmatpush.bf16.msra.mxu0 %v606
    %1029 = vmatpush.bf16.msra.mxu0 %v602
    %1030 = vmatpush.bf16.msra.mxu0 %v598
    %1031 = vmatpush.bf16.msra.mxu0 %v594
    %1032 = vmatpush.bf16.msra.mxu0 %v590
    %1033 = vmatpush.bf16.msra.mxu0 %v586
    %1034 = vmatpush.bf16.msra.mxu0 %v582
    %1035 = vmatpush.bf16.msra.mxu0 %v578
    %1036 = vmatmul.bf16.gmra.mxu0 %v1027
    %v1037 = vpop.f32.mrf.mxu0
    %v1038 = vadd.f32 0.0, %v1037
    %v1039 = vpop.f32.mrf.mxu0
    %1040 = vdwg.mxu0
    %1041 = vmatpush.bf16.msra.mxu0 %v607
    %1042 = vmatpush.bf16.msra.mxu0 %v603
    %1043 = vmatpush.bf16.msra.mxu0 %v599
    %1044 = vmatpush.bf16.msra.mxu0 %v595
    %1045 = vmatpush.bf16.msra.mxu0 %v591
    %1046 = vmatpush.bf16.msra.mxu0 %v587
    %1047 = vmatpush.bf16.msra.mxu0 %v583
    %1048 = vmatpush.bf16.msra.mxu0 %v579
    %1049 = vmatmul.bf16.gmra.mxu0 %v1027
    %v1050 = vpop.f32.mrf.mxu0
    %v1051 = vadd.f32 0.0, %v1050
    %v1052 = vpop.f32.mrf.mxu0
    %1053 = vdwg.mxu0
    %1054 = vmatpush.bf16.msra.mxu0 %v608
    %1055 = vmatpush.bf16.msra.mxu0 %v604
    %1056 = vmatpush.bf16.msra.mxu0 %v600
    %1057 = vmatpush.bf16.msra.mxu0 %v596
    %1058 = vmatpush.bf16.msra.mxu0 %v592
    %1059 = vmatpush.bf16.msra.mxu0 %v588
    %1060 = vmatpush.bf16.msra.mxu0 %v584
    %1061 = vmatpush.bf16.msra.mxu0 %v580
    %1062 = vmatmul.bf16.gmra.mxu0 %v1027
    %v1063 = vpop.f32.mrf.mxu0
    %v1064 = vadd.f32 0.0, %v1063
    %v1065 = vpop.f32.mrf.mxu0
    %1066 = vdwg.mxu0
    %1067 = vmatpush.bf16.msra.mxu0 %v609
    %1068 = vmatpush.bf16.msra.mxu0 %v605
    %1069 = vmatpush.bf16.msra.mxu0 %v601
    %1070 = vmatpush.bf16.msra.mxu0 %v597
    %1071 = vmatpush.bf16.msra.mxu0 %v593
    %1072 = vmatpush.bf16.msra.mxu0 %v589
    %1073 = vmatpush.bf16.msra.mxu0 %v585
    %1074 = vmatpush.bf16.msra.mxu0 %v581
    %1075 = vmatmul.bf16.gmra.mxu0 %v1027
    %v1076 = vpop.f32.mrf.mxu0
    %v1077 = vadd.f32 0.0, %v1076
    %v1078 = vpop.f32.mrf.mxu0
    %1079 = vdwg.mxu0
    %v1080 = vadd.f32 %v1023, %v1038
    %v1081 = vadd.f32 %v1024, %v1051
    %v1082 = vadd.f32 %v1025, %v1064
    %v1083 = vadd.f32 %v1026, %v1077
    %v1084 = vxor.u32 %v1080, 2147483648
    %v1085 = vmul.f32 %v1084, 1.442695
    %v1086 = vpow.pop %v1085
    %v1087 = vadd.f32 %v1086, 1.0
    %v1088 = vrcp.pop %v1087
    %v1089 = vmul.f32 %v1087, %v1088
    %v1090 = vsub.f32 1.0, %v1089
    %v1091 = vmul.f32 %v1088, %v1090
    %v1092 = vadd.f32 %v1088, %v1091
    %vm1093 = vweird.f32 %v1087
    %vm1094 = vweird.f32 %v1088
    %vm1095 = vmor %vm1093, %vm1094
    %v1096 = vsel %vm1095, %v1088, %v1092
    %v1097 = vand.u32 2147483647, %v1087
    %vm1098 = vcmp.eq.f32.partialorder %v1097, 8.507059e+37
    %v1099 = vand.u32 %v1087, 2147483648
    %v1100 = vor.u32 1.1754944e-38, %v1099
    %v1101 = vsel %vm1098, %v1100, %v1096
    %v1102 = vmul.f32 1.0, %v1101
    %v1103 = vxor.u32 %v1081, 2147483648
    %v1104 = vmul.f32 %v1103, 1.442695
    %v1105 = vpow.pop %v1104
    %v1106 = vadd.f32 %v1105, 1.0
    %v1107 = vrcp.pop %v1106
    %v1108 = vmul.f32 %v1106, %v1107
    %v1109 = vsub.f32 1.0, %v1108
    %v1110 = vmul.f32 %v1107, %v1109
    %v1111 = vadd.f32 %v1107, %v1110
    %vm1112 = vweird.f32 %v1106
    %vm1113 = vweird.f32 %v1107
    %vm1114 = vmor %vm1112, %vm1113
    %v1115 = vsel %vm1114, %v1107, %v1111
    %v1116 = vand.u32 2147483647, %v1106
    %vm1117 = vcmp.eq.f32.partialorder %v1116, 8.507059e+37
    %v1118 = vand.u32 %v1106, 2147483648
    %v1119 = vor.u32 1.1754944e-38, %v1118
    %v1120 = vsel %vm1117, %v1119, %v1115
    %v1121 = vmul.f32 1.0, %v1120
    %v1122 = vtanh.pop %v1082
    %v1123 = vxor.u32 %v1083, 2147483648
    %v1124 = vmul.f32 %v1123, 1.442695
    %v1125 = vpow.pop %v1124
    %v1126 = vadd.f32 %v1125, 1.0
    %v1127 = vrcp.pop %v1126
    %v1128 = vmul.f32 %v1126, %v1127
    %v1129 = vsub.f32 1.0, %v1128
    %v1130 = vmul.f32 %v1127, %v1129
    %v1131 = vadd.f32 %v1127, %v1130
    %vm1132 = vweird.f32 %v1126
    %vm1133 = vweird.f32 %v1127
    %vm1134 = vmor %vm1132, %vm1133
    %v1135 = vsel %vm1134, %v1127, %v1131
    %v1136 = vand.u32 2147483647, %v1126
    %vm1137 = vcmp.eq.f32.partialorder %v1136, 8.507059e+37
    %v1138 = vand.u32 %v1126, 2147483648
    %v1139 = vor.u32 1.1754944e-38, %v1138
    %v1140 = vsel %vm1137, %v1139, %v1135
    %v1141 = vmul.f32 1.0, %v1140
    %v1142 = vmul.f32 %v1121, %v1015
    %v1143 = vmul.f32 %v1102, %v1122
    %v1144 = vadd.f32 %v1142, %v1143
    %v1145 = vtanh.pop %v1144
    %v1146 = vmul.f32 %v1141, %v1145
    %s1147 = scalar_lea.vmem %s5, 24
    %1148 = vst [vmem:[%s1147] sm:$0xff] %v1146
    %s1149 = smul.u32 4, 4
    %s1150 = smul.addr %s1149, 8
    %s1151 = scalar_lea.vmem [#allocation4], %s1150
    %v1152 = vld [vmem:[%s1151] sm:$0xff]
    %v1153 = vld [vmem:[%s1151 + $0x8] sm:$0xff]
    %v1154 = vld [vmem:[%s1151 + $0x10] sm:$0xff]
    %v1155 = vld [vmem:[%s1151 + $0x18] sm:$0xff]
    %v1156 = vpack.c.bf16 %v1146, %v1146
    %1157 = vmatpush.bf16.msra.mxu0 %v606
    %1158 = vmatpush.bf16.msra.mxu0 %v602
    %1159 = vmatpush.bf16.msra.mxu0 %v598
    %1160 = vmatpush.bf16.msra.mxu0 %v594
    %1161 = vmatpush.bf16.msra.mxu0 %v590
    %1162 = vmatpush.bf16.msra.mxu0 %v586
    %1163 = vmatpush.bf16.msra.mxu0 %v582
    %1164 = vmatpush.bf16.msra.mxu0 %v578
    %1165 = vmatmul.bf16.gmra.mxu0 %v1156
    %v1166 = vpop.f32.mrf.mxu0
    %v1167 = vadd.f32 0.0, %v1166
    %v1168 = vpop.f32.mrf.mxu0
    %1169 = vdwg.mxu0
    %1170 = vmatpush.bf16.msra.mxu0 %v607
    %1171 = vmatpush.bf16.msra.mxu0 %v603
    %1172 = vmatpush.bf16.msra.mxu0 %v599
    %1173 = vmatpush.bf16.msra.mxu0 %v595
    %1174 = vmatpush.bf16.msra.mxu0 %v591
    %1175 = vmatpush.bf16.msra.mxu0 %v587
    %1176 = vmatpush.bf16.msra.mxu0 %v583
    %1177 = vmatpush.bf16.msra.mxu0 %v579
    %1178 = vmatmul.bf16.gmra.mxu0 %v1156
    %v1179 = vpop.f32.mrf.mxu0
    %v1180 = vadd.f32 0.0, %v1179
    %v1181 = vpop.f32.mrf.mxu0
    %1182 = vdwg.mxu0
    %1183 = vmatpush.bf16.msra.mxu0 %v608
    %1184 = vmatpush.bf16.msra.mxu0 %v604
    %1185 = vmatpush.bf16.msra.mxu0 %v600
    %1186 = vmatpush.bf16.msra.mxu0 %v596
    %1187 = vmatpush.bf16.msra.mxu0 %v592
    %1188 = vmatpush.bf16.msra.mxu0 %v588
    %1189 = vmatpush.bf16.msra.mxu0 %v584
    %1190 = vmatpush.bf16.msra.mxu0 %v580
    %1191 = vmatmul.bf16.gmra.mxu0 %v1156
    %v1192 = vpop.f32.mrf.mxu0
    %v1193 = vadd.f32 0.0, %v1192
    %v1194 = vpop.f32.mrf.mxu0
    %1195 = vdwg.mxu0
    %1196 = vmatpush.bf16.msra.mxu0 %v609
    %1197 = vmatpush.bf16.msra.mxu0 %v605
    %1198 = vmatpush.bf16.msra.mxu0 %v601
    %1199 = vmatpush.bf16.msra.mxu0 %v597
    %1200 = vmatpush.bf16.msra.mxu0 %v593
    %1201 = vmatpush.bf16.msra.mxu0 %v589
    %1202 = vmatpush.bf16.msra.mxu0 %v585
    %1203 = vmatpush.bf16.msra.mxu0 %v581
    %1204 = vmatmul.bf16.gmra.mxu0 %v1156
    %v1205 = vpop.f32.mrf.mxu0
    %v1206 = vadd.f32 0.0, %v1205
    %v1207 = vpop.f32.mrf.mxu0
    %1208 = vdwg.mxu0
    %v1209 = vadd.f32 %v1152, %v1167
    %v1210 = vadd.f32 %v1153, %v1180
    %v1211 = vadd.f32 %v1154, %v1193
    %v1212 = vadd.f32 %v1155, %v1206
    %v1213 = vxor.u32 %v1209, 2147483648
    %v1214 = vmul.f32 %v1213, 1.442695
    %v1215 = vpow.pop %v1214
    %v1216 = vadd.f32 %v1215, 1.0
    %v1217 = vrcp.pop %v1216
    %v1218 = vmul.f32 %v1216, %v1217
    %v1219 = vsub.f32 1.0, %v1218
    %v1220 = vmul.f32 %v1217, %v1219
    %v1221 = vadd.f32 %v1217, %v1220
    %vm1222 = vweird.f32 %v1216
    %vm1223 = vweird.f32 %v1217
    %vm1224 = vmor %vm1222, %vm1223
    %v1225 = vsel %vm1224, %v1217, %v1221
    %v1226 = vand.u32 2147483647, %v1216
    %vm1227 = vcmp.eq.f32.partialorder %v1226, 8.507059e+37
    %v1228 = vand.u32 %v1216, 2147483648
    %v1229 = vor.u32 1.1754944e-38, %v1228
    %v1230 = vsel %vm1227, %v1229, %v1225
    %v1231 = vmul.f32 1.0, %v1230
    %v1232 = vxor.u32 %v1210, 2147483648
    %v1233 = vmul.f32 %v1232, 1.442695
    %v1234 = vpow.pop %v1233
    %v1235 = vadd.f32 %v1234, 1.0
    %v1236 = vrcp.pop %v1235
    %v1237 = vmul.f32 %v1235, %v1236
    %v1238 = vsub.f32 1.0, %v1237
    %v1239 = vmul.f32 %v1236, %v1238
    %v1240 = vadd.f32 %v1236, %v1239
    %vm1241 = vweird.f32 %v1235
    %vm1242 = vweird.f32 %v1236
    %vm1243 = vmor %vm1241, %vm1242
    %v1244 = vsel %vm1243, %v1236, %v1240
    %v1245 = vand.u32 2147483647, %v1235
    %vm1246 = vcmp.eq.f32.partialorder %v1245, 8.507059e+37
    %v1247 = vand.u32 %v1235, 2147483648
    %v1248 = vor.u32 1.1754944e-38, %v1247
    %v1249 = vsel %vm1246, %v1248, %v1244
    %v1250 = vmul.f32 1.0, %v1249
    %v1251 = vtanh.pop %v1211
    %v1252 = vxor.u32 %v1212, 2147483648
    %v1253 = vmul.f32 %v1252, 1.442695
    %v1254 = vpow.pop %v1253
    %v1255 = vadd.f32 %v1254, 1.0
    %v1256 = vrcp.pop %v1255
    %v1257 = vmul.f32 %v1255, %v1256
    %v1258 = vsub.f32 1.0, %v1257
    %v1259 = vmul.f32 %v1256, %v1258
    %v1260 = vadd.f32 %v1256, %v1259
    %vm1261 = vweird.f32 %v1255
    %vm1262 = vweird.f32 %v1256
    %vm1263 = vmor %vm1261, %vm1262
    %v1264 = vsel %vm1263, %v1256, %v1260
    %v1265 = vand.u32 2147483647, %v1255
    %vm1266 = vcmp.eq.f32.partialorder %v1265, 8.507059e+37
    %v1267 = vand.u32 %v1255, 2147483648
    %v1268 = vor.u32 1.1754944e-38, %v1267
    %v1269 = vsel %vm1266, %v1268, %v1264
    %v1270 = vmul.f32 1.0, %v1269
    %v1271 = vmul.f32 %v1250, %v1144
    %v1272 = vmul.f32 %v1231, %v1251
    %v1273 = vadd.f32 %v1271, %v1272
    %v1274 = vtanh.pop %v1273
    %v1275 = vmul.f32 %v1270, %v1274
    %s1276 = scalar_lea.vmem %s5, 32
    %1277 = vst [vmem:[%s1276] sm:$0xff] %v1275
    %s1278 = smul.u32 5, 4
    %s1279 = smul.addr %s1278, 8
    %s1280 = scalar_lea.vmem [#allocation4], %s1279
    %v1281 = vld [vmem:[%s1280] sm:$0xff]
    %v1282 = vld [vmem:[%s1280 + $0x8] sm:$0xff]
    %v1283 = vld [vmem:[%s1280 + $0x10] sm:$0xff]
    %v1284 = vld [vmem:[%s1280 + $0x18] sm:$0xff]
    %v1285 = vpack.c.bf16 %v1275, %v1275
    %1286 = vmatpush.bf16.msra.mxu0 %v606
    %1287 = vmatpush.bf16.msra.mxu0 %v602
    %1288 = vmatpush.bf16.msra.mxu0 %v598
    %1289 = vmatpush.bf16.msra.mxu0 %v594
    %1290 = vmatpush.bf16.msra.mxu0 %v590
    %1291 = vmatpush.bf16.msra.mxu0 %v586
    %1292 = vmatpush.bf16.msra.mxu0 %v582
    %1293 = vmatpush.bf16.msra.mxu0 %v578
    %1294 = vmatmul.bf16.gmra.mxu0 %v1285
    %v1295 = vpop.f32.mrf.mxu0
    %v1296 = vadd.f32 0.0, %v1295
    %v1297 = vpop.f32.mrf.mxu0
    %1298 = vdwg.mxu0
    %1299 = vmatpush.bf16.msra.mxu0 %v607
    %1300 = vmatpush.bf16.msra.mxu0 %v603
    %1301 = vmatpush.bf16.msra.mxu0 %v599
    %1302 = vmatpush.bf16.msra.mxu0 %v595
    %1303 = vmatpush.bf16.msra.mxu0 %v591
    %1304 = vmatpush.bf16.msra.mxu0 %v587
    %1305 = vmatpush.bf16.msra.mxu0 %v583
    %1306 = vmatpush.bf16.msra.mxu0 %v579
    %1307 = vmatmul.bf16.gmra.mxu0 %v1285
    %v1308 = vpop.f32.mrf.mxu0
    %v1309 = vadd.f32 0.0, %v1308
    %v1310 = vpop.f32.mrf.mxu0
    %1311 = vdwg.mxu0
    %1312 = vmatpush.bf16.msra.mxu0 %v608
    %1313 = vmatpush.bf16.msra.mxu0 %v604
    %1314 = vmatpush.bf16.msra.mxu0 %v600
    %1315 = vmatpush.bf16.msra.mxu0 %v596
    %1316 = vmatpush.bf16.msra.mxu0 %v592
    %1317 = vmatpush.bf16.msra.mxu0 %v588
    %1318 = vmatpush.bf16.msra.mxu0 %v584
    %1319 = vmatpush.bf16.msra.mxu0 %v580
    %1320 = vmatmul.bf16.gmra.mxu0 %v1285
    %v1321 = vpop.f32.mrf.mxu0
    %v1322 = vadd.f32 0.0, %v1321
    %v1323 = vpop.f32.mrf.mxu0
    %1324 = vdwg.mxu0
    %1325 = vmatpush.bf16.msra.mxu0 %v609
    %1326 = vmatpush.bf16.msra.mxu0 %v605
    %1327 = vmatpush.bf16.msra.mxu0 %v601
    %1328 = vmatpush.bf16.msra.mxu0 %v597
    %1329 = vmatpush.bf16.msra.mxu0 %v593
    %1330 = vmatpush.bf16.msra.mxu0 %v589
    %1331 = vmatpush.bf16.msra.mxu0 %v585
    %1332 = vmatpush.bf16.msra.mxu0 %v581
    %1333 = vmatmul.bf16.gmra.mxu0 %v1285
    %v1334 = vpop.f32.mrf.mxu0
    %v1335 = vadd.f32 0.0, %v1334
    %v1336 = vpop.f32.mrf.mxu0
    %1337 = vdwg.mxu0
    %v1338 = vadd.f32 %v1281, %v1296
    %v1339 = vadd.f32 %v1282, %v1309
    %v1340 = vadd.f32 %v1283, %v1322
    %v1341 = vadd.f32 %v1284, %v1335
    %v1342 = vxor.u32 %v1338, 2147483648
    %v1343 = vmul.f32 %v1342, 1.442695
    %v1344 = vpow.pop %v1343
    %v1345 = vadd.f32 %v1344, 1.0
    %v1346 = vrcp.pop %v1345
    %v1347 = vmul.f32 %v1345, %v1346
    %v1348 = vsub.f32 1.0, %v1347
    %v1349 = vmul.f32 %v1346, %v1348
    %v1350 = vadd.f32 %v1346, %v1349
    %vm1351 = vweird.f32 %v1345
    %vm1352 = vweird.f32 %v1346
    %vm1353 = vmor %vm1351, %vm1352
    %v1354 = vsel %vm1353, %v1346, %v1350
    %v1355 = vand.u32 2147483647, %v1345
    %vm1356 = vcmp.eq.f32.partialorder %v1355, 8.507059e+37
    %v1357 = vand.u32 %v1345, 2147483648
    %v1358 = vor.u32 1.1754944e-38, %v1357
    %v1359 = vsel %vm1356, %v1358, %v1354
    %v1360 = vmul.f32 1.0, %v1359
    %v1361 = vxor.u32 %v1339, 2147483648
    %v1362 = vmul.f32 %v1361, 1.442695
    %v1363 = vpow.pop %v1362
    %v1364 = vadd.f32 %v1363, 1.0
    %v1365 = vrcp.pop %v1364
    %v1366 = vmul.f32 %v1364, %v1365
    %v1367 = vsub.f32 1.0, %v1366
    %v1368 = vmul.f32 %v1365, %v1367
    %v1369 = vadd.f32 %v1365, %v1368
    %vm1370 = vweird.f32 %v1364
    %vm1371 = vweird.f32 %v1365
    %vm1372 = vmor %vm1370, %vm1371
    %v1373 = vsel %vm1372, %v1365, %v1369
    %v1374 = vand.u32 2147483647, %v1364
    %vm1375 = vcmp.eq.f32.partialorder %v1374, 8.507059e+37
    %v1376 = vand.u32 %v1364, 2147483648
    %v1377 = vor.u32 1.1754944e-38, %v1376
    %v1378 = vsel %vm1375, %v1377, %v1373
    %v1379 = vmul.f32 1.0, %v1378
    %v1380 = vtanh.pop %v1340
    %v1381 = vxor.u32 %v1341, 2147483648
    %v1382 = vmul.f32 %v1381, 1.442695
    %v1383 = vpow.pop %v1382
    %v1384 = vadd.f32 %v1383, 1.0
    %v1385 = vrcp.pop %v1384
    %v1386 = vmul.f32 %v1384, %v1385
    %v1387 = vsub.f32 1.0, %v1386
    %v1388 = vmul.f32 %v1385, %v1387
    %v1389 = vadd.f32 %v1385, %v1388
    %vm1390 = vweird.f32 %v1384
    %vm1391 = vweird.f32 %v1385
    %vm1392 = vmor %vm1390, %vm1391
    %v1393 = vsel %vm1392, %v1385, %v1389
    %v1394 = vand.u32 2147483647, %v1384
    %vm1395 = vcmp.eq.f32.partialorder %v1394, 8.507059e+37
    %v1396 = vand.u32 %v1384, 2147483648
    %v1397 = vor.u32 1.1754944e-38, %v1396
    %v1398 = vsel %vm1395, %v1397, %v1393
    %v1399 = vmul.f32 1.0, %v1398
    %v1400 = vmul.f32 %v1379, %v1273
    %v1401 = vmul.f32 %v1360, %v1380
    %v1402 = vadd.f32 %v1400, %v1401
    %v1403 = vtanh.pop %v1402
    %v1404 = vmul.f32 %v1399, %v1403
    %s1405 = scalar_lea.vmem %s5, 40
    %1406 = vst [vmem:[%s1405] sm:$0xff] %v1404
    %s1407 = smul.u32 6, 4
    %s1408 = smul.addr %s1407, 8
    %s1409 = scalar_lea.vmem [#allocation4], %s1408
    %v1410 = vld [vmem:[%s1409] sm:$0xff]
    %v1411 = vld [vmem:[%s1409 + $0x8] sm:$0xff]
    %v1412 = vld [vmem:[%s1409 + $0x10] sm:$0xff]
    %v1413 = vld [vmem:[%s1409 + $0x18] sm:$0xff]
    %v1414 = vpack.c.bf16 %v1404, %v1404
    %1415 = vmatpush.bf16.msra.mxu0 %v606
    %1416 = vmatpush.bf16.msra.mxu0 %v602
    %1417 = vmatpush.bf16.msra.mxu0 %v598
    %1418 = vmatpush.bf16.msra.mxu0 %v594
    %1419 = vmatpush.bf16.msra.mxu0 %v590
    %1420 = vmatpush.bf16.msra.mxu0 %v586
    %1421 = vmatpush.bf16.msra.mxu0 %v582
    %1422 = vmatpush.bf16.msra.mxu0 %v578
    %1423 = vmatmul.bf16.gmra.mxu0 %v1414
    %v1424 = vpop.f32.mrf.mxu0
    %v1425 = vadd.f32 0.0, %v1424
    %v1426 = vpop.f32.mrf.mxu0
    %1427 = vdwg.mxu0
    %1428 = vmatpush.bf16.msra.mxu0 %v607
    %1429 = vmatpush.bf16.msra.mxu0 %v603
    %1430 = vmatpush.bf16.msra.mxu0 %v599
    %1431 = vmatpush.bf16.msra.mxu0 %v595
    %1432 = vmatpush.bf16.msra.mxu0 %v591
    %1433 = vmatpush.bf16.msra.mxu0 %v587
    %1434 = vmatpush.bf16.msra.mxu0 %v583
    %1435 = vmatpush.bf16.msra.mxu0 %v579
    %1436 = vmatmul.bf16.gmra.mxu0 %v1414
    %v1437 = vpop.f32.mrf.mxu0
    %v1438 = vadd.f32 0.0, %v1437
    %v1439 = vpop.f32.mrf.mxu0
    %1440 = vdwg.mxu0
    %1441 = vmatpush.bf16.msra.mxu0 %v608
    %1442 = vmatpush.bf16.msra.mxu0 %v604
    %1443 = vmatpush.bf16.msra.mxu0 %v600
    %1444 = vmatpush.bf16.msra.mxu0 %v596
    %1445 = vmatpush.bf16.msra.mxu0 %v592
    %1446 = vmatpush.bf16.msra.mxu0 %v588
    %1447 = vmatpush.bf16.msra.mxu0 %v584
    %1448 = vmatpush.bf16.msra.mxu0 %v580
    %1449 = vmatmul.bf16.gmra.mxu0 %v1414
    %v1450 = vpop.f32.mrf.mxu0
    %v1451 = vadd.f32 0.0, %v1450
    %v1452 = vpop.f32.mrf.mxu0
    %1453 = vdwg.mxu0
    %1454 = vmatpush.bf16.msra.mxu0 %v609
    %1455 = vmatpush.bf16.msra.mxu0 %v605
    %1456 = vmatpush.bf16.msra.mxu0 %v601
    %1457 = vmatpush.bf16.msra.mxu0 %v597
    %1458 = vmatpush.bf16.msra.mxu0 %v593
    %1459 = vmatpush.bf16.msra.mxu0 %v589
    %1460 = vmatpush.bf16.msra.mxu0 %v585
    %1461 = vmatpush.bf16.msra.mxu0 %v581
    %1462 = vmatmul.bf16.gmra.mxu0 %v1414
    %v1463 = vpop.f32.mrf.mxu0
    %v1464 = vadd.f32 0.0, %v1463
    %v1465 = vpop.f32.mrf.mxu0
    %1466 = vdwg.mxu0
    %v1467 = vadd.f32 %v1410, %v1425
    %v1468 = vadd.f32 %v1411, %v1438
    %v1469 = vadd.f32 %v1412, %v1451
    %v1470 = vadd.f32 %v1413, %v1464
    %v1471 = vxor.u32 %v1467, 2147483648
    %v1472 = vmul.f32 %v1471, 1.442695
    %v1473 = vpow.pop %v1472
    %v1474 = vadd.f32 %v1473, 1.0
    %v1475 = vrcp.pop %v1474
    %v1476 = vmul.f32 %v1474, %v1475
    %v1477 = vsub.f32 1.0, %v1476
    %v1478 = vmul.f32 %v1475, %v1477
    %v1479 = vadd.f32 %v1475, %v1478
    %vm1480 = vweird.f32 %v1474
    %vm1481 = vweird.f32 %v1475
    %vm1482 = vmor %vm1480, %vm1481
    %v1483 = vsel %vm1482, %v1475, %v1479
    %v1484 = vand.u32 2147483647, %v1474
    %vm1485 = vcmp.eq.f32.partialorder %v1484, 8.507059e+37
    %v1486 = vand.u32 %v1474, 2147483648
    %v1487 = vor.u32 1.1754944e-38, %v1486
    %v1488 = vsel %vm1485, %v1487, %v1483
    %v1489 = vmul.f32 1.0, %v1488
    %v1490 = vxor.u32 %v1468, 2147483648
    %v1491 = vmul.f32 %v1490, 1.442695
    %v1492 = vpow.pop %v1491
    %v1493 = vadd.f32 %v1492, 1.0
    %v1494 = vrcp.pop %v1493
    %v1495 = vmul.f32 %v1493, %v1494
    %v1496 = vsub.f32 1.0, %v1495
    %v1497 = vmul.f32 %v1494, %v1496
    %v1498 = vadd.f32 %v1494, %v1497
    %vm1499 = vweird.f32 %v1493
    %vm1500 = vweird.f32 %v1494
    %vm1501 = vmor %vm1499, %vm1500
    %v1502 = vsel %vm1501, %v1494, %v1498
    %v1503 = vand.u32 2147483647, %v1493
    %vm1504 = vcmp.eq.f32.partialorder %v1503, 8.507059e+37
    %v1505 = vand.u32 %v1493, 2147483648
    %v1506 = vor.u32 1.1754944e-38, %v1505
    %v1507 = vsel %vm1504, %v1506, %v1502
    %v1508 = vmul.f32 1.0, %v1507
    %v1509 = vtanh.pop %v1469
    %v1510 = vxor.u32 %v1470, 2147483648
    %v1511 = vmul.f32 %v1510, 1.442695
    %v1512 = vpow.pop %v1511
    %v1513 = vadd.f32 %v1512, 1.0
    %v1514 = vrcp.pop %v1513
    %v1515 = vmul.f32 %v1513, %v1514
    %v1516 = vsub.f32 1.0, %v1515
    %v1517 = vmul.f32 %v1514, %v1516
    %v1518 = vadd.f32 %v1514, %v1517
    %vm1519 = vweird.f32 %v1513
    %vm1520 = vweird.f32 %v1514
    %vm1521 = vmor %vm1519, %vm1520
    %v1522 = vsel %vm1521, %v1514, %v1518
    %v1523 = vand.u32 2147483647, %v1513
    %vm1524 = vcmp.eq.f32.partialorder %v1523, 8.507059e+37
    %v1525 = vand.u32 %v1513, 2147483648
    %v1526 = vor.u32 1.1754944e-38, %v1525
    %v1527 = vsel %vm1524, %v1526, %v1522
    %v1528 = vmul.f32 1.0, %v1527
    %v1529 = vmul.f32 %v1508, %v1402
    %v1530 = vmul.f32 %v1489, %v1509
    %v1531 = vadd.f32 %v1529, %v1530
    %v1532 = vtanh.pop %v1531
    %v1533 = vmul.f32 %v1528, %v1532
    %s1534 = scalar_lea.vmem %s5, 48
    %1535 = vst [vmem:[%s1534] sm:$0xff] %v1533
    %s1536 = smul.u32 7, 4
    %s1537 = smul.addr %s1536, 8
    %s1538 = scalar_lea.vmem [#allocation4], %s1537
    %v1539 = vld [vmem:[%s1538] sm:$0xff]
    %v1540 = vld [vmem:[%s1538 + $0x8] sm:$0xff]
    %v1541 = vld [vmem:[%s1538 + $0x10] sm:$0xff]
    %v1542 = vld [vmem:[%s1538 + $0x18] sm:$0xff]
    %v1543 = vpack.c.bf16 %v1533, %v1533
    %1544 = vmatpush.bf16.msra.mxu0 %v606
    %1545 = vmatpush.bf16.msra.mxu0 %v602
    %1546 = vmatpush.bf16.msra.mxu0 %v598
    %1547 = vmatpush.bf16.msra.mxu0 %v594
    %1548 = vmatpush.bf16.msra.mxu0 %v590
    %1549 = vmatpush.bf16.msra.mxu0 %v586
    %1550 = vmatpush.bf16.msra.mxu0 %v582
    %1551 = vmatpush.bf16.msra.mxu0 %v578
    %1552 = vmatmul.bf16.gmra.mxu0 %v1543
    %v1553 = vpop.f32.mrf.mxu0
    %v1554 = vadd.f32 0.0, %v1553
    %v1555 = vpop.f32.mrf.mxu0
    %1556 = vdwg.mxu0
    %1557 = vmatpush.bf16.msra.mxu0 %v607
    %1558 = vmatpush.bf16.msra.mxu0 %v603
    %1559 = vmatpush.bf16.msra.mxu0 %v599
    %1560 = vmatpush.bf16.msra.mxu0 %v595
    %1561 = vmatpush.bf16.msra.mxu0 %v591
    %1562 = vmatpush.bf16.msra.mxu0 %v587
    %1563 = vmatpush.bf16.msra.mxu0 %v583
    %1564 = vmatpush.bf16.msra.mxu0 %v579
    %1565 = vmatmul.bf16.gmra.mxu0 %v1543
    %v1566 = vpop.f32.mrf.mxu0
    %v1567 = vadd.f32 0.0, %v1566
    %v1568 = vpop.f32.mrf.mxu0
    %1569 = vdwg.mxu0
    %1570 = vmatpush.bf16.msra.mxu0 %v608
    %1571 = vmatpush.bf16.msra.mxu0 %v604
    %1572 = vmatpush.bf16.msra.mxu0 %v600
    %1573 = vmatpush.bf16.msra.mxu0 %v596
    %1574 = vmatpush.bf16.msra.mxu0 %v592
    %1575 = vmatpush.bf16.msra.mxu0 %v588
    %1576 = vmatpush.bf16.msra.mxu0 %v584
    %1577 = vmatpush.bf16.msra.mxu0 %v580
    %1578 = vmatmul.bf16.gmra.mxu0 %v1543
    %v1579 = vpop.f32.mrf.mxu0
    %v1580 = vadd.f32 0.0, %v1579
    %v1581 = vpop.f32.mrf.mxu0
    %1582 = vdwg.mxu0
    %1583 = vmatpush.bf16.msra.mxu0 %v609
    %1584 = vmatpush.bf16.msra.mxu0 %v605
    %1585 = vmatpush.bf16.msra.mxu0 %v601
    %1586 = vmatpush.bf16.msra.mxu0 %v597
    %1587 = vmatpush.bf16.msra.mxu0 %v593
    %1588 = vmatpush.bf16.msra.mxu0 %v589
    %1589 = vmatpush.bf16.msra.mxu0 %v585
    %1590 = vmatpush.bf16.msra.mxu0 %v581
    %1591 = vmatmul.bf16.gmra.mxu0 %v1543
    %v1592 = vpop.f32.mrf.mxu0
    %v1593 = vadd.f32 0.0, %v1592
    %v1594 = vpop.f32.mrf.mxu0
    %1595 = vdwg.mxu0
    %v1596 = vadd.f32 %v1539, %v1554
    %v1597 = vadd.f32 %v1540, %v1567
    %v1598 = vadd.f32 %v1541, %v1580
    %v1599 = vadd.f32 %v1542, %v1593
    %v1600 = vxor.u32 %v1596, 2147483648
    %v1601 = vmul.f32 %v1600, 1.442695
    %v1602 = vpow.pop %v1601
    %v1603 = vadd.f32 %v1602, 1.0
    %v1604 = vrcp.pop %v1603
    %v1605 = vmul.f32 %v1603, %v1604
    %v1606 = vsub.f32 1.0, %v1605
    %v1607 = vmul.f32 %v1604, %v1606
    %v1608 = vadd.f32 %v1604, %v1607
    %vm1609 = vweird.f32 %v1603
    %vm1610 = vweird.f32 %v1604
    %vm1611 = vmor %vm1609, %vm1610
    %v1612 = vsel %vm1611, %v1604, %v1608
    %v1613 = vand.u32 2147483647, %v1603
    %vm1614 = vcmp.eq.f32.partialorder %v1613, 8.507059e+37
    %v1615 = vand.u32 %v1603, 2147483648
    %v1616 = vor.u32 1.1754944e-38, %v1615
    %v1617 = vsel %vm1614, %v1616, %v1612
    %v1618 = vmul.f32 1.0, %v1617
    %v1619 = vxor.u32 %v1597, 2147483648
    %v1620 = vmul.f32 %v1619, 1.442695
    %v1621 = vpow.pop %v1620
    %v1622 = vadd.f32 %v1621, 1.0
    %v1623 = vrcp.pop %v1622
    %v1624 = vmul.f32 %v1622, %v1623
    %v1625 = vsub.f32 1.0, %v1624
    %v1626 = vmul.f32 %v1623, %v1625
    %v1627 = vadd.f32 %v1623, %v1626
    %vm1628 = vweird.f32 %v1622
    %vm1629 = vweird.f32 %v1623
    %vm1630 = vmor %vm1628, %vm1629
    %v1631 = vsel %vm1630, %v1623, %v1627
    %v1632 = vand.u32 2147483647, %v1622
    %vm1633 = vcmp.eq.f32.partialorder %v1632, 8.507059e+37
    %v1634 = vand.u32 %v1622, 2147483648
    %v1635 = vor.u32 1.1754944e-38, %v1634
    %v1636 = vsel %vm1633, %v1635, %v1631
    %v1637 = vmul.f32 1.0, %v1636
    %v1638 = vtanh.pop %v1598
    %v1639 = vxor.u32 %v1599, 2147483648
    %v1640 = vmul.f32 %v1639, 1.442695
    %v1641 = vpow.pop %v1640
    %v1642 = vadd.f32 %v1641, 1.0
    %v1643 = vrcp.pop %v1642
    %v1644 = vmul.f32 %v1642, %v1643
    %v1645 = vsub.f32 1.0, %v1644
    %v1646 = vmul.f32 %v1643, %v1645
    %v1647 = vadd.f32 %v1643, %v1646
    %vm1648 = vweird.f32 %v1642
    %vm1649 = vweird.f32 %v1643
    %vm1650 = vmor %vm1648, %vm1649
    %v1651 = vsel %vm1650, %v1643, %v1647
    %v1652 = vand.u32 2147483647, %v1642
    %vm1653 = vcmp.eq.f32.partialorder %v1652, 8.507059e+37
    %v1654 = vand.u32 %v1642, 2147483648
    %v1655 = vor.u32 1.1754944e-38, %v1654
    %v1656 = vsel %vm1653, %v1655, %v1651
    %v1657 = vmul.f32 1.0, %v1656
    %v1658 = vmul.f32 %v1637, %v1531
    %v1659 = vmul.f32 %v1618, %v1638
    %v1660 = vadd.f32 %v1658, %v1659
    %v1661 = vtanh.pop %v1660
    %v1662 = vmul.f32 %v1657, %v1661
    %s1663 = scalar_lea.vmem %s5, 56
    %1664 = vst [vmem:[%s1663] sm:$0xff] %v1662
    %1665 = vst [vmem:[#allocation2] sm:$0xff] %v1662
    %1666 = vst [vmem:[#allocation3] sm:$0xff] %v1660
    %s1667 = smul.u32 0, 8
    %v1668 = vstv %s1667
    %v1669 = vadd.s32 %v1668, 1
    %v1670 = vadd.s32 %v1668, 2
    %v1671 = vadd.s32 %v1668, 3
    %v1672 = vadd.s32 %v1668, 4
    %v1673 = vadd.s32 %v1668, 5
    %v1674 = vadd.s32 %v1668, 6
    %v1675 = vadd.s32 %v1668, 7
    %v1676 = vld [vmem:[%s0] sm:$0xff]
    %vm1677 = vcmp.lt.s32.totalorder %v1668, %v1676
    %vm1678 = vcmp.lt.s32.totalorder %v1669, %v1676
    %vm1679 = vcmp.lt.s32.totalorder %v1670, %v1676
    %vm1680 = vcmp.lt.s32.totalorder %v1671, %v1676
    %vm1681 = vcmp.lt.s32.totalorder %v1672, %v1676
    %vm1682 = vcmp.lt.s32.totalorder %v1673, %v1676
    %vm1683 = vcmp.lt.s32.totalorder %v1674, %v1676
    %vm1684 = vcmp.lt.s32.totalorder %v1675, %v1676
    %v1685 = vsel %vm1677, 1, 0
    %v1686 = vsel %vm1678, 1, 0
    %v1687 = vsel %vm1679, 1, 0
    %v1688 = vsel %vm1680, 1, 0
    %v1689 = vsel %vm1681, 1, 0
    %v1690 = vsel %vm1682, 1, 0
    %v1691 = vsel %vm1683, 1, 0
    %v1692 = vsel %vm1684, 1, 0
    %v1693 = vcvt.s32.f32 %v1685
    %v1694 = vcvt.s32.f32 %v1686
    %v1695 = vcvt.s32.f32 %v1687
    %v1696 = vcvt.s32.f32 %v1688
    %v1697 = vcvt.s32.f32 %v1689
    %v1698 = vcvt.s32.f32 %v1690
    %v1699 = vcvt.s32.f32 %v1691
    %v1700 = vcvt.s32.f32 %v1692
    %v1701 = vld [vmem:[%s5] sm:$0xff]
    %v1702 = vld [vmem:[%s5 + $0x8] sm:$0xff]
    %v1703 = vld [vmem:[%s5 + $0x10] sm:$0xff]
    %v1704 = vld [vmem:[%s5 + $0x18] sm:$0xff]
    %v1705 = vld [vmem:[%s5 + $0x20] sm:$0xff]
    %v1706 = vld [vmem:[%s5 + $0x28] sm:$0xff]
    %v1707 = vld [vmem:[%s5 + $0x30] sm:$0xff]
    %v1708 = vld [vmem:[%s5 + $0x38] sm:$0xff]
    %v1709 = vmax.f32 %v1701, 0.0
    %v1710 = vmax.f32 %v1702, 0.0
    %v1711 = vmax.f32 %v1703, 0.0
    %v1712 = vmax.f32 %v1704, 0.0
    %v1713 = vmax.f32 %v1705, 0.0
    %v1714 = vmax.f32 %v1706, 0.0
    %v1715 = vmax.f32 %v1707, 0.0
    %v1716 = vmax.f32 %v1708, 0.0
    %1718 = vset.pattern.permute.xlu0 0
    %1719 = vperm.xlu0 %1718, %v1693
    %v1720 = vpop.permute.xlu0 %1719
    %1723 = vset.pattern.permute.xlu0 0
    %1724 = vperm.xlu0 %1723, %v1694
    %v1725 = vpop.permute.xlu0 %1724
    %1728 = vset.pattern.permute.xlu0 0
    %1729 = vperm.xlu0 %1728, %v1695
    %v1730 = vpop.permute.xlu0 %1729
    %1733 = vset.pattern.permute.xlu0 0
    %1734 = vperm.xlu0 %1733, %v1696
    %v1735 = vpop.permute.xlu0 %1734
    %1738 = vset.pattern.permute.xlu0 0
    %1739 = vperm.xlu0 %1738, %v1697
    %v1740 = vpop.permute.xlu0 %1739
    %1743 = vset.pattern.permute.xlu0 0
    %1744 = vperm.xlu0 %1743, %v1698
    %v1745 = vpop.permute.xlu0 %1744
    %1748 = vset.pattern.permute.xlu0 0
    %1749 = vperm.xlu0 %1748, %v1699
    %v1750 = vpop.permute.xlu0 %1749
    %1753 = vset.pattern.permute.xlu0 0
    %1754 = vperm.xlu0 %1753, %v1700
    %v1755 = vpop.permute.xlu0 %1754
    %v1757 = vmul.f32 %v1709, %v1720
    %v1758 = vmul.f32 %v1710, %v1725
    %v1759 = vmul.f32 %v1711, %v1730
    %v1760 = vmul.f32 %v1712, %v1735
    %v1761 = vmul.f32 %v1713, %v1740
    %v1762 = vmul.f32 %v1714, %v1745
    %v1763 = vmul.f32 %v1715, %v1750
    %v1764 = vmul.f32 %v1716, %v1755
    %1765 = vst [vmem:[%s5] sm:$0xff] %v1757
    %1766 = vst [vmem:[%s5 + $0x8] sm:$0xff] %v1758
    %1767 = vst [vmem:[%s5 + $0x10] sm:$0xff] %v1759
    %1768 = vst [vmem:[%s5 + $0x18] sm:$0xff] %v1760
    %1769 = vst [vmem:[%s5 + $0x20] sm:$0xff] %v1761
    %1770 = vst [vmem:[%s5 + $0x28] sm:$0xff] %v1762
    %1771 = vst [vmem:[%s5 + $0x30] sm:$0xff] %v1763
    %1772 = vst [vmem:[%s5 + $0x38] sm:$0xff] %v1764
    // Predicated region
    $region34: #{encoder_rnn_forward.3} parent=1 // pred_check
      _
    $region35: #{encoder_rnn_forward.3} parent=1 // pred_check_branch
      %1774 = sbr.rel (0) target = $region37
    $region36: #{encoder_rnn_forward.3} parent=1 // pred_region
      _
    $region37: #{encoder_rnn_forward.3} parent=1 // pred_fallthru
      _
    // Predicated region
    $region38: #{encoder_rnn_forward.3} parent=1 // pred_check
      _
    $region39: #{encoder_rnn_forward.3} parent=1 // pred_check_branch
      %1776 = sbr.rel (0) target = $region41
    $region40: #{encoder_rnn_forward.3} parent=1 // pred_region
      _
    $region41: #{encoder_rnn_forward.3} parent=1 // pred_fallthru
      _
    %1777 = vsyncpa [#allocation6], 1
    %1778 = vsyncpa [#allocation8], 1

</llo_original>
